<compile_context>
chip_gen: v7x
topology: tpu7x:2x2x1
jax: 0.10.0
libtpu: 0.0.40
codegen_flags: <defaults>
</compile_context>

<pallas_src>
import functools

import jax
import jax.numpy as jnp
from jax.experimental import pallas as pl
from jax.experimental.pallas import tpu as pltpu

LN_EPS = 1e-5
LANE = 128
SUBLANE = 8


def _round_up(n, m):
    return ((n + m - 1) // m) * m


def _layer_norm(y, gamma, beta):
    mu = jnp.mean(y, axis=-1, keepdims=True)
    var = jnp.mean((y - mu) ** 2, axis=-1, keepdims=True)
    return (y - mu) * jax.lax.rsqrt(var + LN_EPS) * gamma + beta


# ---------------------------------------------------------------------------
# Fused kernel: embed LN -> (fwd+bwd) GRU -> fc head, all in VMEM.
# Rows are time-major with the batch padded to Bp (= multiple of 8):
# row index = t * Bp + b.
# ---------------------------------------------------------------------------
def fused_sleep_rnn_kernel(
        x_ref,                                        # (T*Bp, F)
        emb_w_ref, emb_b_ref, emb_g_ref, emb_be_ref,  # Linear(F->D) + LN(D)
        wih_ref, bih_ref,                             # (D, 6H), (1, 6H)  [fwd | bwd]
        whh_ref, bhh_ref,                             # (H, 6H), (1, 6H)  [fwd | bwd]
        fc1_w_ref, fc1_b_ref, fc_g_ref, fc_be_ref,    # Linear(2H->128) + LN(128)
        fc2_w_ref, fc2_b_ref,                         # (128, Npad), (1, Npad) zero-padded
        o_ref,                                        # (T*Bp, Npad)
        gi_ref, rnn_ref,                              # VMEM scratch
        *, T, Bp, H):
    # ---- 1) num_linear: LayerNorm(x @ W + b), all T*Bp rows at once ----------
    emb = _layer_norm(
        jnp.dot(x_ref[...], emb_w_ref[...],
                preferred_element_type=jnp.float32) + emb_b_ref[...],
        emb_g_ref[...], emb_be_ref[...])

    # ---- 2) hoisted input projection for BOTH directions, all timesteps -----
    # columns [0:3H] = fwd gates (r|z|n), [3H:6H] = bwd gates (r|z|n)
    gi_ref[...] = jnp.dot(emb, wih_ref[...],
                          preferred_element_type=jnp.float32) + bih_ref[...]

    # ---- 3) fused fwd+bwd GRU recurrence (serial over T, fully unrolled) ----
    h = jnp.zeros((2 * Bp, H), jnp.float32)          # rows [:Bp] fwd, [Bp:] bwd
    for s in range(T):
        tf = s                                       # fwd consumes timestep s
        tb = T - 1 - s                               # bwd consumes timestep T-1-s
        gi_f = gi_ref[tf * Bp:(tf + 1) * Bp, 0:3 * H]
        gi_b = gi_ref[tb * Bp:(tb + 1) * Bp, 3 * H:6 * H]
        gi_s = jnp.concatenate([gi_f, gi_b], axis=0)                  # (2Bp, 3H)

        gh_all = jnp.dot(h, whh_ref[...],
                         preferred_element_type=jnp.float32) + bhh_ref[...]
        gh_s = jnp.concatenate(
            [gh_all[:Bp, 0:3 * H], gh_all[Bp:, 3 * H:6 * H]], axis=0)  # (2Bp, 3H)

        # PyTorch GRU gate order [r, z, n]; b_hh lives inside the r-gated term.
        r = jax.nn.sigmoid(gi_s[:, 0:H] + gh_s[:, 0:H])
        z = jax.nn.sigmoid(gi_s[:, H:2 * H] + gh_s[:, H:2 * H])
        n = jnp.tanh(gi_s[:, 2 * H:3 * H] + r * gh_s[:, 2 * H:3 * H])
        h = (1.0 - z) * n + z * h

        rnn_ref[tf * Bp:(tf + 1) * Bp, 0:H] = h[:Bp]        # fwd hidden @ t = tf
        rnn_ref[tb * Bp:(tb + 1) * Bp, H:2 * H] = h[Bp:]    # bwd hidden @ t = tb

    # ---- 4) fc_out head: ReLU(LN(rnn @ W1 + b1)) @ W2p + b2p (lane-dense) ----
    y = _layer_norm(
        jnp.dot(rnn_ref[...], fc1_w_ref[...],
                preferred_element_type=jnp.float32) + fc1_b_ref[...],
        fc_g_ref[...], fc_be_ref[...])
    y = jnp.maximum(y, 0.0)
    o_ref[...] = jnp.dot(y, fc2_w_ref[...],
                         preferred_element_type=jnp.float32) + fc2_b_ref[...]


# ---------------------------------------------------------------------------
# Parameter construction (deterministic, synthetic); GRU weights pre-transposed
# for x @ W and packed [fwd | bwd] along the gate axis; fc2 zero-padded to 128.
# ---------------------------------------------------------------------------
def init_params(key, input_num_size=12, num_linear_size=64, model_size=128,
                linear_out=128, out_size=3):
    ks = jax.random.split(key, 12)
    s = 0.05

    def rnd(k, shape):
        return (s * jax.random.normal(k, shape)).astype(jnp.float32)

    H = model_size
    wih_f = rnd(ks[2], (num_linear_size, 3 * H))
    wih_b = rnd(ks[5], (num_linear_size, 3 * H))
    whh_f = rnd(ks[3], (H, 3 * H))
    whh_b = rnd(ks[6], (H, 3 * H))
    bih_f = rnd(ks[4], (1, 3 * H))
    bih_b = rnd(ks[7], (1, 3 * H))
    bhh_f = jnp.zeros((1, 3 * H), jnp.float32)
    bhh_b = jnp.zeros((1, 3 * H), jnp.float32)

    npad = _round_up(out_size, LANE)
    fc2_w = rnd(ks[10], (linear_out, out_size))
    fc2_b = rnd(ks[11], (1, out_size))

    return {
        # num_linear: Linear(12 -> 64) + LayerNorm(64)
        "emb_w": rnd(ks[0], (input_num_size, num_linear_size)),
        "emb_b": rnd(ks[1], (1, num_linear_size)),
        "emb_gamma": jnp.ones((1, num_linear_size), jnp.float32),
        "emb_beta": jnp.zeros((1, num_linear_size), jnp.float32),
        # bidirectional GRU, packed [fwd | bwd]
        "wih_all": jnp.concatenate([wih_f, wih_b], axis=1),   # (64, 6H)
        "bih_all": jnp.concatenate([bih_f, bih_b], axis=1),   # (1, 6H)
        "whh_all": jnp.concatenate([whh_f, whh_b], axis=1),   # (H, 6H)
        "bhh_all": jnp.concatenate([bhh_f, bhh_b], axis=1),   # (1, 6H)
        # fc_out: Linear(256 -> 128) + LayerNorm(128) + ReLU + Linear(128 -> 3)
        "fc1_w": rnd(ks[8], (2 * H, linear_out)),
        "fc1_b": rnd(ks[9], (1, linear_out)),
        "fc_gamma": jnp.ones((1, linear_out), jnp.float32),
        "fc_beta": jnp.zeros((1, linear_out), jnp.float32),
        "fc2_w": jnp.pad(fc2_w, ((0, 0), (0, npad - out_size))),  # (128, 128)
        "fc2_b": jnp.pad(fc2_b, ((0, 0), (0, npad - out_size))),  # (1, 128)
    }


# ---------------------------------------------------------------------------
# Full forward pass (mirrors SleepRNNMocel.forward)
# ---------------------------------------------------------------------------
@functools.partial(jax.jit, static_argnames=("out_size",))
def sleep_rnn_forward(params, num_array, mask_array, attention_mask, *, out_size=3):
    # mask_array / attention_mask are unused (as in the reference forward()).
    del mask_array, attention_mask
    B, T, F = num_array.shape
    H = params["whh_all"].shape[0]
    Npad = params["fc2_w"].shape[1]
    Bp = _round_up(B, SUBLANE)

    # Time-major layout, batch zero-padded to a sublane multiple. Padding rows are
    # inert: every op in the model is independent along the batch/row axis.
    x = num_array.astype(jnp.float32).transpose(1, 0, 2)          # (T, B, F)
    x = jnp.pad(x, ((0, 0), (0, Bp - B), (0, 0))).reshape(T * Bp, F)

    kernel = functools.partial(fused_sleep_rnn_kernel, T=T, Bp=Bp, H=H)
    out_pad = pl.pallas_call(
        kernel,
        out_shape=jax.ShapeDtypeStruct((T * Bp, Npad), jnp.float32),
        scratch_shapes=[
            pltpu.VMEM((T * Bp, 6 * H), jnp.float32),   # hoisted input-gate pre-acts
            pltpu.VMEM((T * Bp, 2 * H), jnp.float32),   # [fwd | bwd] GRU outputs
        ],
    )(x,
      params["emb_w"], params["emb_b"], params["emb_gamma"], params["emb_beta"],
      params["wih_all"], params["bih_all"], params["whh_all"], params["bhh_all"],
      params["fc1_w"], params["fc1_b"], params["fc_gamma"], params["fc_beta"],
      params["fc2_w"], params["fc2_b"])

    out = out_pad.reshape(T, Bp, Npad)[:, :B, :out_size]          # strip padding
    return out.transpose(1, 0, 2)                                 # (B, T, out_size)


if __name__ == "__main__":
    key = jax.random.PRNGKey(0)
    k_param, k_x = jax.random.split(key)

    bs, seq_len, input_num_size = 2, 8, 12
    params = init_params(k_param, input_num_size=input_num_size)

    num_array = jax.random.normal(k_x, (bs, seq_len, input_num_size), jnp.float32)
    mask_array = jnp.ones((bs, seq_len), jnp.float32)        # unused by forward
    attention_mask = jnp.ones((bs, seq_len), jnp.float32)    # unused by forward

    out = sleep_rnn_forward(params, num_array, mask_array, attention_mask, out_size=3)
    out = jax.block_until_ready(out)
    assert out.shape == (bs, seq_len, 3), out.shape
    print("KERNEL_OK")
</pallas_src>

<mosaic_0001>
module attributes {stable_mosaic.version = 11 : i64} {
  func.func @fused_sleep_rnn_kernel(%arg0: memref<64x12xf32, #tpu.memory_space<vmem>>, %arg1: memref<12x64xf32, #tpu.memory_space<vmem>>, %arg2: memref<1x64xf32, #tpu.memory_space<vmem>>, %arg3: memref<1x64xf32, #tpu.memory_space<vmem>>, %arg4: memref<1x64xf32, #tpu.memory_space<vmem>>, %arg5: memref<64x768xf32, #tpu.memory_space<vmem>>, %arg6: memref<1x768xf32, #tpu.memory_space<vmem>>, %arg7: memref<128x768xf32, #tpu.memory_space<vmem>>, %arg8: memref<1x768xf32, #tpu.memory_space<vmem>>, %arg9: memref<256x128xf32, #tpu.memory_space<vmem>>, %arg10: memref<1x128xf32, #tpu.memory_space<vmem>>, %arg11: memref<1x128xf32, #tpu.memory_space<vmem>>, %arg12: memref<1x128xf32, #tpu.memory_space<vmem>>, %arg13: memref<128x128xf32, #tpu.memory_space<vmem>>, %arg14: memref<1x128xf32, #tpu.memory_space<vmem>>, %arg15: memref<64x128xf32, #tpu.memory_space<vmem>>, %arg16: memref<64x768xf32, #tpu.memory_space<vmem>>, %arg17: memref<64x256xf32, #tpu.memory_space<vmem>>) attributes {dimension_semantics = [], scalar_prefetch = 0 : i64, scratch_operands = 2 : i64, tpu.core_type = #tpu.core_type<tc>} {
    %c0 = arith.constant 0 : index
    %c0_0 = arith.constant 0 : index
    %0 = vector.load %arg0[%c0, %c0_0] : memref<64x12xf32, #tpu.memory_space<vmem>>, vector<64x12xf32>
    %c0_1 = arith.constant 0 : index
    %c0_2 = arith.constant 0 : index
    %1 = vector.load %arg1[%c0_1, %c0_2] : memref<12x64xf32, #tpu.memory_space<vmem>>, vector<12x64xf32>
    %cst = arith.constant dense<0.000000e+00> : vector<64x64xf32>
    %2 = tpu.matmul %0, %1, %cst {dimension_numbers = #tpu.dot_dimension_numbers<[1], [0], [0], [1], [0, 0, 1, 1], [], []>} : vector<64x12xf32>, vector<12x64xf32>, vector<64x64xf32> -> vector<64x64xf32>
    %c0_3 = arith.constant 0 : index
    %c0_4 = arith.constant 0 : index
    %3 = vector.load %arg2[%c0_3, %c0_4] : memref<1x64xf32, #tpu.memory_space<vmem>>, vector<1x64xf32>
    %4 = vector.broadcast %3 : vector<1x64xf32> to vector<64x64xf32>
    %5 = arith.addf %2, %4 : vector<64x64xf32>
    %c0_5 = arith.constant 0 : index
    %c0_6 = arith.constant 0 : index
    %6 = vector.load %arg3[%c0_5, %c0_6] : memref<1x64xf32, #tpu.memory_space<vmem>>, vector<1x64xf32>
    %c0_7 = arith.constant 0 : index
    %c0_8 = arith.constant 0 : index
    %7 = vector.load %arg4[%c0_7, %c0_8] : memref<1x64xf32, #tpu.memory_space<vmem>>, vector<1x64xf32>
    %cst_9 = arith.constant dense<0.000000e+00> : vector<64xf32>
    %8 = vector.multi_reduction <add>, %5, %cst_9 [1] : vector<64x64xf32> to vector<64xf32>
    %9 = vector.shape_cast %8 : vector<64xf32> to vector<64x1xf32>
    %cst_10 = arith.constant 6.400000e+01 : f32
    %10 = vector.broadcast %cst_10 : f32 to vector<64x1xf32>
    %11 = arith.divf %9, %10 : vector<64x1xf32>
    %12 = vector.broadcast %11 : vector<64x1xf32> to vector<64x64xf32>
    %13 = arith.subf %5, %12 : vector<64x64xf32>
    %14 = arith.mulf %13, %13 : vector<64x64xf32>
    %cst_11 = arith.constant dense<0.000000e+00> : vector<64xf32>
    %15 = vector.multi_reduction <add>, %14, %cst_11 [1] : vector<64x64xf32> to vector<64xf32>
    %16 = vector.shape_cast %15 : vector<64xf32> to vector<64x1xf32>
    %cst_12 = arith.constant 6.400000e+01 : f32
    %17 = vector.broadcast %cst_12 : f32 to vector<64x1xf32>
    %18 = arith.divf %16, %17 : vector<64x1xf32>
    %19 = vector.broadcast %11 : vector<64x1xf32> to vector<64x64xf32>
    %20 = arith.subf %5, %19 : vector<64x64xf32>
    %cst_13 = arith.constant 9.99999974E-6 : f32
    %21 = vector.broadcast %cst_13 : f32 to vector<64x1xf32>
    %22 = arith.addf %18, %21 : vector<64x1xf32>
    %23 = math.rsqrt %22 : vector<64x1xf32>
    %24 = vector.broadcast %23 : vector<64x1xf32> to vector<64x64xf32>
    %25 = arith.mulf %20, %24 : vector<64x64xf32>
    %26 = vector.broadcast %6 : vector<1x64xf32> to vector<64x64xf32>
    %27 = arith.mulf %25, %26 : vector<64x64xf32>
    %28 = vector.broadcast %7 : vector<1x64xf32> to vector<64x64xf32>
    %29 = arith.addf %27, %28 : vector<64x64xf32>
    %c0_14 = arith.constant 0 : index
    %c0_15 = arith.constant 0 : index
    %30 = vector.load %arg5[%c0_14, %c0_15] : memref<64x768xf32, #tpu.memory_space<vmem>>, vector<64x768xf32>
    %cst_16 = arith.constant dense<0.000000e+00> : vector<64x768xf32>
    %31 = tpu.matmul %29, %30, %cst_16 {dimension_numbers = #tpu.dot_dimension_numbers<[1], [0], [0], [1], [0, 0, 1, 1], [], []>} : vector<64x64xf32>, vector<64x768xf32>, vector<64x768xf32> -> vector<64x768xf32>
    %c0_17 = arith.constant 0 : index
    %c0_18 = arith.constant 0 : index
    %32 = vector.load %arg6[%c0_17, %c0_18] : memref<1x768xf32, #tpu.memory_space<vmem>>, vector<1x768xf32>
    %33 = vector.broadcast %32 : vector<1x768xf32> to vector<64x768xf32>
    %34 = arith.addf %31, %33 : vector<64x768xf32>
    %c0_19 = arith.constant 0 : index
    %c0_20 = arith.constant 0 : index
    %35 = vector.load %arg16[%c0_19, %c0_20] : memref<64x768xf32, #tpu.memory_space<vmem>>, vector<64x768xf32>
    tpu.vector_store %arg16[%c0_19, %c0_20], %34 {strides = array<i32>} : memref<64x768xf32, #tpu.memory_space<vmem>>, vector<64x768xf32>,
    %cst_21 = arith.constant 0.000000e+00 : f32
    %36 = vector.broadcast %cst_21 : f32 to vector<16x128xf32>
    %c0_22 = arith.constant 0 : index
    %c0_23 = arith.constant 0 : index
    %37 = vector.load %arg16[%c0_22, %c0_23] : memref<64x768xf32, #tpu.memory_space<vmem>>, vector<8x384xf32>
    %c56 = arith.constant 56 : index
    %c384 = arith.constant 384 : index
    %38 = vector.load %arg16[%c56, %c384] : memref<64x768xf32, #tpu.memory_space<vmem>>, vector<8x384xf32>
    %39 = tpu.concatenate %37, %38 in 0 : vector<8x384xf32>, vector<8x384xf32> -> vector<16x384xf32>
    %c0_24 = arith.constant 0 : index
    %c0_25 = arith.constant 0 : index
    %40 = vector.load %arg7[%c0_24, %c0_25] : memref<128x768xf32, #tpu.memory_space<vmem>>, vector<128x768xf32>
    %cst_26 = arith.constant dense<0.000000e+00> : vector<16x768xf32>
    %41 = tpu.matmul %36, %40, %cst_26 {dimension_numbers = #tpu.dot_dimension_numbers<[1], [0], [0], [1], [0, 0, 1, 1], [], []>} : vector<16x128xf32>, vector<128x768xf32>, vector<16x768xf32> -> vector<16x768xf32>
    %c0_27 = arith.constant 0 : index
    %c0_28 = arith.constant 0 : index
    %42 = vector.load %arg8[%c0_27, %c0_28] : memref<1x768xf32, #tpu.memory_space<vmem>>, vector<1x768xf32>
    %43 = vector.broadcast %42 : vector<1x768xf32> to vector<16x768xf32>
    %44 = arith.addf %41, %43 : vector<16x768xf32>
    %45 = vector.extract_strided_slice %44 {offsets = [0, 0], sizes = [8, 384], strides = [1, 1]} : vector<16x768xf32> to vector<8x384xf32>
    %46 = vector.extract_strided_slice %44 {offsets = [8, 384], sizes = [8, 384], strides = [1, 1]} : vector<16x768xf32> to vector<8x384xf32>
    %47 = tpu.concatenate %45, %46 in 0 : vector<8x384xf32>, vector<8x384xf32> -> vector<16x384xf32>
    %48 = vector.extract_strided_slice %39 {offsets = [0, 0], sizes = [16, 128], strides = [1, 1]} : vector<16x384xf32> to vector<16x128xf32>
    %49 = vector.extract_strided_slice %47 {offsets = [0, 0], sizes = [16, 128], strides = [1, 1]} : vector<16x384xf32> to vector<16x128xf32>
    %50 = arith.addf %48, %49 : vector<16x128xf32>
    %51 = arith.negf %50 : vector<16x128xf32>
    %52 = math.exp %51 : vector<16x128xf32>
    %cst_29 = arith.constant 1.000000e+00 : f32
    %53 = vector.broadcast %cst_29 : f32 to vector<16x128xf32>
    %54 = arith.addf %53, %52 : vector<16x128xf32>
    %55 = arith.divf %53, %54 : vector<16x128xf32>
    %56 = vector.extract_strided_slice %39 {offsets = [0, 128], sizes = [16, 128], strides = [1, 1]} : vector<16x384xf32> to vector<16x128xf32>
    %57 = vector.extract_strided_slice %47 {offsets = [0, 128], sizes = [16, 128], strides = [1, 1]} : vector<16x384xf32> to vector<16x128xf32>
    %58 = arith.addf %56, %57 : vector<16x128xf32>
    %59 = arith.negf %58 : vector<16x128xf32>
    %60 = math.exp %59 : vector<16x128xf32>
    %cst_30 = arith.constant 1.000000e+00 : f32
    %61 = vector.broadcast %cst_30 : f32 to vector<16x128xf32>
    %62 = arith.addf %61, %60 : vector<16x128xf32>
    %63 = arith.divf %61, %62 : vector<16x128xf32>
    %64 = vector.extract_strided_slice %39 {offsets = [0, 256], sizes = [16, 128], strides = [1, 1]} : vector<16x384xf32> to vector<16x128xf32>
    %65 = vector.extract_strided_slice %47 {offsets = [0, 256], sizes = [16, 128], strides = [1, 1]} : vector<16x384xf32> to vector<16x128xf32>
    %66 = arith.mulf %55, %65 : vector<16x128xf32>
    %67 = arith.addf %64, %66 : vector<16x128xf32>
    %68 = math.tanh %67 : vector<16x128xf32>
    %cst_31 = arith.constant 1.000000e+00 : f32
    %69 = vector.broadcast %cst_31 : f32 to vector<16x128xf32>
    %70 = arith.subf %69, %63 : vector<16x128xf32>
    %71 = arith.mulf %70, %68 : vector<16x128xf32>
    %72 = arith.mulf %63, %36 : vector<16x128xf32>
    %73 = arith.addf %71, %72 : vector<16x128xf32>
    %74 = vector.extract_strided_slice %73 {offsets = [0, 0], sizes = [8, 128], strides = [1, 1]} : vector<16x128xf32> to vector<8x128xf32>
    %c0_32 = arith.constant 0 : index
    %c0_33 = arith.constant 0 : index
    %75 = vector.load %arg17[%c0_32, %c0_33] : memref<64x256xf32, #tpu.memory_space<vmem>>, vector<8x128xf32>
    tpu.vector_store %arg17[%c0_32, %c0_33], %74 {strides = array<i32>} : memref<64x256xf32, #tpu.memory_space<vmem>>, vector<8x128xf32>,
    %76 = vector.extract_strided_slice %73 {offsets = [8, 0], sizes = [8, 128], strides = [1, 1]} : vector<16x128xf32> to vector<8x128xf32>
    %c56_34 = arith.constant 56 : index
    %c128 = arith.constant 128 : index
    %77 = vector.load %arg17[%c56_34, %c128] : memref<64x256xf32, #tpu.memory_space<vmem>>, vector<8x128xf32>
    tpu.vector_store %arg17[%c56_34, %c128], %76 {strides = array<i32>} : memref<64x256xf32, #tpu.memory_space<vmem>>, vector<8x128xf32>,
    %c8 = arith.constant 8 : index
    %c0_35 = arith.constant 0 : index
    %78 = vector.load %arg16[%c8, %c0_35] : memref<64x768xf32, #tpu.memory_space<vmem>>, vector<8x384xf32>
    %c48 = arith.constant 48 : index
    %c384_36 = arith.constant 384 : index
    %79 = vector.load %arg16[%c48, %c384_36] : memref<64x768xf32, #tpu.memory_space<vmem>>, vector<8x384xf32>
    %80 = tpu.concatenate %78, %79 in 0 : vector<8x384xf32>, vector<8x384xf32> -> vector<16x384xf32>
    %c0_37 = arith.constant 0 : index
    %c0_38 = arith.constant 0 : index
    %81 = vector.load %arg7[%c0_37, %c0_38] : memref<128x768xf32, #tpu.memory_space<vmem>>, vector<128x768xf32>
    %cst_39 = arith.constant dense<0.000000e+00> : vector<16x768xf32>
    %82 = tpu.matmul %73, %81, %cst_39 {dimension_numbers = #tpu.dot_dimension_numbers<[1], [0], [0], [1], [0, 0, 1, 1], [], []>} : vector<16x128xf32>, vector<128x768xf32>, vector<16x768xf32> -> vector<16x768xf32>
    %c0_40 = arith.constant 0 : index
    %c0_41 = arith.constant 0 : index
    %83 = vector.load %arg8[%c0_40, %c0_41] : memref<1x768xf32, #tpu.memory_space<vmem>>, vector<1x768xf32>
    %84 = vector.broadcast %83 : vector<1x768xf32> to vector<16x768xf32>
    %85 = arith.addf %82, %84 : vector<16x768xf32>
    %86 = vector.extract_strided_slice %85 {offsets = [0, 0], sizes = [8, 384], strides = [1, 1]} : vector<16x768xf32> to vector<8x384xf32>
    %87 = vector.extract_strided_slice %85 {offsets = [8, 384], sizes = [8, 384], strides = [1, 1]} : vector<16x768xf32> to vector<8x384xf32>
    %88 = tpu.concatenate %86, %87 in 0 : vector<8x384xf32>, vector<8x384xf32> -> vector<16x384xf32>
    %89 = vector.extract_strided_slice %80 {offsets = [0, 0], sizes = [16, 128], strides = [1, 1]} : vector<16x384xf32> to vector<16x128xf32>
    %90 = vector.extract_strided_slice %88 {offsets = [0, 0], sizes = [16, 128], strides = [1, 1]} : vector<16x384xf32> to vector<16x128xf32>
    %91 = arith.addf %89, %90 : vector<16x128xf32>
    %92 = arith.negf %91 : vector<16x128xf32>
    %93 = math.exp %92 : vector<16x128xf32>
    %cst_42 = arith.constant 1.000000e+00 : f32
    %94 = vector.broadcast %cst_42 : f32 to vector<16x128xf32>
    %95 = arith.addf %94, %93 : vector<16x128xf32>
    %96 = arith.divf %94, %95 : vector<16x128xf32>
    %97 = vector.extract_strided_slice %80 {offsets = [0, 128], sizes = [16, 128], strides = [1, 1]} : vector<16x384xf32> to vector<16x128xf32>
    %98 = vector.extract_strided_slice %88 {offsets = [0, 128], sizes = [16, 128], strides = [1, 1]} : vector<16x384xf32> to vector<16x128xf32>
    %99 = arith.addf %97, %98 : vector<16x128xf32>
    %100 = arith.negf %99 : vector<16x128xf32>
    %101 = math.exp %100 : vector<16x128xf32>
    %cst_43 = arith.constant 1.000000e+00 : f32
    %102 = vector.broadcast %cst_43 : f32 to vector<16x128xf32>
    %103 = arith.addf %102, %101 : vector<16x128xf32>
    %104 = arith.divf %102, %103 : vector<16x128xf32>
    %105 = vector.extract_strided_slice %80 {offsets = [0, 256], sizes = [16, 128], strides = [1, 1]} : vector<16x384xf32> to vector<16x128xf32>
    %106 = vector.extract_strided_slice %88 {offsets = [0, 256], sizes = [16, 128], strides = [1, 1]} : vector<16x384xf32> to vector<16x128xf32>
    %107 = arith.mulf %96, %106 : vector<16x128xf32>
    %108 = arith.addf %105, %107 : vector<16x128xf32>
    %109 = math.tanh %108 : vector<16x128xf32>
    %cst_44 = arith.constant 1.000000e+00 : f32
    %110 = vector.broadcast %cst_44 : f32 to vector<16x128xf32>
    %111 = arith.subf %110, %104 : vector<16x128xf32>
    %112 = arith.mulf %111, %109 : vector<16x128xf32>
    %113 = arith.mulf %104, %73 : vector<16x128xf32>
    %114 = arith.addf %112, %113 : vector<16x128xf32>
    %115 = vector.extract_strided_slice %114 {offsets = [0, 0], sizes = [8, 128], strides = [1, 1]} : vector<16x128xf32> to vector<8x128xf32>
    %c8_45 = arith.constant 8 : index
    %c0_46 = arith.constant 0 : index
    %116 = vector.load %arg17[%c8_45, %c0_46] : memref<64x256xf32, #tpu.memory_space<vmem>>, vector<8x128xf32>
    tpu.vector_store %arg17[%c8_45, %c0_46], %115 {strides = array<i32>} : memref<64x256xf32, #tpu.memory_space<vmem>>, vector<8x128xf32>,
    %117 = vector.extract_strided_slice %114 {offsets = [8, 0], sizes = [8, 128], strides = [1, 1]} : vector<16x128xf32> to vector<8x128xf32>
    %c48_47 = arith.constant 48 : index
    %c128_48 = arith.constant 128 : index
    %118 = vector.load %arg17[%c48_47, %c128_48] : memref<64x256xf32, #tpu.memory_space<vmem>>, vector<8x128xf32>
    tpu.vector_store %arg17[%c48_47, %c128_48], %117 {strides = array<i32>} : memref<64x256xf32, #tpu.memory_space<vmem>>, vector<8x128xf32>,
    %c16 = arith.constant 16 : index
    %c0_49 = arith.constant 0 : index
    %119 = vector.load %arg16[%c16, %c0_49] : memref<64x768xf32, #tpu.memory_space<vmem>>, vector<8x384xf32>
    %c40 = arith.constant 40 : index
    %c384_50 = arith.constant 384 : index
    %120 = vector.load %arg16[%c40, %c384_50] : memref<64x768xf32, #tpu.memory_space<vmem>>, vector<8x384xf32>
    %121 = tpu.concatenate %119, %120 in 0 : vector<8x384xf32>, vector<8x384xf32> -> vector<16x384xf32>
    %c0_51 = arith.constant 0 : index
    %c0_52 = arith.constant 0 : index
    %122 = vector.load %arg7[%c0_51, %c0_52] : memref<128x768xf32, #tpu.memory_space<vmem>>, vector<128x768xf32>
    %cst_53 = arith.constant dense<0.000000e+00> : vector<16x768xf32>
    %123 = tpu.matmul %114, %122, %cst_53 {dimension_numbers = #tpu.dot_dimension_numbers<[1], [0], [0], [1], [0, 0, 1, 1], [], []>} : vector<16x128xf32>, vector<128x768xf32>, vector<16x768xf32> -> vector<16x768xf32>
    %c0_54 = arith.constant 0 : index
    %c0_55 = arith.constant 0 : index
    %124 = vector.load %arg8[%c0_54, %c0_55] : memref<1x768xf32, #tpu.memory_space<vmem>>, vector<1x768xf32>
    %125 = vector.broadcast %124 : vector<1x768xf32> to vector<16x768xf32>
    %126 = arith.addf %123, %125 : vector<16x768xf32>
    %127 = vector.extract_strided_slice %126 {offsets = [0, 0], sizes = [8, 384], strides = [1, 1]} : vector<16x768xf32> to vector<8x384xf32>
    %128 = vector.extract_strided_slice %126 {offsets = [8, 384], sizes = [8, 384], strides = [1, 1]} : vector<16x768xf32> to vector<8x384xf32>
    %129 = tpu.concatenate %127, %128 in 0 : vector<8x384xf32>, vector<8x384xf32> -> vector<16x384xf32>
    %130 = vector.extract_strided_slice %121 {offsets = [0, 0], sizes = [16, 128], strides = [1, 1]} : vector<16x384xf32> to vector<16x128xf32>
    %131 = vector.extract_strided_slice %129 {offsets = [0, 0], sizes = [16, 128], strides = [1, 1]} : vector<16x384xf32> to vector<16x128xf32>
    %132 = arith.addf %130, %131 : vector<16x128xf32>
    %133 = arith.negf %132 : vector<16x128xf32>
    %134 = math.exp %133 : vector<16x128xf32>
    %cst_56 = arith.constant 1.000000e+00 : f32
    %135 = vector.broadcast %cst_56 : f32 to vector<16x128xf32>
    %136 = arith.addf %135, %134 : vector<16x128xf32>
    %137 = arith.divf %135, %136 : vector<16x128xf32>
    %138 = vector.extract_strided_slice %121 {offsets = [0, 128], sizes = [16, 128], strides = [1, 1]} : vector<16x384xf32> to vector<16x128xf32>
    %139 = vector.extract_strided_slice %129 {offsets = [0, 128], sizes = [16, 128], strides = [1, 1]} : vector<16x384xf32> to vector<16x128xf32>
    %140 = arith.addf %138, %139 : vector<16x128xf32>
    %141 = arith.negf %140 : vector<16x128xf32>
    %142 = math.exp %141 : vector<16x128xf32>
    %cst_57 = arith.constant 1.000000e+00 : f32
    %143 = vector.broadcast %cst_57 : f32 to vector<16x128xf32>
    %144 = arith.addf %143, %142 : vector<16x128xf32>
    %145 = arith.divf %143, %144 : vector<16x128xf32>
    %146 = vector.extract_strided_slice %121 {offsets = [0, 256], sizes = [16, 128], strides = [1, 1]} : vector<16x384xf32> to vector<16x128xf32>
    %147 = vector.extract_strided_slice %129 {offsets = [0, 256], sizes = [16, 128], strides = [1, 1]} : vector<16x384xf32> to vector<16x128xf32>
    %148 = arith.mulf %137, %147 : vector<16x128xf32>
    %149 = arith.addf %146, %148 : vector<16x128xf32>
    %150 = math.tanh %149 : vector<16x128xf32>
    %cst_58 = arith.constant 1.000000e+00 : f32
    %151 = vector.broadcast %cst_58 : f32 to vector<16x128xf32>
    %152 = arith.subf %151, %145 : vector<16x128xf32>
    %153 = arith.mulf %152, %150 : vector<16x128xf32>
    %154 = arith.mulf %145, %114 : vector<16x128xf32>
    %155 = arith.addf %153, %154 : vector<16x128xf32>
    %156 = vector.extract_strided_slice %155 {offsets = [0, 0], sizes = [8, 128], strides = [1, 1]} : vector<16x128xf32> to vector<8x128xf32>
    %c16_59 = arith.constant 16 : index
    %c0_60 = arith.constant 0 : index
    %157 = vector.load %arg17[%c16_59, %c0_60] : memref<64x256xf32, #tpu.memory_space<vmem>>, vector<8x128xf32>
    tpu.vector_store %arg17[%c16_59, %c0_60], %156 {strides = array<i32>} : memref<64x256xf32, #tpu.memory_space<vmem>>, vector<8x128xf32>,
    %158 = vector.extract_strided_slice %155 {offsets = [8, 0], sizes = [8, 128], strides = [1, 1]} : vector<16x128xf32> to vector<8x128xf32>
    %c40_61 = arith.constant 40 : index
    %c128_62 = arith.constant 128 : index
    %159 = vector.load %arg17[%c40_61, %c128_62] : memref<64x256xf32, #tpu.memory_space<vmem>>, vector<8x128xf32>
    tpu.vector_store %arg17[%c40_61, %c128_62], %158 {strides = array<i32>} : memref<64x256xf32, #tpu.memory_space<vmem>>, vector<8x128xf32>,
    %c24 = arith.constant 24 : index
    %c0_63 = arith.constant 0 : index
    %160 = vector.load %arg16[%c24, %c0_63] : memref<64x768xf32, #tpu.memory_space<vmem>>, vector<8x384xf32>
    %c32 = arith.constant 32 : index
    %c384_64 = arith.constant 384 : index
    %161 = vector.load %arg16[%c32, %c384_64] : memref<64x768xf32, #tpu.memory_space<vmem>>, vector<8x384xf32>
    %162 = tpu.concatenate %160, %161 in 0 : vector<8x384xf32>, vector<8x384xf32> -> vector<16x384xf32>
    %c0_65 = arith.constant 0 : index
    %c0_66 = arith.constant 0 : index
    %163 = vector.load %arg7[%c0_65, %c0_66] : memref<128x768xf32, #tpu.memory_space<vmem>>, vector<128x768xf32>
    %cst_67 = arith.constant dense<0.000000e+00> : vector<16x768xf32>
    %164 = tpu.matmul %155, %163, %cst_67 {dimension_numbers = #tpu.dot_dimension_numbers<[1], [0], [0], [1], [0, 0, 1, 1], [], []>} : vector<16x128xf32>, vector<128x768xf32>, vector<16x768xf32> -> vector<16x768xf32>
    %c0_68 = arith.constant 0 : index
    %c0_69 = arith.constant 0 : index
    %165 = vector.load %arg8[%c0_68, %c0_69] : memref<1x768xf32, #tpu.memory_space<vmem>>, vector<1x768xf32>
    %166 = vector.broadcast %165 : vector<1x768xf32> to vector<16x768xf32>
    %167 = arith.addf %164, %166 : vector<16x768xf32>
    %168 = vector.extract_strided_slice %167 {offsets = [0, 0], sizes = [8, 384], strides = [1, 1]} : vector<16x768xf32> to vector<8x384xf32>
    %169 = vector.extract_strided_slice %167 {offsets = [8, 384], sizes = [8, 384], strides = [1, 1]} : vector<16x768xf32> to vector<8x384xf32>
    %170 = tpu.concatenate %168, %169 in 0 : vector<8x384xf32>, vector<8x384xf32> -> vector<16x384xf32>
    %171 = vector.extract_strided_slice %162 {offsets = [0, 0], sizes = [16, 128], strides = [1, 1]} : vector<16x384xf32> to vector<16x128xf32>
    %172 = vector.extract_strided_slice %170 {offsets = [0, 0], sizes = [16, 128], strides = [1, 1]} : vector<16x384xf32> to vector<16x128xf32>
    %173 = arith.addf %171, %172 : vector<16x128xf32>
    %174 = arith.negf %173 : vector<16x128xf32>
    %175 = math.exp %174 : vector<16x128xf32>
    %cst_70 = arith.constant 1.000000e+00 : f32
    %176 = vector.broadcast %cst_70 : f32 to vector<16x128xf32>
    %177 = arith.addf %176, %175 : vector<16x128xf32>
    %178 = arith.divf %176, %177 : vector<16x128xf32>
    %179 = vector.extract_strided_slice %162 {offsets = [0, 128], sizes = [16, 128], strides = [1, 1]} : vector<16x384xf32> to vector<16x128xf32>
    %180 = vector.extract_strided_slice %170 {offsets = [0, 128], sizes = [16, 128], strides = [1, 1]} : vector<16x384xf32> to vector<16x128xf32>
    %181 = arith.addf %179, %180 : vector<16x128xf32>
    %182 = arith.negf %181 : vector<16x128xf32>
    %183 = math.exp %182 : vector<16x128xf32>
    %cst_71 = arith.constant 1.000000e+00 : f32
    %184 = vector.broadcast %cst_71 : f32 to vector<16x128xf32>
    %185 = arith.addf %184, %183 : vector<16x128xf32>
    %186 = arith.divf %184, %185 : vector<16x128xf32>
    %187 = vector.extract_strided_slice %162 {offsets = [0, 256], sizes = [16, 128], strides = [1, 1]} : vector<16x384xf32> to vector<16x128xf32>
    %188 = vector.extract_strided_slice %170 {offsets = [0, 256], sizes = [16, 128], strides = [1, 1]} : vector<16x384xf32> to vector<16x128xf32>
    %189 = arith.mulf %178, %188 : vector<16x128xf32>
    %190 = arith.addf %187, %189 : vector<16x128xf32>
    %191 = math.tanh %190 : vector<16x128xf32>
    %cst_72 = arith.constant 1.000000e+00 : f32
    %192 = vector.broadcast %cst_72 : f32 to vector<16x128xf32>
    %193 = arith.subf %192, %186 : vector<16x128xf32>
    %194 = arith.mulf %193, %191 : vector<16x128xf32>
    %195 = arith.mulf %186, %155 : vector<16x128xf32>
    %196 = arith.addf %194, %195 : vector<16x128xf32>
    %197 = vector.extract_strided_slice %196 {offsets = [0, 0], sizes = [8, 128], strides = [1, 1]} : vector<16x128xf32> to vector<8x128xf32>
    %c24_73 = arith.constant 24 : index
    %c0_74 = arith.constant 0 : index
    %198 = vector.load %arg17[%c24_73, %c0_74] : memref<64x256xf32, #tpu.memory_space<vmem>>, vector<8x128xf32>
    tpu.vector_store %arg17[%c24_73, %c0_74], %197 {strides = array<i32>} : memref<64x256xf32, #tpu.memory_space<vmem>>, vector<8x128xf32>,
    %199 = vector.extract_strided_slice %196 {offsets = [8, 0], sizes = [8, 128], strides = [1, 1]} : vector<16x128xf32> to vector<8x128xf32>
    %c32_75 = arith.constant 32 : index
    %c128_76 = arith.constant 128 : index
    %200 = vector.load %arg17[%c32_75, %c128_76] : memref<64x256xf32, #tpu.memory_space<vmem>>, vector<8x128xf32>
    tpu.vector_store %arg17[%c32_75, %c128_76], %199 {strides = array<i32>} : memref<64x256xf32, #tpu.memory_space<vmem>>, vector<8x128xf32>,
    %c32_77 = arith.constant 32 : index
    %c0_78 = arith.constant 0 : index
    %201 = vector.load %arg16[%c32_77, %c0_78] : memref<64x768xf32, #tpu.memory_space<vmem>>, vector<8x384xf32>
    %c24_79 = arith.constant 24 : index
    %c384_80 = arith.constant 384 : index
    %202 = vector.load %arg16[%c24_79, %c384_80] : memref<64x768xf32, #tpu.memory_space<vmem>>, vector<8x384xf32>
    %203 = tpu.concatenate %201, %202 in 0 : vector<8x384xf32>, vector<8x384xf32> -> vector<16x384xf32>
    %c0_81 = arith.constant 0 : index
    %c0_82 = arith.constant 0 : index
    %204 = vector.load %arg7[%c0_81, %c0_82] : memref<128x768xf32, #tpu.memory_space<vmem>>, vector<128x768xf32>
    %cst_83 = arith.constant dense<0.000000e+00> : vector<16x768xf32>
    %205 = tpu.matmul %196, %204, %cst_83 {dimension_numbers = #tpu.dot_dimension_numbers<[1], [0], [0], [1], [0, 0, 1, 1], [], []>} : vector<16x128xf32>, vector<128x768xf32>, vector<16x768xf32> -> vector<16x768xf32>
    %c0_84 = arith.constant 0 : index
    %c0_85 = arith.constant 0 : index
    %206 = vector.load %arg8[%c0_84, %c0_85] : memref<1x768xf32, #tpu.memory_space<vmem>>, vector<1x768xf32>
    %207 = vector.broadcast %206 : vector<1x768xf32> to vector<16x768xf32>
    %208 = arith.addf %205, %207 : vector<16x768xf32>
    %209 = vector.extract_strided_slice %208 {offsets = [0, 0], sizes = [8, 384], strides = [1, 1]} : vector<16x768xf32> to vector<8x384xf32>
    %210 = vector.extract_strided_slice %208 {offsets = [8, 384], sizes = [8, 384], strides = [1, 1]} : vector<16x768xf32> to vector<8x384xf32>
    %211 = tpu.concatenate %209, %210 in 0 : vector<8x384xf32>, vector<8x384xf32> -> vector<16x384xf32>
    %212 = vector.extract_strided_slice %203 {offsets = [0, 0], sizes = [16, 128], strides = [1, 1]} : vector<16x384xf32> to vector<16x128xf32>
    %213 = vector.extract_strided_slice %211 {offsets = [0, 0], sizes = [16, 128], strides = [1, 1]} : vector<16x384xf32> to vector<16x128xf32>
    %214 = arith.addf %212, %213 : vector<16x128xf32>
    %215 = arith.negf %214 : vector<16x128xf32>
    %216 = math.exp %215 : vector<16x128xf32>
    %cst_86 = arith.constant 1.000000e+00 : f32
    %217 = vector.broadcast %cst_86 : f32 to vector<16x128xf32>
    %218 = arith.addf %217, %216 : vector<16x128xf32>
    %219 = arith.divf %217, %218 : vector<16x128xf32>
    %220 = vector.extract_strided_slice %203 {offsets = [0, 128], sizes = [16, 128], strides = [1, 1]} : vector<16x384xf32> to vector<16x128xf32>
    %221 = vector.extract_strided_slice %211 {offsets = [0, 128], sizes = [16, 128], strides = [1, 1]} : vector<16x384xf32> to vector<16x128xf32>
    %222 = arith.addf %220, %221 : vector<16x128xf32>
    %223 = arith.negf %222 : vector<16x128xf32>
    %224 = math.exp %223 : vector<16x128xf32>
    %cst_87 = arith.constant 1.000000e+00 : f32
    %225 = vector.broadcast %cst_87 : f32 to vector<16x128xf32>
    %226 = arith.addf %225, %224 : vector<16x128xf32>
    %227 = arith.divf %225, %226 : vector<16x128xf32>
    %228 = vector.extract_strided_slice %203 {offsets = [0, 256], sizes = [16, 128], strides = [1, 1]} : vector<16x384xf32> to vector<16x128xf32>
    %229 = vector.extract_strided_slice %211 {offsets = [0, 256], sizes = [16, 128], strides = [1, 1]} : vector<16x384xf32> to vector<16x128xf32>
    %230 = arith.mulf %219, %229 : vector<16x128xf32>
    %231 = arith.addf %228, %230 : vector<16x128xf32>
    %232 = math.tanh %231 : vector<16x128xf32>
    %cst_88 = arith.constant 1.000000e+00 : f32
    %233 = vector.broadcast %cst_88 : f32 to vector<16x128xf32>
    %234 = arith.subf %233, %227 : vector<16x128xf32>
    %235 = arith.mulf %234, %232 : vector<16x128xf32>
    %236 = arith.mulf %227, %196 : vector<16x128xf32>
    %237 = arith.addf %235, %236 : vector<16x128xf32>
    %238 = vector.extract_strided_slice %237 {offsets = [0, 0], sizes = [8, 128], strides = [1, 1]} : vector<16x128xf32> to vector<8x128xf32>
    %c32_89 = arith.constant 32 : index
    %c0_90 = arith.constant 0 : index
    %239 = vector.load %arg17[%c32_89, %c0_90] : memref<64x256xf32, #tpu.memory_space<vmem>>, vector<8x128xf32>
    tpu.vector_store %arg17[%c32_89, %c0_90], %238 {strides = array<i32>} : memref<64x256xf32, #tpu.memory_space<vmem>>, vector<8x128xf32>,
    %240 = vector.extract_strided_slice %237 {offsets = [8, 0], sizes = [8, 128], strides = [1, 1]} : vector<16x128xf32> to vector<8x128xf32>
    %c24_91 = arith.constant 24 : index
    %c128_92 = arith.constant 128 : index
    %241 = vector.load %arg17[%c24_91, %c128_92] : memref<64x256xf32, #tpu.memory_space<vmem>>, vector<8x128xf32>
    tpu.vector_store %arg17[%c24_91, %c128_92], %240 {strides = array<i32>} : memref<64x256xf32, #tpu.memory_space<vmem>>, vector<8x128xf32>,
    %c40_93 = arith.constant 40 : index
    %c0_94 = arith.constant 0 : index
    %242 = vector.load %arg16[%c40_93, %c0_94] : memref<64x768xf32, #tpu.memory_space<vmem>>, vector<8x384xf32>
    %c16_95 = arith.constant 16 : index
    %c384_96 = arith.constant 384 : index
    %243 = vector.load %arg16[%c16_95, %c384_96] : memref<64x768xf32, #tpu.memory_space<vmem>>, vector<8x384xf32>
    %244 = tpu.concatenate %242, %243 in 0 : vector<8x384xf32>, vector<8x384xf32> -> vector<16x384xf32>
    %c0_97 = arith.constant 0 : index
    %c0_98 = arith.constant 0 : index
    %245 = vector.load %arg7[%c0_97, %c0_98] : memref<128x768xf32, #tpu.memory_space<vmem>>, vector<128x768xf32>
    %cst_99 = arith.constant dense<0.000000e+00> : vector<16x768xf32>
    %246 = tpu.matmul %237, %245, %cst_99 {dimension_numbers = #tpu.dot_dimension_numbers<[1], [0], [0], [1], [0, 0, 1, 1], [], []>} : vector<16x128xf32>, vector<128x768xf32>, vector<16x768xf32> -> vector<16x768xf32>
    %c0_100 = arith.constant 0 : index
    %c0_101 = arith.constant 0 : index
    %247 = vector.load %arg8[%c0_100, %c0_101] : memref<1x768xf32, #tpu.memory_space<vmem>>, vector<1x768xf32>
    %248 = vector.broadcast %247 : vector<1x768xf32> to vector<16x768xf32>
    %249 = arith.addf %246, %248 : vector<16x768xf32>
    %250 = vector.extract_strided_slice %249 {offsets = [0, 0], sizes = [8, 384], strides = [1, 1]} : vector<16x768xf32> to vector<8x384xf32>
    %251 = vector.extract_strided_slice %249 {offsets = [8, 384], sizes = [8, 384], strides = [1, 1]} : vector<16x768xf32> to vector<8x384xf32>
    %252 = tpu.concatenate %250, %251 in 0 : vector<8x384xf32>, vector<8x384xf32> -> vector<16x384xf32>
    %253 = vector.extract_strided_slice %244 {offsets = [0, 0], sizes = [16, 128], strides = [1, 1]} : vector<16x384xf32> to vector<16x128xf32>
    %254 = vector.extract_strided_slice %252 {offsets = [0, 0], sizes = [16, 128], strides = [1, 1]} : vector<16x384xf32> to vector<16x128xf32>
    %255 = arith.addf %253, %254 : vector<16x128xf32>
    %256 = arith.negf %255 : vector<16x128xf32>
    %257 = math.exp %256 : vector<16x128xf32>
    %cst_102 = arith.constant 1.000000e+00 : f32
    %258 = vector.broadcast %cst_102 : f32 to vector<16x128xf32>
    %259 = arith.addf %258, %257 : vector<16x128xf32>
    %260 = arith.divf %258, %259 : vector<16x128xf32>
    %261 = vector.extract_strided_slice %244 {offsets = [0, 128], sizes = [16, 128], strides = [1, 1]} : vector<16x384xf32> to vector<16x128xf32>
    %262 = vector.extract_strided_slice %252 {offsets = [0, 128], sizes = [16, 128], strides = [1, 1]} : vector<16x384xf32> to vector<16x128xf32>
    %263 = arith.addf %261, %262 : vector<16x128xf32>
    %264 = arith.negf %263 : vector<16x128xf32>
    %265 = math.exp %264 : vector<16x128xf32>
    %cst_103 = arith.constant 1.000000e+00 : f32
    %266 = vector.broadcast %cst_103 : f32 to vector<16x128xf32>
    %267 = arith.addf %266, %265 : vector<16x128xf32>
    %268 = arith.divf %266, %267 : vector<16x128xf32>
    %269 = vector.extract_strided_slice %244 {offsets = [0, 256], sizes = [16, 128], strides = [1, 1]} : vector<16x384xf32> to vector<16x128xf32>
    %270 = vector.extract_strided_slice %252 {offsets = [0, 256], sizes = [16, 128], strides = [1, 1]} : vector<16x384xf32> to vector<16x128xf32>
    %271 = arith.mulf %260, %270 : vector<16x128xf32>
    %272 = arith.addf %269, %271 : vector<16x128xf32>
    %273 = math.tanh %272 : vector<16x128xf32>
    %cst_104 = arith.constant 1.000000e+00 : f32
    %274 = vector.broadcast %cst_104 : f32 to vector<16x128xf32>
    %275 = arith.subf %274, %268 : vector<16x128xf32>
    %276 = arith.mulf %275, %273 : vector<16x128xf32>
    %277 = arith.mulf %268, %237 : vector<16x128xf32>
    %278 = arith.addf %276, %277 : vector<16x128xf32>
    %279 = vector.extract_strided_slice %278 {offsets = [0, 0], sizes = [8, 128], strides = [1, 1]} : vector<16x128xf32> to vector<8x128xf32>
    %c40_105 = arith.constant 40 : index
    %c0_106 = arith.constant 0 : index
    %280 = vector.load %arg17[%c40_105, %c0_106] : memref<64x256xf32, #tpu.memory_space<vmem>>, vector<8x128xf32>
    tpu.vector_store %arg17[%c40_105, %c0_106], %279 {strides = array<i32>} : memref<64x256xf32, #tpu.memory_space<vmem>>, vector<8x128xf32>,
    %281 = vector.extract_strided_slice %278 {offsets = [8, 0], sizes = [8, 128], strides = [1, 1]} : vector<16x128xf32> to vector<8x128xf32>
    %c16_107 = arith.constant 16 : index
    %c128_108 = arith.constant 128 : index
    %282 = vector.load %arg17[%c16_107, %c128_108] : memref<64x256xf32, #tpu.memory_space<vmem>>, vector<8x128xf32>
    tpu.vector_store %arg17[%c16_107, %c128_108], %281 {strides = array<i32>} : memref<64x256xf32, #tpu.memory_space<vmem>>, vector<8x128xf32>,
    %c48_109 = arith.constant 48 : index
    %c0_110 = arith.constant 0 : index
    %283 = vector.load %arg16[%c48_109, %c0_110] : memref<64x768xf32, #tpu.memory_space<vmem>>, vector<8x384xf32>
    %c8_111 = arith.constant 8 : index
    %c384_112 = arith.constant 384 : index
    %284 = vector.load %arg16[%c8_111, %c384_112] : memref<64x768xf32, #tpu.memory_space<vmem>>, vector<8x384xf32>
    %285 = tpu.concatenate %283, %284 in 0 : vector<8x384xf32>, vector<8x384xf32> -> vector<16x384xf32>
    %c0_113 = arith.constant 0 : index
    %c0_114 = arith.constant 0 : index
    %286 = vector.load %arg7[%c0_113, %c0_114] : memref<128x768xf32, #tpu.memory_space<vmem>>, vector<128x768xf32>
    %cst_115 = arith.constant dense<0.000000e+00> : vector<16x768xf32>
    %287 = tpu.matmul %278, %286, %cst_115 {dimension_numbers = #tpu.dot_dimension_numbers<[1], [0], [0], [1], [0, 0, 1, 1], [], []>} : vector<16x128xf32>, vector<128x768xf32>, vector<16x768xf32> -> vector<16x768xf32>
    %c0_116 = arith.constant 0 : index
    %c0_117 = arith.constant 0 : index
    %288 = vector.load %arg8[%c0_116, %c0_117] : memref<1x768xf32, #tpu.memory_space<vmem>>, vector<1x768xf32>
    %289 = vector.broadcast %288 : vector<1x768xf32> to vector<16x768xf32>
    %290 = arith.addf %287, %289 : vector<16x768xf32>
    %291 = vector.extract_strided_slice %290 {offsets = [0, 0], sizes = [8, 384], strides = [1, 1]} : vector<16x768xf32> to vector<8x384xf32>
    %292 = vector.extract_strided_slice %290 {offsets = [8, 384], sizes = [8, 384], strides = [1, 1]} : vector<16x768xf32> to vector<8x384xf32>
    %293 = tpu.concatenate %291, %292 in 0 : vector<8x384xf32>, vector<8x384xf32> -> vector<16x384xf32>
    %294 = vector.extract_strided_slice %285 {offsets = [0, 0], sizes = [16, 128], strides = [1, 1]} : vector<16x384xf32> to vector<16x128xf32>
    %295 = vector.extract_strided_slice %293 {offsets = [0, 0], sizes = [16, 128], strides = [1, 1]} : vector<16x384xf32> to vector<16x128xf32>
    %296 = arith.addf %294, %295 : vector<16x128xf32>
    %297 = arith.negf %296 : vector<16x128xf32>
    %298 = math.exp %297 : vector<16x128xf32>
    %cst_118 = arith.constant 1.000000e+00 : f32
    %299 = vector.broadcast %cst_118 : f32 to vector<16x128xf32>
    %300 = arith.addf %299, %298 : vector<16x128xf32>
    %301 = arith.divf %299, %300 : vector<16x128xf32>
    %302 = vector.extract_strided_slice %285 {offsets = [0, 128], sizes = [16, 128], strides = [1, 1]} : vector<16x384xf32> to vector<16x128xf32>
    %303 = vector.extract_strided_slice %293 {offsets = [0, 128], sizes = [16, 128], strides = [1, 1]} : vector<16x384xf32> to vector<16x128xf32>
    %304 = arith.addf %302, %303 : vector<16x128xf32>
    %305 = arith.negf %304 : vector<16x128xf32>
    %306 = math.exp %305 : vector<16x128xf32>
    %cst_119 = arith.constant 1.000000e+00 : f32
    %307 = vector.broadcast %cst_119 : f32 to vector<16x128xf32>
    %308 = arith.addf %307, %306 : vector<16x128xf32>
    %309 = arith.divf %307, %308 : vector<16x128xf32>
    %310 = vector.extract_strided_slice %285 {offsets = [0, 256], sizes = [16, 128], strides = [1, 1]} : vector<16x384xf32> to vector<16x128xf32>
    %311 = vector.extract_strided_slice %293 {offsets = [0, 256], sizes = [16, 128], strides = [1, 1]} : vector<16x384xf32> to vector<16x128xf32>
    %312 = arith.mulf %301, %311 : vector<16x128xf32>
    %313 = arith.addf %310, %312 : vector<16x128xf32>
    %314 = math.tanh %313 : vector<16x128xf32>
    %cst_120 = arith.constant 1.000000e+00 : f32
    %315 = vector.broadcast %cst_120 : f32 to vector<16x128xf32>
    %316 = arith.subf %315, %309 : vector<16x128xf32>
    %317 = arith.mulf %316, %314 : vector<16x128xf32>
    %318 = arith.mulf %309, %278 : vector<16x128xf32>
    %319 = arith.addf %317, %318 : vector<16x128xf32>
    %320 = vector.extract_strided_slice %319 {offsets = [0, 0], sizes = [8, 128], strides = [1, 1]} : vector<16x128xf32> to vector<8x128xf32>
    %c48_121 = arith.constant 48 : index
    %c0_122 = arith.constant 0 : index
    %321 = vector.load %arg17[%c48_121, %c0_122] : memref<64x256xf32, #tpu.memory_space<vmem>>, vector<8x128xf32>
    tpu.vector_store %arg17[%c48_121, %c0_122], %320 {strides = array<i32>} : memref<64x256xf32, #tpu.memory_space<vmem>>, vector<8x128xf32>,
    %322 = vector.extract_strided_slice %319 {offsets = [8, 0], sizes = [8, 128], strides = [1, 1]} : vector<16x128xf32> to vector<8x128xf32>
    %c8_123 = arith.constant 8 : index
    %c128_124 = arith.constant 128 : index
    %323 = vector.load %arg17[%c8_123, %c128_124] : memref<64x256xf32, #tpu.memory_space<vmem>>, vector<8x128xf32>
    tpu.vector_store %arg17[%c8_123, %c128_124], %322 {strides = array<i32>} : memref<64x256xf32, #tpu.memory_space<vmem>>, vector<8x128xf32>,
    %c56_125 = arith.constant 56 : index
    %c0_126 = arith.constant 0 : index
    %324 = vector.load %arg16[%c56_125, %c0_126] : memref<64x768xf32, #tpu.memory_space<vmem>>, vector<8x384xf32>
    %c0_127 = arith.constant 0 : index
    %c384_128 = arith.constant 384 : index
    %325 = vector.load %arg16[%c0_127, %c384_128] : memref<64x768xf32, #tpu.memory_space<vmem>>, vector<8x384xf32>
    %326 = tpu.concatenate %324, %325 in 0 : vector<8x384xf32>, vector<8x384xf32> -> vector<16x384xf32>
    %c0_129 = arith.constant 0 : index
    %c0_130 = arith.constant 0 : index
    %327 = vector.load %arg7[%c0_129, %c0_130] : memref<128x768xf32, #tpu.memory_space<vmem>>, vector<128x768xf32>
    %cst_131 = arith.constant dense<0.000000e+00> : vector<16x768xf32>
    %328 = tpu.matmul %319, %327, %cst_131 {dimension_numbers = #tpu.dot_dimension_numbers<[1], [0], [0], [1], [0, 0, 1, 1], [], []>} : vector<16x128xf32>, vector<128x768xf32>, vector<16x768xf32> -> vector<16x768xf32>
    %c0_132 = arith.constant 0 : index
    %c0_133 = arith.constant 0 : index
    %329 = vector.load %arg8[%c0_132, %c0_133] : memref<1x768xf32, #tpu.memory_space<vmem>>, vector<1x768xf32>
    %330 = vector.broadcast %329 : vector<1x768xf32> to vector<16x768xf32>
    %331 = arith.addf %328, %330 : vector<16x768xf32>
    %332 = vector.extract_strided_slice %331 {offsets = [0, 0], sizes = [8, 384], strides = [1, 1]} : vector<16x768xf32> to vector<8x384xf32>
    %333 = vector.extract_strided_slice %331 {offsets = [8, 384], sizes = [8, 384], strides = [1, 1]} : vector<16x768xf32> to vector<8x384xf32>
    %334 = tpu.concatenate %332, %333 in 0 : vector<8x384xf32>, vector<8x384xf32> -> vector<16x384xf32>
    %335 = vector.extract_strided_slice %326 {offsets = [0, 0], sizes = [16, 128], strides = [1, 1]} : vector<16x384xf32> to vector<16x128xf32>
    %336 = vector.extract_strided_slice %334 {offsets = [0, 0], sizes = [16, 128], strides = [1, 1]} : vector<16x384xf32> to vector<16x128xf32>
    %337 = arith.addf %335, %336 : vector<16x128xf32>
    %338 = arith.negf %337 : vector<16x128xf32>
    %339 = math.exp %338 : vector<16x128xf32>
    %cst_134 = arith.constant 1.000000e+00 : f32
    %340 = vector.broadcast %cst_134 : f32 to vector<16x128xf32>
    %341 = arith.addf %340, %339 : vector<16x128xf32>
    %342 = arith.divf %340, %341 : vector<16x128xf32>
    %343 = vector.extract_strided_slice %326 {offsets = [0, 128], sizes = [16, 128], strides = [1, 1]} : vector<16x384xf32> to vector<16x128xf32>
    %344 = vector.extract_strided_slice %334 {offsets = [0, 128], sizes = [16, 128], strides = [1, 1]} : vector<16x384xf32> to vector<16x128xf32>
    %345 = arith.addf %343, %344 : vector<16x128xf32>
    %346 = arith.negf %345 : vector<16x128xf32>
    %347 = math.exp %346 : vector<16x128xf32>
    %cst_135 = arith.constant 1.000000e+00 : f32
    %348 = vector.broadcast %cst_135 : f32 to vector<16x128xf32>
    %349 = arith.addf %348, %347 : vector<16x128xf32>
    %350 = arith.divf %348, %349 : vector<16x128xf32>
    %351 = vector.extract_strided_slice %326 {offsets = [0, 256], sizes = [16, 128], strides = [1, 1]} : vector<16x384xf32> to vector<16x128xf32>
    %352 = vector.extract_strided_slice %334 {offsets = [0, 256], sizes = [16, 128], strides = [1, 1]} : vector<16x384xf32> to vector<16x128xf32>
    %353 = arith.mulf %342, %352 : vector<16x128xf32>
    %354 = arith.addf %351, %353 : vector<16x128xf32>
    %355 = math.tanh %354 : vector<16x128xf32>
    %cst_136 = arith.constant 1.000000e+00 : f32
    %356 = vector.broadcast %cst_136 : f32 to vector<16x128xf32>
    %357 = arith.subf %356, %350 : vector<16x128xf32>
    %358 = arith.mulf %357, %355 : vector<16x128xf32>
    %359 = arith.mulf %350, %319 : vector<16x128xf32>
    %360 = arith.addf %358, %359 : vector<16x128xf32>
    %361 = vector.extract_strided_slice %360 {offsets = [0, 0], sizes = [8, 128], strides = [1, 1]} : vector<16x128xf32> to vector<8x128xf32>
    %c56_137 = arith.constant 56 : index
    %c0_138 = arith.constant 0 : index
    %362 = vector.load %arg17[%c56_137, %c0_138] : memref<64x256xf32, #tpu.memory_space<vmem>>, vector<8x128xf32>
    tpu.vector_store %arg17[%c56_137, %c0_138], %361 {strides = array<i32>} : memref<64x256xf32, #tpu.memory_space<vmem>>, vector<8x128xf32>,
    %363 = vector.extract_strided_slice %360 {offsets = [8, 0], sizes = [8, 128], strides = [1, 1]} : vector<16x128xf32> to vector<8x128xf32>
    %c0_139 = arith.constant 0 : index
    %c128_140 = arith.constant 128 : index
    %364 = vector.load %arg17[%c0_139, %c128_140] : memref<64x256xf32, #tpu.memory_space<vmem>>, vector<8x128xf32>
    tpu.vector_store %arg17[%c0_139, %c128_140], %363 {strides = array<i32>} : memref<64x256xf32, #tpu.memory_space<vmem>>, vector<8x128xf32>,
    %c0_141 = arith.constant 0 : index
    %c0_142 = arith.constant 0 : index
    %365 = vector.load %arg17[%c0_141, %c0_142] : memref<64x256xf32, #tpu.memory_space<vmem>>, vector<64x256xf32>
    %c0_143 = arith.constant 0 : index
    %c0_144 = arith.constant 0 : index
    %366 = vector.load %arg9[%c0_143, %c0_144] : memref<256x128xf32, #tpu.memory_space<vmem>>, vector<256x128xf32>
    %cst_145 = arith.constant dense<0.000000e+00> : vector<64x128xf32>
    %367 = tpu.matmul %365, %366, %cst_145 {dimension_numbers = #tpu.dot_dimension_numbers<[1], [0], [0], [1], [0, 0, 1, 1], [], []>} : vector<64x256xf32>, vector<256x128xf32>, vector<64x128xf32> -> vector<64x128xf32>
    %c0_146 = arith.constant 0 : index
    %c0_147 = arith.constant 0 : index
    %368 = vector.load %arg10[%c0_146, %c0_147] : memref<1x128xf32, #tpu.memory_space<vmem>>, vector<1x128xf32>
    %369 = vector.broadcast %368 : vector<1x128xf32> to vector<64x128xf32>
    %370 = arith.addf %367, %369 : vector<64x128xf32>
    %c0_148 = arith.constant 0 : index
    %c0_149 = arith.constant 0 : index
    %371 = vector.load %arg11[%c0_148, %c0_149] : memref<1x128xf32, #tpu.memory_space<vmem>>, vector<1x128xf32>
    %c0_150 = arith.constant 0 : index
    %c0_151 = arith.constant 0 : index
    %372 = vector.load %arg12[%c0_150, %c0_151] : memref<1x128xf32, #tpu.memory_space<vmem>>, vector<1x128xf32>
    %cst_152 = arith.constant dense<0.000000e+00> : vector<64xf32>
    %373 = vector.multi_reduction <add>, %370, %cst_152 [1] : vector<64x128xf32> to vector<64xf32>
    %374 = vector.shape_cast %373 : vector<64xf32> to vector<64x1xf32>
    %cst_153 = arith.constant 1.280000e+02 : f32
    %375 = vector.broadcast %cst_153 : f32 to vector<64x1xf32>
    %376 = arith.divf %374, %375 : vector<64x1xf32>
    %377 = vector.broadcast %376 : vector<64x1xf32> to vector<64x128xf32>
    %378 = arith.subf %370, %377 : vector<64x128xf32>
    %379 = arith.mulf %378, %378 : vector<64x128xf32>
    %cst_154 = arith.constant dense<0.000000e+00> : vector<64xf32>
    %380 = vector.multi_reduction <add>, %379, %cst_154 [1] : vector<64x128xf32> to vector<64xf32>
    %381 = vector.shape_cast %380 : vector<64xf32> to vector<64x1xf32>
    %cst_155 = arith.constant 1.280000e+02 : f32
    %382 = vector.broadcast %cst_155 : f32 to vector<64x1xf32>
    %383 = arith.divf %381, %382 : vector<64x1xf32>
    %384 = vector.broadcast %376 : vector<64x1xf32> to vector<64x128xf32>
    %385 = arith.subf %370, %384 : vector<64x128xf32>
    %cst_156 = arith.constant 9.99999974E-6 : f32
    %386 = vector.broadcast %cst_156 : f32 to vector<64x1xf32>
    %387 = arith.addf %383, %386 : vector<64x1xf32>
    %388 = math.rsqrt %387 : vector<64x1xf32>
    %389 = vector.broadcast %388 : vector<64x1xf32> to vector<64x128xf32>
    %390 = arith.mulf %385, %389 : vector<64x128xf32>
    %391 = vector.broadcast %371 : vector<1x128xf32> to vector<64x128xf32>
    %392 = arith.mulf %390, %391 : vector<64x128xf32>
    %393 = vector.broadcast %372 : vector<1x128xf32> to vector<64x128xf32>
    %394 = arith.addf %392, %393 : vector<64x128xf32>
    %cst_157 = arith.constant 0.000000e+00 : f32
    %395 = vector.broadcast %cst_157 : f32 to vector<64x128xf32>
    %396 = arith.maximumf %394, %395 : vector<64x128xf32>
    %c0_158 = arith.constant 0 : index
    %c0_159 = arith.constant 0 : index
    %397 = vector.load %arg13[%c0_158, %c0_159] : memref<128x128xf32, #tpu.memory_space<vmem>>, vector<128x128xf32>
    %cst_160 = arith.constant dense<0.000000e+00> : vector<64x128xf32>
    %398 = tpu.matmul %396, %397, %cst_160 {dimension_numbers = #tpu.dot_dimension_numbers<[1], [0], [0], [1], [0, 0, 1, 1], [], []>} : vector<64x128xf32>, vector<128x128xf32>, vector<64x128xf32> -> vector<64x128xf32>
    %c0_161 = arith.constant 0 : index
    %c0_162 = arith.constant 0 : index
    %399 = vector.load %arg14[%c0_161, %c0_162] : memref<1x128xf32, #tpu.memory_space<vmem>>, vector<1x128xf32>
    %400 = vector.broadcast %399 : vector<1x128xf32> to vector<64x128xf32>
    %401 = arith.addf %398, %400 : vector<64x128xf32>
    %c0_163 = arith.constant 0 : index
    %c0_164 = arith.constant 0 : index
    %402 = vector.load %arg15[%c0_163, %c0_164] : memref<64x128xf32, #tpu.memory_space<vmem>>, vector<64x128xf32>
    tpu.vector_store %arg15[%c0_163, %c0_164], %401 {strides = array<i32>} : memref<64x128xf32, #tpu.memory_space<vmem>>, vector<64x128xf32>,
    return
  }
}

</mosaic_0001>

<llo_original>
// kernel: sleep_rnn_forward.1
$region0: #{sleep_rnn_forward.1}
  #allocation0 [shape = 'u32[]', space=smem, size = 0x4, offset = 0x4, fixed_abs, tag = 'smem constant byte address 0x4 - core index']
  #allocation1 [shape = 'u32[144,128]{1,0:T(1,128)}', space=vmem, size = 0x12000, scoped, tag = 'internal scratch']
  #allocation2 [shape = 'f32[64,768]{1,0:T(8,128)}', space=vmem, size = 0x30000, scoped, tag = 'scratch operand']
  #allocation3 [shape = 'f32[64,256]{1,0:T(8,128)}', space=vmem, size = 0x10000, scoped, tag = 'scratch operand']
  %s0 = inlined_call_operand.vmem [shape: f32[64,12], index: 0, kind: input, shape index: {}]
  %s1 = inlined_call_operand.vmem [shape: f32[12,64], index: 1, kind: input, shape index: {}]
  %s2 = inlined_call_operand.vmem [shape: f32[1,64], index: 2, kind: input, shape index: {}]
  %s3 = inlined_call_operand.hbm [shape: f32[1,64], index: 3, kind: input, shape index: {}]
  %s4 = inlined_call_operand.hbm [shape: f32[1,64], index: 4, kind: input, shape index: {}]
  %s5 = inlined_call_operand.hbm [shape: f32[64,768], index: 5, kind: input, shape index: {}]
  %s6 = inlined_call_operand.hbm [shape: f32[1,768], index: 6, kind: input, shape index: {}]
  %s7 = inlined_call_operand.hbm [shape: f32[128,768], index: 7, kind: input, shape index: {}]
  %s8 = inlined_call_operand.hbm [shape: f32[1,768], index: 8, kind: input, shape index: {}]
  %s9 = inlined_call_operand.hbm [shape: f32[256,128], index: 9, kind: input, shape index: {}]
  %s10 = inlined_call_operand.hbm [shape: f32[1,128], index: 10, kind: input, shape index: {}]
  %s11 = inlined_call_operand.hbm [shape: f32[1,128], index: 11, kind: input, shape index: {}]
  %s12 = inlined_call_operand.hbm [shape: f32[1,128], index: 12, kind: input, shape index: {}]
  %s13 = inlined_call_operand.vmem [shape: f32[128,128], index: 13, kind: input, shape index: {}]
  %s14 = inlined_call_operand.hbm [shape: f32[1,128], index: 14, kind: input, shape index: {}]
  %s15 = inlined_call_operand.vmem [shape: f32[64,128], index: 15, kind: output, shape index: {}]
  %s16 = sld [smem:[#allocation0]]
  $region114: #{sleep_rnn_forward.1} parent=0
    _
  %s18 = ssub.s32 1, %s16
  %s19 = scalar_select 0, %s18, %s16
  $region1: #{sleep_rnn_forward.1} parent=0
    #allocation4 [shape = 'u8[512]{0}', space=vmem, size = 0x400, scoped, tag = 'input window, operand 3, single buffered']
    #allocation5 [shape = 's32[1]{0}', space=sflag, size = 0x4, scoped, tag = 'scoped memory for sleep_rnn_forward.1']
    #allocation6 [shape = 'u8[512]{0}', space=vmem, size = 0x400, scoped, tag = 'input window, operand 4, single buffered']
    #allocation7 [shape = 's32[1]{0}', space=sflag, size = 0x4, scoped, tag = 'scoped memory for sleep_rnn_forward.1']
    #allocation8 [shape = 'u8[196608]{0}', space=vmem, size = 0x30000, scoped, tag = 'input window, operand 5, single buffered']
    #allocation9 [shape = 'u8[3072]{0}', space=vmem, size = 0xc00, scoped, tag = 'input window, operand 6, single buffered']
    #allocation10 [shape = 's32[1]{0}', space=sflag, size = 0x4, scoped, tag = 'scoped memory for sleep_rnn_forward.1']
    #allocation11 [shape = 'u8[393216]{0}', space=vmem, size = 0x60000, scoped, tag = 'input window, operand 7, single buffered']
    #allocation12 [shape = 'u8[3072]{0}', space=vmem, size = 0xc00, scoped, tag = 'input window, operand 8, single buffered']
    #allocation13 [shape = 's32[1]{0}', space=sflag, size = 0x4, scoped, tag = 'scoped memory for sleep_rnn_forward.1']
    #allocation14 [shape = 'u8[131072]{0}', space=vmem, size = 0x20000, scoped, tag = 'input window, operand 9, single buffered']
    #allocation15 [shape = 'u8[512]{0}', space=vmem, size = 0x400, scoped, tag = 'input window, operand 10, single buffered']
    #allocation16 [shape = 's32[1]{0}', space=sflag, size = 0x4, scoped, tag = 'scoped memory for sleep_rnn_forward.1']
    #allocation17 [shape = 'u8[512]{0}', space=vmem, size = 0x400, scoped, tag = 'input window, operand 11, single buffered']
    #allocation18 [shape = 'u8[512]{0}', space=vmem, size = 0x400, scoped, tag = 'input window, operand 12, single buffered']
    #allocation19 [shape = 's32[1]{0}', space=sflag, size = 0x4, scoped, tag = 'scoped memory for sleep_rnn_forward.1']
    #allocation20 [shape = 'u8[512]{0}', space=vmem, size = 0x400, scoped, tag = 'input window, operand 14, single buffered']
    %20 = vsyncpa [#allocation5], 0
    %21 = vsyncpa [#allocation7], 0
    %22 = vsyncpa [#allocation10], 0
    %23 = vsyncpa [#allocation13], 0
    %24 = vsyncpa [#allocation16], 0
    %25 = vsyncpa [#allocation19], 0
    // Predicated region
    $region2: #{sleep_rnn_forward.1} parent=1 // pred_check
      _
    $region3: #{sleep_rnn_forward.1} parent=1 // pred_check_branch
      %27 = sbr.rel (0) target = $region5
    $region4: #{sleep_rnn_forward.1} parent=1 // pred_region
      _
    $region5: #{sleep_rnn_forward.1} parent=1 // pred_fallthru
      _
    // Predicated region
    $region6: #{sleep_rnn_forward.1} parent=1 // pred_check
      _
    $region7: #{sleep_rnn_forward.1} parent=1 // pred_check_branch
      %29 = sbr.rel (0) target = $region9
    $region8: #{sleep_rnn_forward.1} parent=1 // pred_region
      _
    $region9: #{sleep_rnn_forward.1} parent=1 // pred_fallthru
      _
    // Predicated region
    $region10: #{sleep_rnn_forward.1} parent=1 // pred_check
      _
    $region11: #{sleep_rnn_forward.1} parent=1 // pred_check_branch
      %31 = sbr.rel (0) target = $region13
    $region12: #{sleep_rnn_forward.1} parent=1 // pred_region
      _
    $region13: #{sleep_rnn_forward.1} parent=1 // pred_fallthru
      _
    // Predicated region
    $region14: #{sleep_rnn_forward.1} parent=1 // pred_check
      _
    $region15: #{sleep_rnn_forward.1} parent=1 // pred_check_branch
      %33 = sbr.rel (0) target = $region17
    $region16: #{sleep_rnn_forward.1} parent=1 // pred_region
      %s35 = ssub.s32 16, 16
      %36 = vsyncadd [#allocation5], %s35
      %s38 = sshll.u32 [#allocation4], 4
      %s39 = int_to_ptr.vmem [resolvable:$true] %s38
      %41 = dma.hbm_to_vmem [thread:$0]  %s3, 16, %s39, [#allocation5]
    $region17: #{sleep_rnn_forward.1} parent=1 // pred_fallthru
      _
    // Predicated region
    $region18: #{sleep_rnn_forward.1} parent=1 // pred_check
      _
    $region19: #{sleep_rnn_forward.1} parent=1 // pred_check_branch
      %43 = sbr.rel (0) target = $region21
    $region20: #{sleep_rnn_forward.1} parent=1 // pred_region
      %s45 = ssub.s32 16, 16
      %46 = vsyncadd [#allocation7], %s45
      %s48 = sshll.u32 [#allocation6], 4
      %s49 = int_to_ptr.vmem [resolvable:$true] %s48
      %51 = dma.hbm_to_vmem [thread:$0]  %s4, 16, %s49, [#allocation7]
    $region21: #{sleep_rnn_forward.1} parent=1 // pred_fallthru
      _
    // Predicated region
    $region22: #{sleep_rnn_forward.1} parent=1 // pred_check
      _
    $region23: #{sleep_rnn_forward.1} parent=1 // pred_check_branch
      %53 = sbr.rel (0) target = $region25
    $region24: #{sleep_rnn_forward.1} parent=1 // pred_region
      %s55 = ssub.s32 6144, 6144
      %56 = vsyncadd [#allocation7], %s55
      %s57 = sshll.u32 [#allocation8], 4
      %s58 = int_to_ptr.vmem [resolvable:$true] %s57
      %63 = dma.hbm_to_vmem [thread:$0]  %s5, 6144, %s58, [#allocation7], 768, 768, 48
    $region25: #{sleep_rnn_forward.1} parent=1 // pred_fallthru
      _
    // Predicated region
    $region26: #{sleep_rnn_forward.1} parent=1 // pred_check
      _
    $region27: #{sleep_rnn_forward.1} parent=1 // pred_check_branch
      %65 = sbr.rel (0) target = $region29
    $region28: #{sleep_rnn_forward.1} parent=1 // pred_region
      %s67 = ssub.s32 96, 96
      %68 = vsyncadd [#allocation10], %s67
      %s70 = sshll.u32 [#allocation9], 4
      %s71 = int_to_ptr.vmem [resolvable:$true] %s70
      %73 = dma.hbm_to_vmem [thread:$0]  %s6, 96, %s71, [#allocation10]
    $region29: #{sleep_rnn_forward.1} parent=1 // pred_fallthru
      _
    // Predicated region
    $region30: #{sleep_rnn_forward.1} parent=1 // pred_check
      _
    $region31: #{sleep_rnn_forward.1} parent=1 // pred_check_branch
      %75 = sbr.rel (0) target = $region33
    $region32: #{sleep_rnn_forward.1} parent=1 // pred_region
      %s77 = ssub.s32 12288, 12288
      %78 = vsyncadd [#allocation10], %s77
      %s79 = sshll.u32 [#allocation11], 4
      %s80 = int_to_ptr.vmem [resolvable:$true] %s79
      %85 = dma.hbm_to_vmem [thread:$0]  %s7, 12288, %s80, [#allocation10], 768, 768, 48
    $region33: #{sleep_rnn_forward.1} parent=1 // pred_fallthru
      _
    // Predicated region
    $region34: #{sleep_rnn_forward.1} parent=1 // pred_check
      _
    $region35: #{sleep_rnn_forward.1} parent=1 // pred_check_branch
      %87 = sbr.rel (0) target = $region37
    $region36: #{sleep_rnn_forward.1} parent=1 // pred_region
      %s89 = ssub.s32 96, 96
      %90 = vsyncadd [#allocation13], %s89
      %s92 = sshll.u32 [#allocation12], 4
      %s93 = int_to_ptr.vmem [resolvable:$true] %s92
      %95 = dma.hbm_to_vmem [thread:$0]  %s8, 96, %s93, [#allocation13]
    $region37: #{sleep_rnn_forward.1} parent=1 // pred_fallthru
      _
    // Predicated region
    $region38: #{sleep_rnn_forward.1} parent=1 // pred_check
      _
    $region39: #{sleep_rnn_forward.1} parent=1 // pred_check_branch
      %97 = sbr.rel (0) target = $region41
    $region40: #{sleep_rnn_forward.1} parent=1 // pred_region
      %s99 = ssub.s32 4096, 4096
      %100 = vsyncadd [#allocation13], %s99
      %s101 = sshll.u32 [#allocation14], 4
      %s102 = int_to_ptr.vmem [resolvable:$true] %s101
      %107 = dma.hbm_to_vmem [thread:$0]  %s9, 4096, %s102, [#allocation13], 128, 128, 8
    $region41: #{sleep_rnn_forward.1} parent=1 // pred_fallthru
      _
    // Predicated region
    $region42: #{sleep_rnn_forward.1} parent=1 // pred_check
      _
    $region43: #{sleep_rnn_forward.1} parent=1 // pred_check_branch
      %109 = sbr.rel (0) target = $region45
    $region44: #{sleep_rnn_forward.1} parent=1 // pred_region
      %s111 = ssub.s32 16, 16
      %112 = vsyncadd [#allocation16], %s111
      %s114 = sshll.u32 [#allocation15], 4
      %s115 = int_to_ptr.vmem [resolvable:$true] %s114
      %117 = dma.hbm_to_vmem [thread:$0]  %s10, 16, %s115, [#allocation16]
    $region45: #{sleep_rnn_forward.1} parent=1 // pred_fallthru
      _
    // Predicated region
    $region46: #{sleep_rnn_forward.1} parent=1 // pred_check
      _
    $region47: #{sleep_rnn_forward.1} parent=1 // pred_check_branch
      %119 = sbr.rel (0) target = $region49
    $region48: #{sleep_rnn_forward.1} parent=1 // pred_region
      %s121 = ssub.s32 16, 16
      %122 = vsyncadd [#allocation16], %s121
      %s124 = sshll.u32 [#allocation17], 4
      %s125 = int_to_ptr.vmem [resolvable:$true] %s124
      %127 = dma.hbm_to_vmem [thread:$0]  %s11, 16, %s125, [#allocation16]
    $region49: #{sleep_rnn_forward.1} parent=1 // pred_fallthru
      _
    // Predicated region
    $region50: #{sleep_rnn_forward.1} parent=1 // pred_check
      _
    $region51: #{sleep_rnn_forward.1} parent=1 // pred_check_branch
      %129 = sbr.rel (0) target = $region53
    $region52: #{sleep_rnn_forward.1} parent=1 // pred_region
      %s131 = ssub.s32 16, 16
      %132 = vsyncadd [#allocation19], %s131
      %s134 = sshll.u32 [#allocation18], 4
      %s135 = int_to_ptr.vmem [resolvable:$true] %s134
      %137 = dma.hbm_to_vmem [thread:$0]  %s12, 16, %s135, [#allocation19]
    $region53: #{sleep_rnn_forward.1} parent=1 // pred_fallthru
      _
    // Predicated region
    $region54: #{sleep_rnn_forward.1} parent=1 // pred_check
      _
    $region55: #{sleep_rnn_forward.1} parent=1 // pred_check_branch
      %139 = sbr.rel (0) target = $region57
    $region56: #{sleep_rnn_forward.1} parent=1 // pred_region
      _
    $region57: #{sleep_rnn_forward.1} parent=1 // pred_fallthru
      _
    // Predicated region
    $region58: #{sleep_rnn_forward.1} parent=1 // pred_check
      _
    $region59: #{sleep_rnn_forward.1} parent=1 // pred_check_branch
      %141 = sbr.rel (0) target = $region61
    $region60: #{sleep_rnn_forward.1} parent=1 // pred_region
      %s143 = ssub.s32 16, 16
      %144 = vsyncadd [#allocation19], %s143
      %s146 = sshll.u32 [#allocation20], 4
      %s147 = int_to_ptr.vmem [resolvable:$true] %s146
      %149 = dma.hbm_to_vmem [thread:$0]  %s14, 16, %s147, [#allocation19]
    $region61: #{sleep_rnn_forward.1} parent=1 // pred_fallthru
      _
    // Predicated region
    $region62: #{sleep_rnn_forward.1} parent=1 // pred_check
      _
    $region63: #{sleep_rnn_forward.1} parent=1 // pred_check_branch
      %151 = sbr.rel (0) target = $region65
    $region64: #{sleep_rnn_forward.1} parent=1 // pred_region
      %152 = dma.done [#allocation5], 16
    $region65: #{sleep_rnn_forward.1} parent=1 // pred_fallthru
      _
    // Predicated region
    $region66: #{sleep_rnn_forward.1} parent=1 // pred_check
      _
    $region67: #{sleep_rnn_forward.1} parent=1 // pred_check_branch
      %154 = sbr.rel (0) target = $region69
    $region68: #{sleep_rnn_forward.1} parent=1 // pred_region
      %155 = dma.done [#allocation7], 16
    $region69: #{sleep_rnn_forward.1} parent=1 // pred_fallthru
      _
    // Predicated region
    $region70: #{sleep_rnn_forward.1} parent=1 // pred_check
      _
    $region71: #{sleep_rnn_forward.1} parent=1 // pred_check_branch
      %157 = sbr.rel (0) target = $region73
    $region72: #{sleep_rnn_forward.1} parent=1 // pred_region
      %158 = dma.done [#allocation7], 6144
    $region73: #{sleep_rnn_forward.1} parent=1 // pred_fallthru
      _
    // Predicated region
    $region74: #{sleep_rnn_forward.1} parent=1 // pred_check
      _
    $region75: #{sleep_rnn_forward.1} parent=1 // pred_check_branch
      %160 = sbr.rel (0) target = $region77
    $region76: #{sleep_rnn_forward.1} parent=1 // pred_region
      %161 = dma.done [#allocation10], 96
    $region77: #{sleep_rnn_forward.1} parent=1 // pred_fallthru
      _
    // Predicated region
    $region78: #{sleep_rnn_forward.1} parent=1 // pred_check
      _
    $region79: #{sleep_rnn_forward.1} parent=1 // pred_check_branch
      %163 = sbr.rel (0) target = $region81
    $region80: #{sleep_rnn_forward.1} parent=1 // pred_region
      %164 = dma.done [#allocation10], 12288
    $region81: #{sleep_rnn_forward.1} parent=1 // pred_fallthru
      _
    // Predicated region
    $region82: #{sleep_rnn_forward.1} parent=1 // pred_check
      _
    $region83: #{sleep_rnn_forward.1} parent=1 // pred_check_branch
      %166 = sbr.rel (0) target = $region85
    $region84: #{sleep_rnn_forward.1} parent=1 // pred_region
      %167 = dma.done [#allocation13], 96
    $region85: #{sleep_rnn_forward.1} parent=1 // pred_fallthru
      _
    // Predicated region
    $region86: #{sleep_rnn_forward.1} parent=1 // pred_check
      _
    $region87: #{sleep_rnn_forward.1} parent=1 // pred_check_branch
      %169 = sbr.rel (0) target = $region89
    $region88: #{sleep_rnn_forward.1} parent=1 // pred_region
      %170 = dma.done [#allocation13], 4096
    $region89: #{sleep_rnn_forward.1} parent=1 // pred_fallthru
      _
    // Predicated region
    $region90: #{sleep_rnn_forward.1} parent=1 // pred_check
      _
    $region91: #{sleep_rnn_forward.1} parent=1 // pred_check_branch
      %172 = sbr.rel (0) target = $region93
    $region92: #{sleep_rnn_forward.1} parent=1 // pred_region
      %173 = dma.done [#allocation16], 16
    $region93: #{sleep_rnn_forward.1} parent=1 // pred_fallthru
      _
    // Predicated region
    $region94: #{sleep_rnn_forward.1} parent=1 // pred_check
      _
    $region95: #{sleep_rnn_forward.1} parent=1 // pred_check_branch
      %175 = sbr.rel (0) target = $region97
    $region96: #{sleep_rnn_forward.1} parent=1 // pred_region
      %176 = dma.done [#allocation16], 16
    $region97: #{sleep_rnn_forward.1} parent=1 // pred_fallthru
      _
    // Predicated region
    $region98: #{sleep_rnn_forward.1} parent=1 // pred_check
      _
    $region99: #{sleep_rnn_forward.1} parent=1 // pred_check_branch
      %178 = sbr.rel (0) target = $region101
    $region100: #{sleep_rnn_forward.1} parent=1 // pred_region
      %179 = dma.done [#allocation19], 16
    $region101: #{sleep_rnn_forward.1} parent=1 // pred_fallthru
      _
    // Predicated region
    $region102: #{sleep_rnn_forward.1} parent=1 // pred_check
      _
    $region103: #{sleep_rnn_forward.1} parent=1 // pred_check_branch
      %181 = sbr.rel (0) target = $region105
    $region104: #{sleep_rnn_forward.1} parent=1 // pred_region
      %182 = dma.done [#allocation19], 16
    $region105: #{sleep_rnn_forward.1} parent=1 // pred_fallthru
      _
    %v183 = vld [vmem:[%s0] sm:$0xff]
    %v184 = vld [vmem:[%s0 + $0x8] sm:$0xff]
    %v185 = vld [vmem:[%s0 + $0x10] sm:$0xff]
    %v186 = vld [vmem:[%s0 + $0x18] sm:$0xff]
    %v187 = vld [vmem:[%s0 + $0x20] sm:$0xff]
    %v188 = vld [vmem:[%s0 + $0x28] sm:$0xff]
    %v189 = vld [vmem:[%s0 + $0x30] sm:$0xff]
    %v190 = vld [vmem:[%s0 + $0x38] sm:$0xff]
    %v191 = vld [vmem:[%s1] sm:$0xff]
    %v192 = vld [vmem:[%s1 + $0x8] sm:$0xf]
    %v193 = vld [vmem:[%s2] sm:$0x1]
    %v195 = vlaneseq
    %v196 = vshrl.u32 %v195, 7
    %v197 = vsub.s32 0, %v196
    %v198 = vrot.slane %v193, %v197
    %vm200 = vcmask 97280
    %v202 = vsel %vm200, %v183, 0
    %v205 = vsel %vm200, %v184, 0
    %v208 = vsel %vm200, %v185, 0
    %v211 = vsel %vm200, %v186, 0
    %v214 = vsel %vm200, %v187, 0
    %v217 = vsel %vm200, %v188, 0
    %v220 = vsel %vm200, %v189, 0
    %v223 = vsel %vm200, %v190, 0
    %vm225 = vcmask 1043456
    %v227 = vsel %vm225, %v192, 0
    %229 = vmatprep.subr.mxu0 0.0
    %230 = vmatpush1.msra.mxu0 %v191
    %231 = vmatprep.subr.mxu0 0.0
    %232 = vmatpush1.msra.mxu0 %v227
    %233 = vmatprep.subr.mxu0 0.0
    %234 = vmatpush1.msra.mxu0 0.0
    %235 = vmatprep.subr.mxu0 0.0
    %236 = vmatpush1.msra.mxu0 0.0
    %237 = vmatprep.subr.mxu0 0.0
    %238 = vmatpush1.msra.mxu0 0.0
    %239 = vmatprep.subr.mxu0 0.0
    %240 = vmatpush1.msra.mxu0 0.0
    %241 = vmatprep.subr.mxu0 0.0
    %242 = vmatpush1.msra.mxu0 0.0
    %243 = vmatprep.subr.mxu0 0.0
    %244 = vmatpush1.msra.mxu0 0.0
    %245 = vmatprep.subr.mxu0 0.0
    %246 = vmatpush1.msra.mxu0 0.0
    %247 = vmatprep.subr.mxu0 0.0
    %248 = vmatpush1.msra.mxu0 0.0
    %249 = vmatprep.subr.mxu0 0.0
    %250 = vmatpush1.msra.mxu0 0.0
    %251 = vmatprep.subr.mxu0 0.0
    %252 = vmatpush1.msra.mxu0 0.0
    %253 = vmatprep.subr.mxu0 0.0
    %254 = vmatpush1.msra.mxu0 0.0
    %255 = vmatprep.subr.mxu0 0.0
    %256 = vmatpush1.msra.mxu0 0.0
    %257 = vmatprep.subr.mxu0 0.0
    %258 = vmatpush1.msra.mxu0 0.0
    %259 = vmatprep.subr.mxu0 0.0
    %260 = vmatpush1.msra.mxu0 0.0
    %261 = vmatprep.subr.mxu0 0.0
    %262 = vmatpush1.msra.mxu0 0.0
    %263 = vmatprep.subr.mxu0 0.0
    %264 = vmatpush1.msra.mxu0 0.0
    %265 = vmatprep.subr.mxu0 0.0
    %266 = vmatpush1.msra.mxu0 0.0
    %267 = vmatprep.subr.mxu0 0.0
    %268 = vmatpush1.msra.mxu0 0.0
    %269 = vmatprep.subr.mxu0 0.0
    %270 = vmatpush1.msra.mxu0 0.0
    %271 = vmatprep.subr.mxu0 0.0
    %272 = vmatpush1.msra.mxu0 0.0
    %273 = vmatprep.subr.mxu0 0.0
    %274 = vmatpush1.msra.mxu0 0.0
    %275 = vmatprep.subr.mxu0 0.0
    %276 = vmatpush1.msra.mxu0 0.0
    %277 = vmatprep.subr.mxu0 0.0
    %278 = vmatpush1.msra.mxu0 0.0
    %279 = vmatprep.subr.mxu0 0.0
    %280 = vmatpush1.msra.mxu0 0.0
    %281 = vmatprep.subr.mxu0 0.0
    %282 = vmatpush1.msra.mxu0 0.0
    %283 = vmatprep.subr.mxu0 0.0
    %284 = vmatpush1.msra.mxu0 0.0
    %285 = vmatprep.subr.mxu0 0.0
    %286 = vmatpush1.msra.mxu0 0.0
    %287 = vmatprep.subr.mxu0 0.0
    %288 = vmatpush1.msra.mxu0 0.0
    %289 = vmatprep.subr.mxu0 0.0
    %290 = vmatpush1.msra.mxu0 0.0
    %291 = vmatprep.subr.mxu0 0.0
    %292 = vmatpush1.msra.mxu0 0.0
    %293 = vmatprep.mubr.f32.mxu0 0.0
    %294 = vmatmul.mubr.f32.gmra.mrb[0].mxu0 %v202
    %v295 = vpop.f32.mrb[0].mxu0
    %v296 = vadd.f32 %v198, %v295
    %v297 = vpop.f32.mrb[0].mxu0
    %298 = vmatprep.mubr.f32.mxu0 0.0
    %299 = vmatmul.mubr.f32.gmra.mrb[0].mxu0 %v205
    %v300 = vpop.f32.mrb[0].mxu0
    %v301 = vadd.f32 %v198, %v300
    %v302 = vpop.f32.mrb[0].mxu0
    %303 = vmatprep.mubr.f32.mxu0 0.0
    %304 = vmatmul.mubr.f32.gmra.mrb[0].mxu0 %v208
    %v305 = vpop.f32.mrb[0].mxu0
    %v306 = vadd.f32 %v198, %v305
    %v307 = vpop.f32.mrb[0].mxu0
    %308 = vmatprep.mubr.f32.mxu0 0.0
    %309 = vmatmul.mubr.f32.gmra.mrb[0].mxu0 %v211
    %v310 = vpop.f32.mrb[0].mxu0
    %v311 = vadd.f32 %v198, %v310
    %v312 = vpop.f32.mrb[0].mxu0
    %313 = vmatprep.mubr.f32.mxu0 0.0
    %314 = vmatmul.mubr.f32.gmra.mrb[0].mxu0 %v214
    %v315 = vpop.f32.mrb[0].mxu0
    %v316 = vadd.f32 %v198, %v315
    %v317 = vpop.f32.mrb[0].mxu0
    %318 = vmatprep.mubr.f32.mxu0 0.0
    %319 = vmatmul.mubr.f32.gmra.mrb[0].mxu0 %v217
    %v320 = vpop.f32.mrb[0].mxu0
    %v321 = vadd.f32 %v198, %v320
    %v322 = vpop.f32.mrb[0].mxu0
    %323 = vmatprep.mubr.f32.mxu0 0.0
    %324 = vmatmul.mubr.f32.gmra.mrb[0].mxu0 %v220
    %v325 = vpop.f32.mrb[0].mxu0
    %v326 = vadd.f32 %v198, %v325
    %v327 = vpop.f32.mrb[0].mxu0
    %328 = vmatprep.mubr.f32.mxu0 0.0
    %329 = vmatmul.mubr.f32.gmra.mrb[0].mxu0 %v223
    %v330 = vpop.f32.mrb[0].mxu0
    %v331 = vadd.f32 %v198, %v330
    %v332 = vpop.f32.mrb[0].mxu0
    %333 = vdwg.mxu0
    %v334 = vld [vmem:[#allocation4] sm:$0x1]
    %v335 = vld [vmem:[#allocation6] sm:$0x1]
    %vm336 = vcmask 523264
    %v337 = vsel %vm336, %v296, 0.0
    %338 = vadd.xlane.f32.xlu0 %v337
    %v339 = vpop.xlane.xlu0 %338
    %v340 = vsel %vm336, %v301, 0.0
    %341 = vadd.xlane.f32.xlu0 %v340
    %v342 = vpop.xlane.xlu0 %341
    %v343 = vsel %vm336, %v306, 0.0
    %344 = vadd.xlane.f32.xlu0 %v343
    %v345 = vpop.xlane.xlu0 %344
    %v346 = vsel %vm336, %v311, 0.0
    %347 = vadd.xlane.f32.xlu0 %v346
    %v348 = vpop.xlane.xlu0 %347
    %v349 = vsel %vm336, %v316, 0.0
    %350 = vadd.xlane.f32.xlu0 %v349
    %v351 = vpop.xlane.xlu0 %350
    %v352 = vsel %vm336, %v321, 0.0
    %353 = vadd.xlane.f32.xlu0 %v352
    %v354 = vpop.xlane.xlu0 %353
    %v355 = vsel %vm336, %v326, 0.0
    %356 = vadd.xlane.f32.xlu0 %v355
    %v357 = vpop.xlane.xlu0 %356
    %v358 = vsel %vm336, %v331, 0.0
    %359 = vadd.xlane.f32.xlu0 %v358
    %v360 = vpop.xlane.xlu0 %359
    %v361 = vrcp.pop 64.0
    %v362 = vmul.f32 %v339, %v361
    %v363 = vmul.f32 %v342, %v361
    %v364 = vmul.f32 %v345, %v361
    %v365 = vmul.f32 %v348, %v361
    %v366 = vmul.f32 %v351, %v361
    %v367 = vmul.f32 %v354, %v361
    %v368 = vmul.f32 %v357, %v361
    %v369 = vmul.f32 %v360, %v361
    %v370 = vsub.f32 %v296, %v362
    %v371 = vsub.f32 %v301, %v363
    %v372 = vsub.f32 %v306, %v364
    %v373 = vsub.f32 %v311, %v365
    %v374 = vsub.f32 %v316, %v366
    %v375 = vsub.f32 %v321, %v367
    %v376 = vsub.f32 %v326, %v368
    %v377 = vsub.f32 %v331, %v369
    %v378 = vmul.f32 %v370, %v370
    %v379 = vmul.f32 %v371, %v371
    %v380 = vmul.f32 %v372, %v372
    %v381 = vmul.f32 %v373, %v373
    %v382 = vmul.f32 %v374, %v374
    %v383 = vmul.f32 %v375, %v375
    %v384 = vmul.f32 %v376, %v376
    %v385 = vmul.f32 %v377, %v377
    %v386 = vsel %vm336, %v378, 0.0
    %387 = vadd.xlane.f32.xlu0 %v386
    %v388 = vpop.xlane.xlu0 %387
    %v389 = vsel %vm336, %v379, 0.0
    %390 = vadd.xlane.f32.xlu0 %v389
    %v391 = vpop.xlane.xlu0 %390
    %v392 = vsel %vm336, %v380, 0.0
    %393 = vadd.xlane.f32.xlu0 %v392
    %v394 = vpop.xlane.xlu0 %393
    %v395 = vsel %vm336, %v381, 0.0
    %396 = vadd.xlane.f32.xlu0 %v395
    %v397 = vpop.xlane.xlu0 %396
    %v398 = vsel %vm336, %v382, 0.0
    %399 = vadd.xlane.f32.xlu0 %v398
    %v400 = vpop.xlane.xlu0 %399
    %v401 = vsel %vm336, %v383, 0.0
    %402 = vadd.xlane.f32.xlu0 %v401
    %v403 = vpop.xlane.xlu0 %402
    %v404 = vsel %vm336, %v384, 0.0
    %405 = vadd.xlane.f32.xlu0 %v404
    %v406 = vpop.xlane.xlu0 %405
    %v407 = vsel %vm336, %v385, 0.0
    %408 = vadd.xlane.f32.xlu0 %v407
    %v409 = vpop.xlane.xlu0 %408
    %v410 = vmul.f32 %v388, %v361
    %v411 = vmul.f32 %v391, %v361
    %v412 = vmul.f32 %v394, %v361
    %v413 = vmul.f32 %v397, %v361
    %v414 = vmul.f32 %v400, %v361
    %v415 = vmul.f32 %v403, %v361
    %v416 = vmul.f32 %v406, %v361
    %v417 = vmul.f32 %v409, %v361
    %v418 = vadd.f32 %v410, 1e-05
    %v419 = vadd.f32 %v411, 1e-05
    %v420 = vadd.f32 %v412, 1e-05
    %v421 = vadd.f32 %v413, 1e-05
    %v422 = vadd.f32 %v414, 1e-05
    %v423 = vadd.f32 %v415, 1e-05
    %v424 = vadd.f32 %v416, 1e-05
    %v425 = vadd.f32 %v417, 1e-05
    %v426 = vrsqrt.pop %v418
    %v427 = vrsqrt.pop %v419
    %v428 = vrsqrt.pop %v420
    %v429 = vrsqrt.pop %v421
    %v430 = vrsqrt.pop %v422
    %v431 = vrsqrt.pop %v423
    %v432 = vrsqrt.pop %v424
    %v433 = vrsqrt.pop %v425
    %v434 = vmul.f32 %v370, %v426
    %v435 = vmul.f32 %v371, %v427
    %v436 = vmul.f32 %v372, %v428
    %v437 = vmul.f32 %v373, %v429
    %v438 = vmul.f32 %v374, %v430
    %v439 = vmul.f32 %v375, %v431
    %v440 = vmul.f32 %v376, %v432
    %v441 = vmul.f32 %v377, %v433
    %v443 = vlaneseq
    %v444 = vshrl.u32 %v443, 7
    %v445 = vsub.s32 0, %v444
    %v446 = vrot.slane %v334, %v445
    %v448 = vmul.f32 %v434, %v446
    %v449 = vmul.f32 %v435, %v446
    %v450 = vmul.f32 %v436, %v446
    %v451 = vmul.f32 %v437, %v446
    %v452 = vmul.f32 %v438, %v446
    %v453 = vmul.f32 %v439, %v446
    %v454 = vmul.f32 %v440, %v446
    %v455 = vmul.f32 %v441, %v446
    %v457 = vlaneseq
    %v458 = vshrl.u32 %v457, 7
    %v459 = vsub.s32 0, %v458
    %v460 = vrot.slane %v335, %v459
    %v462 = vadd.f32 %v448, %v460
    %v463 = vadd.f32 %v449, %v460
    %v464 = vadd.f32 %v450, %v460
    %v465 = vadd.f32 %v451, %v460
    %v466 = vadd.f32 %v452, %v460
    %v467 = vadd.f32 %v453, %v460
    %v468 = vadd.f32 %v454, %v460
    %v469 = vadd.f32 %v455, %v460
    %v470 = vld [vmem:[#allocation8] sm:$0xff]
    %v471 = vld [vmem:[#allocation8 + $0x8] sm:$0xff]
    %v472 = vld [vmem:[#allocation8 + $0x10] sm:$0xff]
    %v473 = vld [vmem:[#allocation8 + $0x18] sm:$0xff]
    %v474 = vld [vmem:[#allocation8 + $0x20] sm:$0xff]
    %v475 = vld [vmem:[#allocation8 + $0x28] sm:$0xff]
    %v476 = vld [vmem:[#allocation8 + $0x30] sm:$0xff]
    %v477 = vld [vmem:[#allocation8 + $0x38] sm:$0xff]
    %v478 = vld [vmem:[#allocation8 + $0x40] sm:$0xff]
    %v479 = vld [vmem:[#allocation8 + $0x48] sm:$0xff]
    %v480 = vld [vmem:[#allocation8 + $0x50] sm:$0xff]
    %v481 = vld [vmem:[#allocation8 + $0x58] sm:$0xff]
    %v482 = vld [vmem:[#allocation8 + $0x60] sm:$0xff]
    %v483 = vld [vmem:[#allocation8 + $0x68] sm:$0xff]
    %v484 = vld [vmem:[#allocation8 + $0x70] sm:$0xff]
    %v485 = vld [vmem:[#allocation8 + $0x78] sm:$0xff]
    %v486 = vld [vmem:[#allocation8 + $0x80] sm:$0xff]
    %v487 = vld [vmem:[#allocation8 + $0x88] sm:$0xff]
    %v488 = vld [vmem:[#allocation8 + $0x90] sm:$0xff]
    %v489 = vld [vmem:[#allocation8 + $0x98] sm:$0xff]
    %v490 = vld [vmem:[#allocation8 + $0xa0] sm:$0xff]
    %v491 = vld [vmem:[#allocation8 + $0xa8] sm:$0xff]
    %v492 = vld [vmem:[#allocation8 + $0xb0] sm:$0xff]
    %v493 = vld [vmem:[#allocation8 + $0xb8] sm:$0xff]
    %v494 = vld [vmem:[#allocation8 + $0xc0] sm:$0xff]
    %v495 = vld [vmem:[#allocation8 + $0xc8] sm:$0xff]
    %v496 = vld [vmem:[#allocation8 + $0xd0] sm:$0xff]
    %v497 = vld [vmem:[#allocation8 + $0xd8] sm:$0xff]
    %v498 = vld [vmem:[#allocation8 + $0xe0] sm:$0xff]
    %v499 = vld [vmem:[#allocation8 + $0xe8] sm:$0xff]
    %v500 = vld [vmem:[#allocation8 + $0xf0] sm:$0xff]
    %v501 = vld [vmem:[#allocation8 + $0xf8] sm:$0xff]
    %v502 = vld [vmem:[#allocation8 + $0x100] sm:$0xff]
    %v503 = vld [vmem:[#allocation8 + $0x108] sm:$0xff]
    %v504 = vld [vmem:[#allocation8 + $0x110] sm:$0xff]
    %v505 = vld [vmem:[#allocation8 + $0x118] sm:$0xff]
    %v506 = vld [vmem:[#allocation8 + $0x120] sm:$0xff]
    %v507 = vld [vmem:[#allocation8 + $0x128] sm:$0xff]
    %v508 = vld [vmem:[#allocation8 + $0x130] sm:$0xff]
    %v509 = vld [vmem:[#allocation8 + $0x138] sm:$0xff]
    %v510 = vld [vmem:[#allocation8 + $0x140] sm:$0xff]
    %v511 = vld [vmem:[#allocation8 + $0x148] sm:$0xff]
    %v512 = vld [vmem:[#allocation8 + $0x150] sm:$0xff]
    %v513 = vld [vmem:[#allocation8 + $0x158] sm:$0xff]
    %v514 = vld [vmem:[#allocation8 + $0x160] sm:$0xff]
    %v515 = vld [vmem:[#allocation8 + $0x168] sm:$0xff]
    %v516 = vld [vmem:[#allocation8 + $0x170] sm:$0xff]
    %v517 = vld [vmem:[#allocation8 + $0x178] sm:$0xff]
    %v518 = vld [vmem:[#allocation9] sm:$0x3f]
    %v520 = vlaneseq
    %v521 = vshrl.u32 %v520, 7
    %v522 = vsub.s32 0, %v521
    %v523 = vrot.slane %v518, %v522
    %v524 = vlaneseq
    %v525 = vshrl.u32 %v524, 7
    %v526 = vsub.s32 1, %v525
    %v527 = vrot.slane %v518, %v526
    %v528 = vlaneseq
    %v529 = vshrl.u32 %v528, 7
    %v530 = vsub.s32 2, %v529
    %v531 = vrot.slane %v518, %v530
    %v532 = vlaneseq
    %v533 = vshrl.u32 %v532, 7
    %v534 = vsub.s32 3, %v533
    %v535 = vrot.slane %v518, %v534
    %v536 = vlaneseq
    %v537 = vshrl.u32 %v536, 7
    %v538 = vsub.s32 4, %v537
    %v539 = vrot.slane %v518, %v538
    %v540 = vlaneseq
    %v541 = vshrl.u32 %v540, 7
    %v542 = vsub.s32 5, %v541
    %v543 = vrot.slane %v518, %v542
    %v551 = vsel %vm336, %v462, 0
    %v554 = vsel %vm336, %v463, 0
    %v557 = vsel %vm336, %v464, 0
    %v560 = vsel %vm336, %v465, 0
    %v563 = vsel %vm336, %v466, 0
    %v566 = vsel %vm336, %v467, 0
    %v569 = vsel %vm336, %v468, 0
    %v572 = vsel %vm336, %v469, 0
    %574 = vmatprep.subr.mxu0 %v471
    %575 = vmatpush1.msra.mxu0 %v470
    %576 = vmatprep.subr.mxu0 %v477
    %577 = vmatpush1.msra.mxu0 %v476
    %578 = vmatprep.subr.mxu0 %v483
    %579 = vmatpush1.msra.mxu0 %v482
    %580 = vmatprep.subr.mxu0 %v489
    %581 = vmatpush1.msra.mxu0 %v488
    %582 = vmatprep.subr.mxu0 %v495
    %583 = vmatpush1.msra.mxu0 %v494
    %584 = vmatprep.subr.mxu0 %v501
    %585 = vmatpush1.msra.mxu0 %v500
    %586 = vmatprep.subr.mxu0 %v507
    %587 = vmatpush1.msra.mxu0 %v506
    %588 = vmatprep.subr.mxu0 %v513
    %589 = vmatpush1.msra.mxu0 %v512
    %590 = vmatprep.subr.mxu0 0.0
    %591 = vmatpush1.msra.mxu0 0.0
    %592 = vmatprep.subr.mxu0 0.0
    %593 = vmatpush1.msra.mxu0 0.0
    %594 = vmatprep.subr.mxu0 0.0
    %595 = vmatpush1.msra.mxu0 0.0
    %596 = vmatprep.subr.mxu0 0.0
    %597 = vmatpush1.msra.mxu0 0.0
    %598 = vmatprep.subr.mxu0 0.0
    %599 = vmatpush1.msra.mxu0 0.0
    %600 = vmatprep.subr.mxu0 0.0
    %601 = vmatpush1.msra.mxu0 0.0
    %602 = vmatprep.subr.mxu0 0.0
    %603 = vmatpush1.msra.mxu0 0.0
    %604 = vmatprep.subr.mxu0 0.0
    %605 = vmatpush1.msra.mxu0 0.0
    %606 = vmatprep.subr.mxu0 0.0
    %607 = vmatpush1.msra.mxu0 0.0
    %608 = vmatprep.subr.mxu0 0.0
    %609 = vmatpush1.msra.mxu0 0.0
    %610 = vmatprep.subr.mxu0 0.0
    %611 = vmatpush1.msra.mxu0 0.0
    %612 = vmatprep.subr.mxu0 0.0
    %613 = vmatpush1.msra.mxu0 0.0
    %614 = vmatprep.subr.mxu0 0.0
    %615 = vmatpush1.msra.mxu0 0.0
    %616 = vmatprep.subr.mxu0 0.0
    %617 = vmatpush1.msra.mxu0 0.0
    %618 = vmatprep.subr.mxu0 0.0
    %619 = vmatpush1.msra.mxu0 0.0
    %620 = vmatprep.subr.mxu0 0.0
    %621 = vmatpush1.msra.mxu0 0.0
    %622 = vmatprep.subr.mxu0 0.0
    %623 = vmatpush1.msra.mxu0 0.0
    %624 = vmatprep.subr.mxu0 0.0
    %625 = vmatpush1.msra.mxu0 0.0
    %626 = vmatprep.subr.mxu0 0.0
    %627 = vmatpush1.msra.mxu0 0.0
    %628 = vmatprep.subr.mxu0 0.0
    %629 = vmatpush1.msra.mxu0 0.0
    %630 = vmatprep.subr.mxu0 0.0
    %631 = vmatpush1.msra.mxu0 0.0
    %632 = vmatprep.subr.mxu0 0.0
    %633 = vmatpush1.msra.mxu0 0.0
    %634 = vmatprep.subr.mxu0 0.0
    %635 = vmatpush1.msra.mxu0 0.0
    %636 = vmatprep.subr.mxu0 0.0
    %637 = vmatpush1.msra.mxu0 0.0
    %638 = vmatprep.mubr.f32.mxu0 0.0
    %639 = vmatmul.mubr.f32.gmra.mrb[0].mxu0 %v551
    %v640 = vpop.f32.mrb[0].mxu0
    %v641 = vadd.f32 %v523, %v640
    %v642 = vpop.f32.mrb[0].mxu0
    %v643 = vadd.f32 %v527, %v642
    %644 = vmatprep.mubr.f32.mxu0 0.0
    %645 = vmatmul.mubr.f32.gmra.mrb[0].mxu0 %v554
    %v646 = vpop.f32.mrb[0].mxu0
    %v647 = vadd.f32 %v523, %v646
    %v648 = vpop.f32.mrb[0].mxu0
    %v649 = vadd.f32 %v527, %v648
    %650 = vmatprep.mubr.f32.mxu0 0.0
    %651 = vmatmul.mubr.f32.gmra.mrb[0].mxu0 %v557
    %v652 = vpop.f32.mrb[0].mxu0
    %v653 = vadd.f32 %v523, %v652
    %v654 = vpop.f32.mrb[0].mxu0
    %v655 = vadd.f32 %v527, %v654
    %656 = vmatprep.mubr.f32.mxu0 0.0
    %657 = vmatmul.mubr.f32.gmra.mrb[0].mxu0 %v560
    %v658 = vpop.f32.mrb[0].mxu0
    %v659 = vadd.f32 %v523, %v658
    %v660 = vpop.f32.mrb[0].mxu0
    %v661 = vadd.f32 %v527, %v660
    %662 = vmatprep.mubr.f32.mxu0 0.0
    %663 = vmatmul.mubr.f32.gmra.mrb[0].mxu0 %v563
    %v664 = vpop.f32.mrb[0].mxu0
    %v665 = vadd.f32 %v523, %v664
    %v666 = vpop.f32.mrb[0].mxu0
    %v667 = vadd.f32 %v527, %v666
    %668 = vmatprep.mubr.f32.mxu0 0.0
    %669 = vmatmul.mubr.f32.gmra.mrb[0].mxu0 %v566
    %v670 = vpop.f32.mrb[0].mxu0
    %v671 = vadd.f32 %v523, %v670
    %v672 = vpop.f32.mrb[0].mxu0
    %v673 = vadd.f32 %v527, %v672
    %674 = vmatprep.mubr.f32.mxu0 0.0
    %675 = vmatmul.mubr.f32.gmra.mrb[0].mxu0 %v569
    %v676 = vpop.f32.mrb[0].mxu0
    %v677 = vadd.f32 %v523, %v676
    %v678 = vpop.f32.mrb[0].mxu0
    %v679 = vadd.f32 %v527, %v678
    %680 = vmatprep.mubr.f32.mxu0 0.0
    %681 = vmatmul.mubr.f32.gmra.mrb[0].mxu0 %v572
    %v682 = vpop.f32.mrb[0].mxu0
    %v683 = vadd.f32 %v523, %v682
    %v684 = vpop.f32.mrb[0].mxu0
    %v685 = vadd.f32 %v527, %v684
    %686 = vdwg.mxu0
    %687 = vmatprep.subr.mxu0 %v473
    %688 = vmatpush1.msra.mxu0 %v472
    %689 = vmatprep.subr.mxu0 %v479
    %690 = vmatpush1.msra.mxu0 %v478
    %691 = vmatprep.subr.mxu0 %v485
    %692 = vmatpush1.msra.mxu0 %v484
    %693 = vmatprep.subr.mxu0 %v491
    %694 = vmatpush1.msra.mxu0 %v490
    %695 = vmatprep.subr.mxu0 %v497
    %696 = vmatpush1.msra.mxu0 %v496
    %697 = vmatprep.subr.mxu0 %v503
    %698 = vmatpush1.msra.mxu0 %v502
    %699 = vmatprep.subr.mxu0 %v509
    %700 = vmatpush1.msra.mxu0 %v508
    %701 = vmatprep.subr.mxu0 %v515
    %702 = vmatpush1.msra.mxu0 %v514
    %703 = vmatprep.subr.mxu0 0.0
    %704 = vmatpush1.msra.mxu0 0.0
    %705 = vmatprep.subr.mxu0 0.0
    %706 = vmatpush1.msra.mxu0 0.0
    %707 = vmatprep.subr.mxu0 0.0
    %708 = vmatpush1.msra.mxu0 0.0
    %709 = vmatprep.subr.mxu0 0.0
    %710 = vmatpush1.msra.mxu0 0.0
    %711 = vmatprep.subr.mxu0 0.0
    %712 = vmatpush1.msra.mxu0 0.0
    %713 = vmatprep.subr.mxu0 0.0
    %714 = vmatpush1.msra.mxu0 0.0
    %715 = vmatprep.subr.mxu0 0.0
    %716 = vmatpush1.msra.mxu0 0.0
    %717 = vmatprep.subr.mxu0 0.0
    %718 = vmatpush1.msra.mxu0 0.0
    %719 = vmatprep.subr.mxu0 0.0
    %720 = vmatpush1.msra.mxu0 0.0
    %721 = vmatprep.subr.mxu0 0.0
    %722 = vmatpush1.msra.mxu0 0.0
    %723 = vmatprep.subr.mxu0 0.0
    %724 = vmatpush1.msra.mxu0 0.0
    %725 = vmatprep.subr.mxu0 0.0
    %726 = vmatpush1.msra.mxu0 0.0
    %727 = vmatprep.subr.mxu0 0.0
    %728 = vmatpush1.msra.mxu0 0.0
    %729 = vmatprep.subr.mxu0 0.0
    %730 = vmatpush1.msra.mxu0 0.0
    %731 = vmatprep.subr.mxu0 0.0
    %732 = vmatpush1.msra.mxu0 0.0
    %733 = vmatprep.subr.mxu0 0.0
    %734 = vmatpush1.msra.mxu0 0.0
    %735 = vmatprep.subr.mxu0 0.0
    %736 = vmatpush1.msra.mxu0 0.0
    %737 = vmatprep.subr.mxu0 0.0
    %738 = vmatpush1.msra.mxu0 0.0
    %739 = vmatprep.subr.mxu0 0.0
    %740 = vmatpush1.msra.mxu0 0.0
    %741 = vmatprep.subr.mxu0 0.0
    %742 = vmatpush1.msra.mxu0 0.0
    %743 = vmatprep.subr.mxu0 0.0
    %744 = vmatpush1.msra.mxu0 0.0
    %745 = vmatprep.subr.mxu0 0.0
    %746 = vmatpush1.msra.mxu0 0.0
    %747 = vmatprep.subr.mxu0 0.0
    %748 = vmatpush1.msra.mxu0 0.0
    %749 = vmatprep.subr.mxu0 0.0
    %750 = vmatpush1.msra.mxu0 0.0
    %751 = vmatprep.mubr.f32.mxu0 0.0
    %752 = vmatmul.mubr.f32.gmra.mrb[0].mxu0 %v551
    %v753 = vpop.f32.mrb[0].mxu0
    %v754 = vadd.f32 %v531, %v753
    %v755 = vpop.f32.mrb[0].mxu0
    %v756 = vadd.f32 %v535, %v755
    %757 = vmatprep.mubr.f32.mxu0 0.0
    %758 = vmatmul.mubr.f32.gmra.mrb[0].mxu0 %v554
    %v759 = vpop.f32.mrb[0].mxu0
    %v760 = vadd.f32 %v531, %v759
    %v761 = vpop.f32.mrb[0].mxu0
    %v762 = vadd.f32 %v535, %v761
    %763 = vmatprep.mubr.f32.mxu0 0.0
    %764 = vmatmul.mubr.f32.gmra.mrb[0].mxu0 %v557
    %v765 = vpop.f32.mrb[0].mxu0
    %v766 = vadd.f32 %v531, %v765
    %v767 = vpop.f32.mrb[0].mxu0
    %v768 = vadd.f32 %v535, %v767
    %769 = vmatprep.mubr.f32.mxu0 0.0
    %770 = vmatmul.mubr.f32.gmra.mrb[0].mxu0 %v560
    %v771 = vpop.f32.mrb[0].mxu0
    %v772 = vadd.f32 %v531, %v771
    %v773 = vpop.f32.mrb[0].mxu0
    %v774 = vadd.f32 %v535, %v773
    %775 = vmatprep.mubr.f32.mxu0 0.0
    %776 = vmatmul.mubr.f32.gmra.mrb[0].mxu0 %v563
    %v777 = vpop.f32.mrb[0].mxu0
    %v778 = vadd.f32 %v531, %v777
    %v779 = vpop.f32.mrb[0].mxu0
    %v780 = vadd.f32 %v535, %v779
    %781 = vmatprep.mubr.f32.mxu0 0.0
    %782 = vmatmul.mubr.f32.gmra.mrb[0].mxu0 %v566
    %v783 = vpop.f32.mrb[0].mxu0
    %v784 = vadd.f32 %v531, %v783
    %v785 = vpop.f32.mrb[0].mxu0
    %v786 = vadd.f32 %v535, %v785
    %787 = vmatprep.mubr.f32.mxu0 0.0
    %788 = vmatmul.mubr.f32.gmra.mrb[0].mxu0 %v569
    %v789 = vpop.f32.mrb[0].mxu0
    %v790 = vadd.f32 %v531, %v789
    %v791 = vpop.f32.mrb[0].mxu0
    %v792 = vadd.f32 %v535, %v791
    %793 = vmatprep.mubr.f32.mxu0 0.0
    %794 = vmatmul.mubr.f32.gmra.mrb[0].mxu0 %v572
    %v795 = vpop.f32.mrb[0].mxu0
    %v796 = vadd.f32 %v531, %v795
    %v797 = vpop.f32.mrb[0].mxu0
    %v798 = vadd.f32 %v535, %v797
    %799 = vdwg.mxu0
    %800 = vmatprep.subr.mxu0 %v475
    %801 = vmatpush1.msra.mxu0 %v474
    %802 = vmatprep.subr.mxu0 %v481
    %803 = vmatpush1.msra.mxu0 %v480
    %804 = vmatprep.subr.mxu0 %v487
    %805 = vmatpush1.msra.mxu0 %v486
    %806 = vmatprep.subr.mxu0 %v493
    %807 = vmatpush1.msra.mxu0 %v492
    %808 = vmatprep.subr.mxu0 %v499
    %809 = vmatpush1.msra.mxu0 %v498
    %810 = vmatprep.subr.mxu0 %v505
    %811 = vmatpush1.msra.mxu0 %v504
    %812 = vmatprep.subr.mxu0 %v511
    %813 = vmatpush1.msra.mxu0 %v510
    %814 = vmatprep.subr.mxu0 %v517
    %815 = vmatpush1.msra.mxu0 %v516
    %816 = vmatprep.subr.mxu0 0.0
    %817 = vmatpush1.msra.mxu0 0.0
    %818 = vmatprep.subr.mxu0 0.0
    %819 = vmatpush1.msra.mxu0 0.0
    %820 = vmatprep.subr.mxu0 0.0
    %821 = vmatpush1.msra.mxu0 0.0
    %822 = vmatprep.subr.mxu0 0.0
    %823 = vmatpush1.msra.mxu0 0.0
    %824 = vmatprep.subr.mxu0 0.0
    %825 = vmatpush1.msra.mxu0 0.0
    %826 = vmatprep.subr.mxu0 0.0
    %827 = vmatpush1.msra.mxu0 0.0
    %828 = vmatprep.subr.mxu0 0.0
    %829 = vmatpush1.msra.mxu0 0.0
    %830 = vmatprep.subr.mxu0 0.0
    %831 = vmatpush1.msra.mxu0 0.0
    %832 = vmatprep.subr.mxu0 0.0
    %833 = vmatpush1.msra.mxu0 0.0
    %834 = vmatprep.subr.mxu0 0.0
    %835 = vmatpush1.msra.mxu0 0.0
    %836 = vmatprep.subr.mxu0 0.0
    %837 = vmatpush1.msra.mxu0 0.0
    %838 = vmatprep.subr.mxu0 0.0
    %839 = vmatpush1.msra.mxu0 0.0
    %840 = vmatprep.subr.mxu0 0.0
    %841 = vmatpush1.msra.mxu0 0.0
    %842 = vmatprep.subr.mxu0 0.0
    %843 = vmatpush1.msra.mxu0 0.0
    %844 = vmatprep.subr.mxu0 0.0
    %845 = vmatpush1.msra.mxu0 0.0
    %846 = vmatprep.subr.mxu0 0.0
    %847 = vmatpush1.msra.mxu0 0.0
    %848 = vmatprep.subr.mxu0 0.0
    %849 = vmatpush1.msra.mxu0 0.0
    %850 = vmatprep.subr.mxu0 0.0
    %851 = vmatpush1.msra.mxu0 0.0
    %852 = vmatprep.subr.mxu0 0.0
    %853 = vmatpush1.msra.mxu0 0.0
    %854 = vmatprep.subr.mxu0 0.0
    %855 = vmatpush1.msra.mxu0 0.0
    %856 = vmatprep.subr.mxu0 0.0
    %857 = vmatpush1.msra.mxu0 0.0
    %858 = vmatprep.subr.mxu0 0.0
    %859 = vmatpush1.msra.mxu0 0.0
    %860 = vmatprep.subr.mxu0 0.0
    %861 = vmatpush1.msra.mxu0 0.0
    %862 = vmatprep.subr.mxu0 0.0
    %863 = vmatpush1.msra.mxu0 0.0
    %864 = vmatprep.mubr.f32.mxu0 0.0
    %865 = vmatmul.mubr.f32.gmra.mrb[0].mxu0 %v551
    %v866 = vpop.f32.mrb[0].mxu0
    %v867 = vadd.f32 %v539, %v866
    %v868 = vpop.f32.mrb[0].mxu0
    %v869 = vadd.f32 %v543, %v868
    %870 = vmatprep.mubr.f32.mxu0 0.0
    %871 = vmatmul.mubr.f32.gmra.mrb[0].mxu0 %v554
    %v872 = vpop.f32.mrb[0].mxu0
    %v873 = vadd.f32 %v539, %v872
    %v874 = vpop.f32.mrb[0].mxu0
    %v875 = vadd.f32 %v543, %v874
    %876 = vmatprep.mubr.f32.mxu0 0.0
    %877 = vmatmul.mubr.f32.gmra.mrb[0].mxu0 %v557
    %v878 = vpop.f32.mrb[0].mxu0
    %v879 = vadd.f32 %v539, %v878
    %v880 = vpop.f32.mrb[0].mxu0
    %v881 = vadd.f32 %v543, %v880
    %882 = vmatprep.mubr.f32.mxu0 0.0
    %883 = vmatmul.mubr.f32.gmra.mrb[0].mxu0 %v560
    %v884 = vpop.f32.mrb[0].mxu0
    %v885 = vadd.f32 %v539, %v884
    %v886 = vpop.f32.mrb[0].mxu0
    %v887 = vadd.f32 %v543, %v886
    %888 = vmatprep.mubr.f32.mxu0 0.0
    %889 = vmatmul.mubr.f32.gmra.mrb[0].mxu0 %v563
    %v890 = vpop.f32.mrb[0].mxu0
    %v891 = vadd.f32 %v539, %v890
    %v892 = vpop.f32.mrb[0].mxu0
    %v893 = vadd.f32 %v543, %v892
    %894 = vmatprep.mubr.f32.mxu0 0.0
    %895 = vmatmul.mubr.f32.gmra.mrb[0].mxu0 %v566
    %v896 = vpop.f32.mrb[0].mxu0
    %v897 = vadd.f32 %v539, %v896
    %v898 = vpop.f32.mrb[0].mxu0
    %v899 = vadd.f32 %v543, %v898
    %900 = vmatprep.mubr.f32.mxu0 0.0
    %901 = vmatmul.mubr.f32.gmra.mrb[0].mxu0 %v569
    %v902 = vpop.f32.mrb[0].mxu0
    %v903 = vadd.f32 %v539, %v902
    %v904 = vpop.f32.mrb[0].mxu0
    %v905 = vadd.f32 %v543, %v904
    %906 = vmatprep.mubr.f32.mxu0 0.0
    %907 = vmatmul.mubr.f32.gmra.mrb[0].mxu0 %v572
    %v908 = vpop.f32.mrb[0].mxu0
    %v909 = vadd.f32 %v539, %v908
    %v910 = vpop.f32.mrb[0].mxu0
    %v911 = vadd.f32 %v543, %v910
    %912 = vdwg.mxu0
    %913 = vst [vmem:[#allocation2] sm:$0xff] %v641
    %914 = vst [vmem:[#allocation2 + $0x8] sm:$0xff] %v643
    %915 = vst [vmem:[#allocation2 + $0x10] sm:$0xff] %v754
    %916 = vst [vmem:[#allocation2 + $0x18] sm:$0xff] %v756
    %917 = vst [vmem:[#allocation2 + $0x20] sm:$0xff] %v867
    %918 = vst [vmem:[#allocation2 + $0x28] sm:$0xff] %v869
    %919 = vst [vmem:[#allocation2 + $0x30] sm:$0xff] %v647
    %920 = vst [vmem:[#allocation2 + $0x38] sm:$0xff] %v649
    %921 = vst [vmem:[#allocation2 + $0x40] sm:$0xff] %v760
    %922 = vst [vmem:[#allocation2 + $0x48] sm:$0xff] %v762
    %923 = vst [vmem:[#allocation2 + $0x50] sm:$0xff] %v873
    %924 = vst [vmem:[#allocation2 + $0x58] sm:$0xff] %v875
    %925 = vst [vmem:[#allocation2 + $0x60] sm:$0xff] %v653
    %926 = vst [vmem:[#allocation2 + $0x68] sm:$0xff] %v655
    %927 = vst [vmem:[#allocation2 + $0x70] sm:$0xff] %v766
    %928 = vst [vmem:[#allocation2 + $0x78] sm:$0xff] %v768
    %929 = vst [vmem:[#allocation2 + $0x80] sm:$0xff] %v879
    %930 = vst [vmem:[#allocation2 + $0x88] sm:$0xff] %v881
    %931 = vst [vmem:[#allocation2 + $0x90] sm:$0xff] %v659
    %932 = vst [vmem:[#allocation2 + $0x98] sm:$0xff] %v661
    %933 = vst [vmem:[#allocation2 + $0xa0] sm:$0xff] %v772
    %934 = vst [vmem:[#allocation2 + $0xa8] sm:$0xff] %v774
    %935 = vst [vmem:[#allocation2 + $0xb0] sm:$0xff] %v885
    %936 = vst [vmem:[#allocation2 + $0xb8] sm:$0xff] %v887
    %937 = vst [vmem:[#allocation2 + $0xc0] sm:$0xff] %v665
    %938 = vst [vmem:[#allocation2 + $0xc8] sm:$0xff] %v667
    %939 = vst [vmem:[#allocation2 + $0xd0] sm:$0xff] %v778
    %940 = vst [vmem:[#allocation2 + $0xd8] sm:$0xff] %v780
    %941 = vst [vmem:[#allocation2 + $0xe0] sm:$0xff] %v891
    %942 = vst [vmem:[#allocation2 + $0xe8] sm:$0xff] %v893
    %943 = vst [vmem:[#allocation2 + $0xf0] sm:$0xff] %v671
    %944 = vst [vmem:[#allocation2 + $0xf8] sm:$0xff] %v673
    %945 = vst [vmem:[#allocation2 + $0x100] sm:$0xff] %v784
    %946 = vst [vmem:[#allocation2 + $0x108] sm:$0xff] %v786
    %947 = vst [vmem:[#allocation2 + $0x110] sm:$0xff] %v897
    %948 = vst [vmem:[#allocation2 + $0x118] sm:$0xff] %v899
    %949 = vst [vmem:[#allocation2 + $0x120] sm:$0xff] %v677
    %950 = vst [vmem:[#allocation2 + $0x128] sm:$0xff] %v679
    %951 = vst [vmem:[#allocation2 + $0x130] sm:$0xff] %v790
    %952 = vst [vmem:[#allocation2 + $0x138] sm:$0xff] %v792
    %953 = vst [vmem:[#allocation2 + $0x140] sm:$0xff] %v903
    %954 = vst [vmem:[#allocation2 + $0x148] sm:$0xff] %v905
    %955 = vst [vmem:[#allocation2 + $0x150] sm:$0xff] %v683
    %956 = vst [vmem:[#allocation2 + $0x158] sm:$0xff] %v685
    %957 = vst [vmem:[#allocation2 + $0x160] sm:$0xff] %v796
    %958 = vst [vmem:[#allocation2 + $0x168] sm:$0xff] %v798
    %959 = vst [vmem:[#allocation2 + $0x170] sm:$0xff] %v909
    %960 = vst [vmem:[#allocation2 + $0x178] sm:$0xff] %v911
    %v961 = vld [vmem:[#allocation2] sm:$0xff]
    %v962 = vld [vmem:[#allocation2 + $0x8] sm:$0xff]
    %v963 = vld [vmem:[#allocation2 + $0x10] sm:$0xff]
    %v964 = vld [vmem:[#allocation2 + $0x168] sm:$0xff]
    %v965 = vld [vmem:[#allocation2 + $0x170] sm:$0xff]
    %v966 = vld [vmem:[#allocation2 + $0x178] sm:$0xff]
    %v967 = vld [vmem:[#allocation11] sm:$0xff]
    %v968 = vld [vmem:[#allocation11 + $0x8] sm:$0xff]
    %v969 = vld [vmem:[#allocation11 + $0x10] sm:$0xff]
    %v970 = vld [vmem:[#allocation11 + $0x18] sm:$0xff]
    %v971 = vld [vmem:[#allocation11 + $0x20] sm:$0xff]
    %v972 = vld [vmem:[#allocation11 + $0x28] sm:$0xff]
    %v973 = vld [vmem:[#allocation11 + $0x30] sm:$0xff]
    %v974 = vld [vmem:[#allocation11 + $0x38] sm:$0xff]
    %v975 = vld [vmem:[#allocation11 + $0x40] sm:$0xff]
    %v976 = vld [vmem:[#allocation11 + $0x48] sm:$0xff]
    %v977 = vld [vmem:[#allocation11 + $0x50] sm:$0xff]
    %v978 = vld [vmem:[#allocation11 + $0x58] sm:$0xff]
    %v979 = vld [vmem:[#allocation11 + $0x60] sm:$0xff]
    %v980 = vld [vmem:[#allocation11 + $0x68] sm:$0xff]
    %v981 = vld [vmem:[#allocation11 + $0x70] sm:$0xff]
    %v982 = vld [vmem:[#allocation11 + $0x78] sm:$0xff]
    %v983 = vld [vmem:[#allocation11 + $0x80] sm:$0xff]
    %v984 = vld [vmem:[#allocation11 + $0x88] sm:$0xff]
    %v985 = vld [vmem:[#allocation11 + $0x90] sm:$0xff]
    %v986 = vld [vmem:[#allocation11 + $0x98] sm:$0xff]
    %v987 = vld [vmem:[#allocation11 + $0xa0] sm:$0xff]
    %v988 = vld [vmem:[#allocation11 + $0xa8] sm:$0xff]
    %v989 = vld [vmem:[#allocation11 + $0xb0] sm:$0xff]
    %v990 = vld [vmem:[#allocation11 + $0xb8] sm:$0xff]
    %v991 = vld [vmem:[#allocation11 + $0xc0] sm:$0xff]
    %v992 = vld [vmem:[#allocation11 + $0xc8] sm:$0xff]
    %v993 = vld [vmem:[#allocation11 + $0xd0] sm:$0xff]
    %v994 = vld [vmem:[#allocation11 + $0xd8] sm:$0xff]
    %v995 = vld [vmem:[#allocation11 + $0xe0] sm:$0xff]
    %v996 = vld [vmem:[#allocation11 + $0xe8] sm:$0xff]
    %v997 = vld [vmem:[#allocation11 + $0xf0] sm:$0xff]
    %v998 = vld [vmem:[#allocation11 + $0xf8] sm:$0xff]
    %v999 = vld [vmem:[#allocation11 + $0x100] sm:$0xff]
    %v1000 = vld [vmem:[#allocation11 + $0x108] sm:$0xff]
    %v1001 = vld [vmem:[#allocation11 + $0x110] sm:$0xff]
    %v1002 = vld [vmem:[#allocation11 + $0x118] sm:$0xff]
    %v1003 = vld [vmem:[#allocation11 + $0x120] sm:$0xff]
    %v1004 = vld [vmem:[#allocation11 + $0x128] sm:$0xff]
    %v1005 = vld [vmem:[#allocation11 + $0x130] sm:$0xff]
    %v1006 = vld [vmem:[#allocation11 + $0x138] sm:$0xff]
    %v1007 = vld [vmem:[#allocation11 + $0x140] sm:$0xff]
    %v1008 = vld [vmem:[#allocation11 + $0x148] sm:$0xff]
    %v1009 = vld [vmem:[#allocation11 + $0x150] sm:$0xff]
    %v1010 = vld [vmem:[#allocation11 + $0x158] sm:$0xff]
    %v1011 = vld [vmem:[#allocation11 + $0x160] sm:$0xff]
    %v1012 = vld [vmem:[#allocation11 + $0x168] sm:$0xff]
    %v1013 = vld [vmem:[#allocation11 + $0x170] sm:$0xff]
    %v1014 = vld [vmem:[#allocation11 + $0x178] sm:$0xff]
    %v1015 = vld [vmem:[#allocation11 + $0x180] sm:$0xff]
    %v1016 = vld [vmem:[#allocation11 + $0x188] sm:$0xff]
    %v1017 = vld [vmem:[#allocation11 + $0x190] sm:$0xff]
    %v1018 = vld [vmem:[#allocation11 + $0x198] sm:$0xff]
    %v1019 = vld [vmem:[#allocation11 + $0x1a0] sm:$0xff]
    %v1020 = vld [vmem:[#allocation11 + $0x1a8] sm:$0xff]
    %v1021 = vld [vmem:[#allocation11 + $0x1b0] sm:$0xff]
    %v1022 = vld [vmem:[#allocation11 + $0x1b8] sm:$0xff]
    %v1023 = vld [vmem:[#allocation11 + $0x1c0] sm:$0xff]
    %v1024 = vld [vmem:[#allocation11 + $0x1c8] sm:$0xff]
    %v1025 = vld [vmem:[#allocation11 + $0x1d0] sm:$0xff]
    %v1026 = vld [vmem:[#allocation11 + $0x1d8] sm:$0xff]
    %v1027 = vld [vmem:[#allocation11 + $0x1e0] sm:$0xff]
    %v1028 = vld [vmem:[#allocation11 + $0x1e8] sm:$0xff]
    %v1029 = vld [vmem:[#allocation11 + $0x1f0] sm:$0xff]
    %v1030 = vld [vmem:[#allocation11 + $0x1f8] sm:$0xff]
    %v1031 = vld [vmem:[#allocation11 + $0x200] sm:$0xff]
    %v1032 = vld [vmem:[#allocation11 + $0x208] sm:$0xff]
    %v1033 = vld [vmem:[#allocation11 + $0x210] sm:$0xff]
    %v1034 = vld [vmem:[#allocation11 + $0x218] sm:$0xff]
    %v1035 = vld [vmem:[#allocation11 + $0x220] sm:$0xff]
    %v1036 = vld [vmem:[#allocation11 + $0x228] sm:$0xff]
    %v1037 = vld [vmem:[#allocation11 + $0x230] sm:$0xff]
    %v1038 = vld [vmem:[#allocation11 + $0x238] sm:$0xff]
    %v1039 = vld [vmem:[#allocation11 + $0x240] sm:$0xff]
    %v1040 = vld [vmem:[#allocation11 + $0x248] sm:$0xff]
    %v1041 = vld [vmem:[#allocation11 + $0x250] sm:$0xff]
    %v1042 = vld [vmem:[#allocation11 + $0x258] sm:$0xff]
    %v1043 = vld [vmem:[#allocation11 + $0x260] sm:$0xff]
    %v1044 = vld [vmem:[#allocation11 + $0x268] sm:$0xff]
    %v1045 = vld [vmem:[#allocation11 + $0x270] sm:$0xff]
    %v1046 = vld [vmem:[#allocation11 + $0x278] sm:$0xff]
    %v1047 = vld [vmem:[#allocation11 + $0x280] sm:$0xff]
    %v1048 = vld [vmem:[#allocation11 + $0x288] sm:$0xff]
    %v1049 = vld [vmem:[#allocation11 + $0x290] sm:$0xff]
    %v1050 = vld [vmem:[#allocation11 + $0x298] sm:$0xff]
    %v1051 = vld [vmem:[#allocation11 + $0x2a0] sm:$0xff]
    %v1052 = vld [vmem:[#allocation11 + $0x2a8] sm:$0xff]
    %v1053 = vld [vmem:[#allocation11 + $0x2b0] sm:$0xff]
    %v1054 = vld [vmem:[#allocation11 + $0x2b8] sm:$0xff]
    %v1055 = vld [vmem:[#allocation11 + $0x2c0] sm:$0xff]
    %v1056 = vld [vmem:[#allocation11 + $0x2c8] sm:$0xff]
    %v1057 = vld [vmem:[#allocation11 + $0x2d0] sm:$0xff]
    %v1058 = vld [vmem:[#allocation11 + $0x2d8] sm:$0xff]
    %v1059 = vld [vmem:[#allocation11 + $0x2e0] sm:$0xff]
    %v1060 = vld [vmem:[#allocation11 + $0x2e8] sm:$0xff]
    %v1061 = vld [vmem:[#allocation11 + $0x2f0] sm:$0xff]
    %v1062 = vld [vmem:[#allocation11 + $0x2f8] sm:$0xff]
    %v1063 = vld [vmem:[#allocation12] sm:$0x3f]
    %v1065 = vlaneseq
    %v1066 = vshrl.u32 %v1065, 7
    %v1067 = vsub.s32 0, %v1066
    %v1068 = vrot.slane %v1063, %v1067
    %v1069 = vlaneseq
    %v1070 = vshrl.u32 %v1069, 7
    %v1071 = vsub.s32 1, %v1070
    %v1072 = vrot.slane %v1063, %v1071
    %v1073 = vlaneseq
    %v1074 = vshrl.u32 %v1073, 7
    %v1075 = vsub.s32 2, %v1074
    %v1076 = vrot.slane %v1063, %v1075
    %v1077 = vlaneseq
    %v1078 = vshrl.u32 %v1077, 7
    %v1079 = vsub.s32 3, %v1078
    %v1080 = vrot.slane %v1063, %v1079
    %v1081 = vlaneseq
    %v1082 = vshrl.u32 %v1081, 7
    %v1083 = vsub.s32 4, %v1082
    %v1084 = vrot.slane %v1063, %v1083
    %v1085 = vlaneseq
    %v1086 = vshrl.u32 %v1085, 7
    %v1087 = vsub.s32 5, %v1086
    %v1088 = vrot.slane %v1063, %v1087
    %1095 = vmatprep.subr.mxu0 %v968
    %1096 = vmatpush1.msra.mxu0 %v967
    %1097 = vmatprep.subr.mxu0 %v974
    %1098 = vmatpush1.msra.mxu0 %v973
    %1099 = vmatprep.subr.mxu0 %v980
    %1100 = vmatpush1.msra.mxu0 %v979
    %1101 = vmatprep.subr.mxu0 %v986
    %1102 = vmatpush1.msra.mxu0 %v985
    %1103 = vmatprep.subr.mxu0 %v992
    %1104 = vmatpush1.msra.mxu0 %v991
    %1105 = vmatprep.subr.mxu0 %v998
    %1106 = vmatpush1.msra.mxu0 %v997
    %1107 = vmatprep.subr.mxu0 %v1004
    %1108 = vmatpush1.msra.mxu0 %v1003
    %1109 = vmatprep.subr.mxu0 %v1010
    %1110 = vmatpush1.msra.mxu0 %v1009
    %1111 = vmatprep.subr.mxu0 %v1016
    %1112 = vmatpush1.msra.mxu0 %v1015
    %1113 = vmatprep.subr.mxu0 %v1022
    %1114 = vmatpush1.msra.mxu0 %v1021
    %1115 = vmatprep.subr.mxu0 %v1028
    %1116 = vmatpush1.msra.mxu0 %v1027
    %1117 = vmatprep.subr.mxu0 %v1034
    %1118 = vmatpush1.msra.mxu0 %v1033
    %1119 = vmatprep.subr.mxu0 %v1040
    %1120 = vmatpush1.msra.mxu0 %v1039
    %1121 = vmatprep.subr.mxu0 %v1046
    %1122 = vmatpush1.msra.mxu0 %v1045
    %1123 = vmatprep.subr.mxu0 %v1052
    %1124 = vmatpush1.msra.mxu0 %v1051
    %1125 = vmatprep.subr.mxu0 %v1058
    %1126 = vmatpush1.msra.mxu0 %v1057
    %1127 = vmatprep.subr.mxu0 0.0
    %1128 = vmatpush1.msra.mxu0 0.0
    %1129 = vmatprep.subr.mxu0 0.0
    %1130 = vmatpush1.msra.mxu0 0.0
    %1131 = vmatprep.subr.mxu0 0.0
    %1132 = vmatpush1.msra.mxu0 0.0
    %1133 = vmatprep.subr.mxu0 0.0
    %1134 = vmatpush1.msra.mxu0 0.0
    %1135 = vmatprep.subr.mxu0 0.0
    %1136 = vmatpush1.msra.mxu0 0.0
    %1137 = vmatprep.subr.mxu0 0.0
    %1138 = vmatpush1.msra.mxu0 0.0
    %1139 = vmatprep.subr.mxu0 0.0
    %1140 = vmatpush1.msra.mxu0 0.0
    %1141 = vmatprep.subr.mxu0 0.0
    %1142 = vmatpush1.msra.mxu0 0.0
    %1143 = vmatprep.subr.mxu0 0.0
    %1144 = vmatpush1.msra.mxu0 0.0
    %1145 = vmatprep.subr.mxu0 0.0
    %1146 = vmatpush1.msra.mxu0 0.0
    %1147 = vmatprep.subr.mxu0 0.0
    %1148 = vmatpush1.msra.mxu0 0.0
    %1149 = vmatprep.subr.mxu0 0.0
    %1150 = vmatpush1.msra.mxu0 0.0
    %1151 = vmatprep.subr.mxu0 0.0
    %1152 = vmatpush1.msra.mxu0 0.0
    %1153 = vmatprep.subr.mxu0 0.0
    %1154 = vmatpush1.msra.mxu0 0.0
    %1155 = vmatprep.subr.mxu0 0.0
    %1156 = vmatpush1.msra.mxu0 0.0
    %1157 = vmatprep.subr.mxu0 0.0
    %1158 = vmatpush1.msra.mxu0 0.0
    %1159 = vmatprep.mubr.f32.mxu0 0.0
    %1160 = vmatmul.mubr.f32.gmra.mrb[0].mxu0 0.0
    %v1161 = vpop.f32.mrb[0].mxu0
    %v1162 = vadd.f32 %v1068, %v1161
    %v1163 = vpop.f32.mrb[0].mxu0
    %v1164 = vadd.f32 %v1072, %v1163
    %1165 = vmatprep.mubr.f32.mxu0 0.0
    %1166 = vmatmul.mubr.f32.gmra.mrb[0].mxu0 0.0
    %v1167 = vpop.f32.mrb[0].mxu0
    %v1168 = vpop.f32.mrb[0].mxu0
    %1169 = vdwg.mxu0
    %1170 = vmatprep.subr.mxu0 %v970
    %1171 = vmatpush1.msra.mxu0 %v969
    %1172 = vmatprep.subr.mxu0 %v976
    %1173 = vmatpush1.msra.mxu0 %v975
    %1174 = vmatprep.subr.mxu0 %v982
    %1175 = vmatpush1.msra.mxu0 %v981
    %1176 = vmatprep.subr.mxu0 %v988
    %1177 = vmatpush1.msra.mxu0 %v987
    %1178 = vmatprep.subr.mxu0 %v994
    %1179 = vmatpush1.msra.mxu0 %v993
    %1180 = vmatprep.subr.mxu0 %v1000
    %1181 = vmatpush1.msra.mxu0 %v999
    %1182 = vmatprep.subr.mxu0 %v1006
    %1183 = vmatpush1.msra.mxu0 %v1005
    %1184 = vmatprep.subr.mxu0 %v1012
    %1185 = vmatpush1.msra.mxu0 %v1011
    %1186 = vmatprep.subr.mxu0 %v1018
    %1187 = vmatpush1.msra.mxu0 %v1017
    %1188 = vmatprep.subr.mxu0 %v1024
    %1189 = vmatpush1.msra.mxu0 %v1023
    %1190 = vmatprep.subr.mxu0 %v1030
    %1191 = vmatpush1.msra.mxu0 %v1029
    %1192 = vmatprep.subr.mxu0 %v1036
    %1193 = vmatpush1.msra.mxu0 %v1035
    %1194 = vmatprep.subr.mxu0 %v1042
    %1195 = vmatpush1.msra.mxu0 %v1041
    %1196 = vmatprep.subr.mxu0 %v1048
    %1197 = vmatpush1.msra.mxu0 %v1047
    %1198 = vmatprep.subr.mxu0 %v1054
    %1199 = vmatpush1.msra.mxu0 %v1053
    %1200 = vmatprep.subr.mxu0 %v1060
    %1201 = vmatpush1.msra.mxu0 %v1059
    %1202 = vmatprep.subr.mxu0 0.0
    %1203 = vmatpush1.msra.mxu0 0.0
    %1204 = vmatprep.subr.mxu0 0.0
    %1205 = vmatpush1.msra.mxu0 0.0
    %1206 = vmatprep.subr.mxu0 0.0
    %1207 = vmatpush1.msra.mxu0 0.0
    %1208 = vmatprep.subr.mxu0 0.0
    %1209 = vmatpush1.msra.mxu0 0.0
    %1210 = vmatprep.subr.mxu0 0.0
    %1211 = vmatpush1.msra.mxu0 0.0
    %1212 = vmatprep.subr.mxu0 0.0
    %1213 = vmatpush1.msra.mxu0 0.0
    %1214 = vmatprep.subr.mxu0 0.0
    %1215 = vmatpush1.msra.mxu0 0.0
    %1216 = vmatprep.subr.mxu0 0.0
    %1217 = vmatpush1.msra.mxu0 0.0
    %1218 = vmatprep.subr.mxu0 0.0
    %1219 = vmatpush1.msra.mxu0 0.0
    %1220 = vmatprep.subr.mxu0 0.0
    %1221 = vmatpush1.msra.mxu0 0.0
    %1222 = vmatprep.subr.mxu0 0.0
    %1223 = vmatpush1.msra.mxu0 0.0
    %1224 = vmatprep.subr.mxu0 0.0
    %1225 = vmatpush1.msra.mxu0 0.0
    %1226 = vmatprep.subr.mxu0 0.0
    %1227 = vmatpush1.msra.mxu0 0.0
    %1228 = vmatprep.subr.mxu0 0.0
    %1229 = vmatpush1.msra.mxu0 0.0
    %1230 = vmatprep.subr.mxu0 0.0
    %1231 = vmatpush1.msra.mxu0 0.0
    %1232 = vmatprep.subr.mxu0 0.0
    %1233 = vmatpush1.msra.mxu0 0.0
    %1234 = vmatprep.mubr.f32.mxu0 0.0
    %1235 = vmatmul.mubr.f32.gmra.mrb[0].mxu0 0.0
    %v1236 = vpop.f32.mrb[0].mxu0
    %v1237 = vadd.f32 %v1076, %v1236
    %v1238 = vpop.f32.mrb[0].mxu0
    %1239 = vmatprep.mubr.f32.mxu0 0.0
    %1240 = vmatmul.mubr.f32.gmra.mrb[0].mxu0 0.0
    %v1241 = vpop.f32.mrb[0].mxu0
    %v1242 = vpop.f32.mrb[0].mxu0
    %v1243 = vadd.f32 %v1080, %v1242
    %1244 = vdwg.mxu0
    %1245 = vmatprep.subr.mxu0 %v972
    %1246 = vmatpush1.msra.mxu0 %v971
    %1247 = vmatprep.subr.mxu0 %v978
    %1248 = vmatpush1.msra.mxu0 %v977
    %1249 = vmatprep.subr.mxu0 %v984
    %1250 = vmatpush1.msra.mxu0 %v983
    %1251 = vmatprep.subr.mxu0 %v990
    %1252 = vmatpush1.msra.mxu0 %v989
    %1253 = vmatprep.subr.mxu0 %v996
    %1254 = vmatpush1.msra.mxu0 %v995
    %1255 = vmatprep.subr.mxu0 %v1002
    %1256 = vmatpush1.msra.mxu0 %v1001
    %1257 = vmatprep.subr.mxu0 %v1008
    %1258 = vmatpush1.msra.mxu0 %v1007
    %1259 = vmatprep.subr.mxu0 %v1014
    %1260 = vmatpush1.msra.mxu0 %v1013
    %1261 = vmatprep.subr.mxu0 %v1020
    %1262 = vmatpush1.msra.mxu0 %v1019
    %1263 = vmatprep.subr.mxu0 %v1026
    %1264 = vmatpush1.msra.mxu0 %v1025
    %1265 = vmatprep.subr.mxu0 %v1032
    %1266 = vmatpush1.msra.mxu0 %v1031
    %1267 = vmatprep.subr.mxu0 %v1038
    %1268 = vmatpush1.msra.mxu0 %v1037
    %1269 = vmatprep.subr.mxu0 %v1044
    %1270 = vmatpush1.msra.mxu0 %v1043
    %1271 = vmatprep.subr.mxu0 %v1050
    %1272 = vmatpush1.msra.mxu0 %v1049
    %1273 = vmatprep.subr.mxu0 %v1056
    %1274 = vmatpush1.msra.mxu0 %v1055
    %1275 = vmatprep.subr.mxu0 %v1062
    %1276 = vmatpush1.msra.mxu0 %v1061
    %1277 = vmatprep.subr.mxu0 0.0
    %1278 = vmatpush1.msra.mxu0 0.0
    %1279 = vmatprep.subr.mxu0 0.0
    %1280 = vmatpush1.msra.mxu0 0.0
    %1281 = vmatprep.subr.mxu0 0.0
    %1282 = vmatpush1.msra.mxu0 0.0
    %1283 = vmatprep.subr.mxu0 0.0
    %1284 = vmatpush1.msra.mxu0 0.0
    %1285 = vmatprep.subr.mxu0 0.0
    %1286 = vmatpush1.msra.mxu0 0.0
    %1287 = vmatprep.subr.mxu0 0.0
    %1288 = vmatpush1.msra.mxu0 0.0
    %1289 = vmatprep.subr.mxu0 0.0
    %1290 = vmatpush1.msra.mxu0 0.0
    %1291 = vmatprep.subr.mxu0 0.0
    %1292 = vmatpush1.msra.mxu0 0.0
    %1293 = vmatprep.subr.mxu0 0.0
    %1294 = vmatpush1.msra.mxu0 0.0
    %1295 = vmatprep.subr.mxu0 0.0
    %1296 = vmatpush1.msra.mxu0 0.0
    %1297 = vmatprep.subr.mxu0 0.0
    %1298 = vmatpush1.msra.mxu0 0.0
    %1299 = vmatprep.subr.mxu0 0.0
    %1300 = vmatpush1.msra.mxu0 0.0
    %1301 = vmatprep.subr.mxu0 0.0
    %1302 = vmatpush1.msra.mxu0 0.0
    %1303 = vmatprep.subr.mxu0 0.0
    %1304 = vmatpush1.msra.mxu0 0.0
    %1305 = vmatprep.subr.mxu0 0.0
    %1306 = vmatpush1.msra.mxu0 0.0
    %1307 = vmatprep.subr.mxu0 0.0
    %1308 = vmatpush1.msra.mxu0 0.0
    %1309 = vmatprep.mubr.f32.mxu0 0.0
    %1310 = vmatmul.mubr.f32.gmra.mrb[0].mxu0 0.0
    %v1311 = vpop.f32.mrb[0].mxu0
    %v1312 = vpop.f32.mrb[0].mxu0
    %1313 = vmatprep.mubr.f32.mxu0 0.0
    %1314 = vmatmul.mubr.f32.gmra.mrb[0].mxu0 0.0
    %v1315 = vpop.f32.mrb[0].mxu0
    %v1316 = vadd.f32 %v1084, %v1315
    %v1317 = vpop.f32.mrb[0].mxu0
    %v1318 = vadd.f32 %v1088, %v1317
    %1319 = vdwg.mxu0
    %v1320 = vadd.f32 %v961, %v1162
    %v1321 = vadd.f32 %v964, %v1243
    %v1322 = vxor.u32 %v1320, 2147483648
    %v1323 = vxor.u32 %v1321, 2147483648
    %v1324 = vmul.f32 %v1322, 1.442695
    %v1325 = vpow.pop %v1324
    %v1326 = vmul.f32 %v1323, 1.442695
    %v1327 = vpow.pop %v1326
    %v1328 = vadd.f32 %v1325, 1.0
    %v1329 = vadd.f32 %v1327, 1.0
    %v1330 = vrcp.pop %v1328
    %v1331 = vmul.f32 1.0, %v1330
    %v1332 = vrcp.pop %v1329
    %v1333 = vmul.f32 1.0, %v1332
    %v1334 = vadd.f32 %v962, %v1164
    %v1335 = vadd.f32 %v965, %v1316
    %v1336 = vxor.u32 %v1334, 2147483648
    %v1337 = vxor.u32 %v1335, 2147483648
    %v1338 = vmul.f32 %v1336, 1.442695
    %v1339 = vpow.pop %v1338
    %v1340 = vmul.f32 %v1337, 1.442695
    %v1341 = vpow.pop %v1340
    %v1342 = vadd.f32 %v1339, 1.0
    %v1343 = vadd.f32 %v1341, 1.0
    %v1344 = vrcp.pop %v1342
    %v1345 = vmul.f32 1.0, %v1344
    %v1346 = vrcp.pop %v1343
    %v1347 = vmul.f32 1.0, %v1346
    %v1348 = vmul.f32 %v1331, %v1237
    %v1349 = vmul.f32 %v1333, %v1318
    %v1350 = vadd.f32 %v963, %v1348
    %v1351 = vadd.f32 %v966, %v1349
    %v1352 = vtanh.pop %v1350
    %v1353 = vtanh.pop %v1351
    %v1354 = vsub.f32 1.0, %v1345
    %v1355 = vsub.f32 1.0, %v1347
    %v1356 = vmul.f32 %v1354, %v1352
    %v1357 = vmul.f32 %v1355, %v1353
    %v1358 = vmul.f32 %v1345, 0.0
    %v1359 = vmul.f32 %v1347, 0.0
    %v1360 = vadd.f32 %v1356, %v1358
    %v1361 = vadd.f32 %v1357, %v1359
    %1362 = vst [vmem:[#allocation3] sm:$0xff] %v1360
    %1363 = vst [vmem:[#allocation3 + $0x78] sm:$0xff] %v1361
    %v1364 = vld [vmem:[#allocation2 + $0x30] sm:$0xff]
    %v1365 = vld [vmem:[#allocation2 + $0x38] sm:$0xff]
    %v1366 = vld [vmem:[#allocation2 + $0x40] sm:$0xff]
    %v1367 = vld [vmem:[#allocation2 + $0x138] sm:$0xff]
    %v1368 = vld [vmem:[#allocation2 + $0x140] sm:$0xff]
    %v1369 = vld [vmem:[#allocation2 + $0x148] sm:$0xff]
    %v1370 = vld [vmem:[#allocation11] sm:$0xff]
    %v1371 = vld [vmem:[#allocation11 + $0x8] sm:$0xff]
    %v1372 = vld [vmem:[#allocation11 + $0x10] sm:$0xff]
    %v1373 = vld [vmem:[#allocation11 + $0x18] sm:$0xff]
    %v1374 = vld [vmem:[#allocation11 + $0x20] sm:$0xff]
    %v1375 = vld [vmem:[#allocation11 + $0x28] sm:$0xff]
    %v1376 = vld [vmem:[#allocation11 + $0x30] sm:$0xff]
    %v1377 = vld [vmem:[#allocation11 + $0x38] sm:$0xff]
    %v1378 = vld [vmem:[#allocation11 + $0x40] sm:$0xff]
    %v1379 = vld [vmem:[#allocation11 + $0x48] sm:$0xff]
    %v1380 = vld [vmem:[#allocation11 + $0x50] sm:$0xff]
    %v1381 = vld [vmem:[#allocation11 + $0x58] sm:$0xff]
    %v1382 = vld [vmem:[#allocation11 + $0x60] sm:$0xff]
    %v1383 = vld [vmem:[#allocation11 + $0x68] sm:$0xff]
    %v1384 = vld [vmem:[#allocation11 + $0x70] sm:$0xff]
    %v1385 = vld [vmem:[#allocation11 + $0x78] sm:$0xff]
    %v1386 = vld [vmem:[#allocation11 + $0x80] sm:$0xff]
    %v1387 = vld [vmem:[#allocation11 + $0x88] sm:$0xff]
    %v1388 = vld [vmem:[#allocation11 + $0x90] sm:$0xff]
    %v1389 = vld [vmem:[#allocation11 + $0x98] sm:$0xff]
    %v1390 = vld [vmem:[#allocation11 + $0xa0] sm:$0xff]
    %v1391 = vld [vmem:[#allocation11 + $0xa8] sm:$0xff]
    %v1392 = vld [vmem:[#allocation11 + $0xb0] sm:$0xff]
    %v1393 = vld [vmem:[#allocation11 + $0xb8] sm:$0xff]
    %v1394 = vld [vmem:[#allocation11 + $0xc0] sm:$0xff]
    %v1395 = vld [vmem:[#allocation11 + $0xc8] sm:$0xff]
    %v1396 = vld [vmem:[#allocation11 + $0xd0] sm:$0xff]
    %v1397 = vld [vmem:[#allocation11 + $0xd8] sm:$0xff]
    %v1398 = vld [vmem:[#allocation11 + $0xe0] sm:$0xff]
    %v1399 = vld [vmem:[#allocation11 + $0xe8] sm:$0xff]
    %v1400 = vld [vmem:[#allocation11 + $0xf0] sm:$0xff]
    %v1401 = vld [vmem:[#allocation11 + $0xf8] sm:$0xff]
    %v1402 = vld [vmem:[#allocation11 + $0x100] sm:$0xff]
    %v1403 = vld [vmem:[#allocation11 + $0x108] sm:$0xff]
    %v1404 = vld [vmem:[#allocation11 + $0x110] sm:$0xff]
    %v1405 = vld [vmem:[#allocation11 + $0x118] sm:$0xff]
    %v1406 = vld [vmem:[#allocation11 + $0x120] sm:$0xff]
    %v1407 = vld [vmem:[#allocation11 + $0x128] sm:$0xff]
    %v1408 = vld [vmem:[#allocation11 + $0x130] sm:$0xff]
    %v1409 = vld [vmem:[#allocation11 + $0x138] sm:$0xff]
    %v1410 = vld [vmem:[#allocation11 + $0x140] sm:$0xff]
    %v1411 = vld [vmem:[#allocation11 + $0x148] sm:$0xff]
    %v1412 = vld [vmem:[#allocation11 + $0x150] sm:$0xff]
    %v1413 = vld [vmem:[#allocation11 + $0x158] sm:$0xff]
    %v1414 = vld [vmem:[#allocation11 + $0x160] sm:$0xff]
    %v1415 = vld [vmem:[#allocation11 + $0x168] sm:$0xff]
    %v1416 = vld [vmem:[#allocation11 + $0x170] sm:$0xff]
    %v1417 = vld [vmem:[#allocation11 + $0x178] sm:$0xff]
    %v1418 = vld [vmem:[#allocation11 + $0x180] sm:$0xff]
    %v1419 = vld [vmem:[#allocation11 + $0x188] sm:$0xff]
    %v1420 = vld [vmem:[#allocation11 + $0x190] sm:$0xff]
    %v1421 = vld [vmem:[#allocation11 + $0x198] sm:$0xff]
    %v1422 = vld [vmem:[#allocation11 + $0x1a0] sm:$0xff]
    %v1423 = vld [vmem:[#allocation11 + $0x1a8] sm:$0xff]
    %v1424 = vld [vmem:[#allocation11 + $0x1b0] sm:$0xff]
    %v1425 = vld [vmem:[#allocation11 + $0x1b8] sm:$0xff]
    %v1426 = vld [vmem:[#allocation11 + $0x1c0] sm:$0xff]
    %v1427 = vld [vmem:[#allocation11 + $0x1c8] sm:$0xff]
    %v1428 = vld [vmem:[#allocation11 + $0x1d0] sm:$0xff]
    %v1429 = vld [vmem:[#allocation11 + $0x1d8] sm:$0xff]
    %v1430 = vld [vmem:[#allocation11 + $0x1e0] sm:$0xff]
    %v1431 = vld [vmem:[#allocation11 + $0x1e8] sm:$0xff]
    %v1432 = vld [vmem:[#allocation11 + $0x1f0] sm:$0xff]
    %v1433 = vld [vmem:[#allocation11 + $0x1f8] sm:$0xff]
    %v1434 = vld [vmem:[#allocation11 + $0x200] sm:$0xff]
    %v1435 = vld [vmem:[#allocation11 + $0x208] sm:$0xff]
    %v1436 = vld [vmem:[#allocation11 + $0x210] sm:$0xff]
    %v1437 = vld [vmem:[#allocation11 + $0x218] sm:$0xff]
    %v1438 = vld [vmem:[#allocation11 + $0x220] sm:$0xff]
    %v1439 = vld [vmem:[#allocation11 + $0x228] sm:$0xff]
    %v1440 = vld [vmem:[#allocation11 + $0x230] sm:$0xff]
    %v1441 = vld [vmem:[#allocation11 + $0x238] sm:$0xff]
    %v1442 = vld [vmem:[#allocation11 + $0x240] sm:$0xff]
    %v1443 = vld [vmem:[#allocation11 + $0x248] sm:$0xff]
    %v1444 = vld [vmem:[#allocation11 + $0x250] sm:$0xff]
    %v1445 = vld [vmem:[#allocation11 + $0x258] sm:$0xff]
    %v1446 = vld [vmem:[#allocation11 + $0x260] sm:$0xff]
    %v1447 = vld [vmem:[#allocation11 + $0x268] sm:$0xff]
    %v1448 = vld [vmem:[#allocation11 + $0x270] sm:$0xff]
    %v1449 = vld [vmem:[#allocation11 + $0x278] sm:$0xff]
    %v1450 = vld [vmem:[#allocation11 + $0x280] sm:$0xff]
    %v1451 = vld [vmem:[#allocation11 + $0x288] sm:$0xff]
    %v1452 = vld [vmem:[#allocation11 + $0x290] sm:$0xff]
    %v1453 = vld [vmem:[#allocation11 + $0x298] sm:$0xff]
    %v1454 = vld [vmem:[#allocation11 + $0x2a0] sm:$0xff]
    %v1455 = vld [vmem:[#allocation11 + $0x2a8] sm:$0xff]
    %v1456 = vld [vmem:[#allocation11 + $0x2b0] sm:$0xff]
    %v1457 = vld [vmem:[#allocation11 + $0x2b8] sm:$0xff]
    %v1458 = vld [vmem:[#allocation11 + $0x2c0] sm:$0xff]
    %v1459 = vld [vmem:[#allocation11 + $0x2c8] sm:$0xff]
    %v1460 = vld [vmem:[#allocation11 + $0x2d0] sm:$0xff]
    %v1461 = vld [vmem:[#allocation11 + $0x2d8] sm:$0xff]
    %v1462 = vld [vmem:[#allocation11 + $0x2e0] sm:$0xff]
    %v1463 = vld [vmem:[#allocation11 + $0x2e8] sm:$0xff]
    %v1464 = vld [vmem:[#allocation11 + $0x2f0] sm:$0xff]
    %v1465 = vld [vmem:[#allocation11 + $0x2f8] sm:$0xff]
    %v1466 = vld [vmem:[#allocation12] sm:$0x3f]
    %v1468 = vlaneseq
    %v1469 = vshrl.u32 %v1468, 7
    %v1470 = vsub.s32 0, %v1469
    %v1471 = vrot.slane %v1466, %v1470
    %v1472 = vlaneseq
    %v1473 = vshrl.u32 %v1472, 7
    %v1474 = vsub.s32 1, %v1473
    %v1475 = vrot.slane %v1466, %v1474
    %v1476 = vlaneseq
    %v1477 = vshrl.u32 %v1476, 7
    %v1478 = vsub.s32 2, %v1477
    %v1479 = vrot.slane %v1466, %v1478
    %v1480 = vlaneseq
    %v1481 = vshrl.u32 %v1480, 7
    %v1482 = vsub.s32 3, %v1481
    %v1483 = vrot.slane %v1466, %v1482
    %v1484 = vlaneseq
    %v1485 = vshrl.u32 %v1484, 7
    %v1486 = vsub.s32 4, %v1485
    %v1487 = vrot.slane %v1466, %v1486
    %v1488 = vlaneseq
    %v1489 = vshrl.u32 %v1488, 7
    %v1490 = vsub.s32 5, %v1489
    %v1491 = vrot.slane %v1466, %v1490
    %1498 = vmatprep.subr.mxu0 %v1371
    %1499 = vmatpush1.msra.mxu0 %v1370
    %1500 = vmatprep.subr.mxu0 %v1377
    %1501 = vmatpush1.msra.mxu0 %v1376
    %1502 = vmatprep.subr.mxu0 %v1383
    %1503 = vmatpush1.msra.mxu0 %v1382
    %1504 = vmatprep.subr.mxu0 %v1389
    %1505 = vmatpush1.msra.mxu0 %v1388
    %1506 = vmatprep.subr.mxu0 %v1395
    %1507 = vmatpush1.msra.mxu0 %v1394
    %1508 = vmatprep.subr.mxu0 %v1401
    %1509 = vmatpush1.msra.mxu0 %v1400
    %1510 = vmatprep.subr.mxu0 %v1407
    %1511 = vmatpush1.msra.mxu0 %v1406
    %1512 = vmatprep.subr.mxu0 %v1413
    %1513 = vmatpush1.msra.mxu0 %v1412
    %1514 = vmatprep.subr.mxu0 %v1419
    %1515 = vmatpush1.msra.mxu0 %v1418
    %1516 = vmatprep.subr.mxu0 %v1425
    %1517 = vmatpush1.msra.mxu0 %v1424
    %1518 = vmatprep.subr.mxu0 %v1431
    %1519 = vmatpush1.msra.mxu0 %v1430
    %1520 = vmatprep.subr.mxu0 %v1437
    %1521 = vmatpush1.msra.mxu0 %v1436
    %1522 = vmatprep.subr.mxu0 %v1443
    %1523 = vmatpush1.msra.mxu0 %v1442
    %1524 = vmatprep.subr.mxu0 %v1449
    %1525 = vmatpush1.msra.mxu0 %v1448
    %1526 = vmatprep.subr.mxu0 %v1455
    %1527 = vmatpush1.msra.mxu0 %v1454
    %1528 = vmatprep.subr.mxu0 %v1461
    %1529 = vmatpush1.msra.mxu0 %v1460
    %1530 = vmatprep.subr.mxu0 0.0
    %1531 = vmatpush1.msra.mxu0 0.0
    %1532 = vmatprep.subr.mxu0 0.0
    %1533 = vmatpush1.msra.mxu0 0.0
    %1534 = vmatprep.subr.mxu0 0.0
    %1535 = vmatpush1.msra.mxu0 0.0
    %1536 = vmatprep.subr.mxu0 0.0
    %1537 = vmatpush1.msra.mxu0 0.0
    %1538 = vmatprep.subr.mxu0 0.0
    %1539 = vmatpush1.msra.mxu0 0.0
    %1540 = vmatprep.subr.mxu0 0.0
    %1541 = vmatpush1.msra.mxu0 0.0
    %1542 = vmatprep.subr.mxu0 0.0
    %1543 = vmatpush1.msra.mxu0 0.0
    %1544 = vmatprep.subr.mxu0 0.0
    %1545 = vmatpush1.msra.mxu0 0.0
    %1546 = vmatprep.subr.mxu0 0.0
    %1547 = vmatpush1.msra.mxu0 0.0
    %1548 = vmatprep.subr.mxu0 0.0
    %1549 = vmatpush1.msra.mxu0 0.0
    %1550 = vmatprep.subr.mxu0 0.0
    %1551 = vmatpush1.msra.mxu0 0.0
    %1552 = vmatprep.subr.mxu0 0.0
    %1553 = vmatpush1.msra.mxu0 0.0
    %1554 = vmatprep.subr.mxu0 0.0
    %1555 = vmatpush1.msra.mxu0 0.0
    %1556 = vmatprep.subr.mxu0 0.0
    %1557 = vmatpush1.msra.mxu0 0.0
    %1558 = vmatprep.subr.mxu0 0.0
    %1559 = vmatpush1.msra.mxu0 0.0
    %1560 = vmatprep.subr.mxu0 0.0
    %1561 = vmatpush1.msra.mxu0 0.0
    %1562 = vmatprep.mubr.f32.mxu0 0.0
    %1563 = vmatmul.mubr.f32.gmra.mrb[0].mxu0 %v1360
    %v1564 = vpop.f32.mrb[0].mxu0
    %v1565 = vadd.f32 %v1471, %v1564
    %v1566 = vpop.f32.mrb[0].mxu0
    %v1567 = vadd.f32 %v1475, %v1566
    %1568 = vmatprep.mubr.f32.mxu0 0.0
    %1569 = vmatmul.mubr.f32.gmra.mrb[0].mxu0 %v1361
    %v1570 = vpop.f32.mrb[0].mxu0
    %v1571 = vpop.f32.mrb[0].mxu0
    %1572 = vdwg.mxu0
    %1573 = vmatprep.subr.mxu0 %v1373
    %1574 = vmatpush1.msra.mxu0 %v1372
    %1575 = vmatprep.subr.mxu0 %v1379
    %1576 = vmatpush1.msra.mxu0 %v1378
    %1577 = vmatprep.subr.mxu0 %v1385
    %1578 = vmatpush1.msra.mxu0 %v1384
    %1579 = vmatprep.subr.mxu0 %v1391
    %1580 = vmatpush1.msra.mxu0 %v1390
    %1581 = vmatprep.subr.mxu0 %v1397
    %1582 = vmatpush1.msra.mxu0 %v1396
    %1583 = vmatprep.subr.mxu0 %v1403
    %1584 = vmatpush1.msra.mxu0 %v1402
    %1585 = vmatprep.subr.mxu0 %v1409
    %1586 = vmatpush1.msra.mxu0 %v1408
    %1587 = vmatprep.subr.mxu0 %v1415
    %1588 = vmatpush1.msra.mxu0 %v1414
    %1589 = vmatprep.subr.mxu0 %v1421
    %1590 = vmatpush1.msra.mxu0 %v1420
    %1591 = vmatprep.subr.mxu0 %v1427
    %1592 = vmatpush1.msra.mxu0 %v1426
    %1593 = vmatprep.subr.mxu0 %v1433
    %1594 = vmatpush1.msra.mxu0 %v1432
    %1595 = vmatprep.subr.mxu0 %v1439
    %1596 = vmatpush1.msra.mxu0 %v1438
    %1597 = vmatprep.subr.mxu0 %v1445
    %1598 = vmatpush1.msra.mxu0 %v1444
    %1599 = vmatprep.subr.mxu0 %v1451
    %1600 = vmatpush1.msra.mxu0 %v1450
    %1601 = vmatprep.subr.mxu0 %v1457
    %1602 = vmatpush1.msra.mxu0 %v1456
    %1603 = vmatprep.subr.mxu0 %v1463
    %1604 = vmatpush1.msra.mxu0 %v1462
    %1605 = vmatprep.subr.mxu0 0.0
    %1606 = vmatpush1.msra.mxu0 0.0
    %1607 = vmatprep.subr.mxu0 0.0
    %1608 = vmatpush1.msra.mxu0 0.0
    %1609 = vmatprep.subr.mxu0 0.0
    %1610 = vmatpush1.msra.mxu0 0.0
    %1611 = vmatprep.subr.mxu0 0.0
    %1612 = vmatpush1.msra.mxu0 0.0
    %1613 = vmatprep.subr.mxu0 0.0
    %1614 = vmatpush1.msra.mxu0 0.0
    %1615 = vmatprep.subr.mxu0 0.0
    %1616 = vmatpush1.msra.mxu0 0.0
    %1617 = vmatprep.subr.mxu0 0.0
    %1618 = vmatpush1.msra.mxu0 0.0
    %1619 = vmatprep.subr.mxu0 0.0
    %1620 = vmatpush1.msra.mxu0 0.0
    %1621 = vmatprep.subr.mxu0 0.0
    %1622 = vmatpush1.msra.mxu0 0.0
    %1623 = vmatprep.subr.mxu0 0.0
    %1624 = vmatpush1.msra.mxu0 0.0
    %1625 = vmatprep.subr.mxu0 0.0
    %1626 = vmatpush1.msra.mxu0 0.0
    %1627 = vmatprep.subr.mxu0 0.0
    %1628 = vmatpush1.msra.mxu0 0.0
    %1629 = vmatprep.subr.mxu0 0.0
    %1630 = vmatpush1.msra.mxu0 0.0
    %1631 = vmatprep.subr.mxu0 0.0
    %1632 = vmatpush1.msra.mxu0 0.0
    %1633 = vmatprep.subr.mxu0 0.0
    %1634 = vmatpush1.msra.mxu0 0.0
    %1635 = vmatprep.subr.mxu0 0.0
    %1636 = vmatpush1.msra.mxu0 0.0
    %1637 = vmatprep.mubr.f32.mxu0 0.0
    %1638 = vmatmul.mubr.f32.gmra.mrb[0].mxu0 %v1360
    %v1639 = vpop.f32.mrb[0].mxu0
    %v1640 = vadd.f32 %v1479, %v1639
    %v1641 = vpop.f32.mrb[0].mxu0
    %1642 = vmatprep.mubr.f32.mxu0 0.0
    %1643 = vmatmul.mubr.f32.gmra.mrb[0].mxu0 %v1361
    %v1644 = vpop.f32.mrb[0].mxu0
    %v1645 = vpop.f32.mrb[0].mxu0
    %v1646 = vadd.f32 %v1483, %v1645
    %1647 = vdwg.mxu0
    %1648 = vmatprep.subr.mxu0 %v1375
    %1649 = vmatpush1.msra.mxu0 %v1374
    %1650 = vmatprep.subr.mxu0 %v1381
    %1651 = vmatpush1.msra.mxu0 %v1380
    %1652 = vmatprep.subr.mxu0 %v1387
    %1653 = vmatpush1.msra.mxu0 %v1386
    %1654 = vmatprep.subr.mxu0 %v1393
    %1655 = vmatpush1.msra.mxu0 %v1392
    %1656 = vmatprep.subr.mxu0 %v1399
    %1657 = vmatpush1.msra.mxu0 %v1398
    %1658 = vmatprep.subr.mxu0 %v1405
    %1659 = vmatpush1.msra.mxu0 %v1404
    %1660 = vmatprep.subr.mxu0 %v1411
    %1661 = vmatpush1.msra.mxu0 %v1410
    %1662 = vmatprep.subr.mxu0 %v1417
    %1663 = vmatpush1.msra.mxu0 %v1416
    %1664 = vmatprep.subr.mxu0 %v1423
    %1665 = vmatpush1.msra.mxu0 %v1422
    %1666 = vmatprep.subr.mxu0 %v1429
    %1667 = vmatpush1.msra.mxu0 %v1428
    %1668 = vmatprep.subr.mxu0 %v1435
    %1669 = vmatpush1.msra.mxu0 %v1434
    %1670 = vmatprep.subr.mxu0 %v1441
    %1671 = vmatpush1.msra.mxu0 %v1440
    %1672 = vmatprep.subr.mxu0 %v1447
    %1673 = vmatpush1.msra.mxu0 %v1446
    %1674 = vmatprep.subr.mxu0 %v1453
    %1675 = vmatpush1.msra.mxu0 %v1452
    %1676 = vmatprep.subr.mxu0 %v1459
    %1677 = vmatpush1.msra.mxu0 %v1458
    %1678 = vmatprep.subr.mxu0 %v1465
    %1679 = vmatpush1.msra.mxu0 %v1464
    %1680 = vmatprep.subr.mxu0 0.0
    %1681 = vmatpush1.msra.mxu0 0.0
    %1682 = vmatprep.subr.mxu0 0.0
    %1683 = vmatpush1.msra.mxu0 0.0
    %1684 = vmatprep.subr.mxu0 0.0
    %1685 = vmatpush1.msra.mxu0 0.0
    %1686 = vmatprep.subr.mxu0 0.0
    %1687 = vmatpush1.msra.mxu0 0.0
    %1688 = vmatprep.subr.mxu0 0.0
    %1689 = vmatpush1.msra.mxu0 0.0
    %1690 = vmatprep.subr.mxu0 0.0
    %1691 = vmatpush1.msra.mxu0 0.0
    %1692 = vmatprep.subr.mxu0 0.0
    %1693 = vmatpush1.msra.mxu0 0.0
    %1694 = vmatprep.subr.mxu0 0.0
    %1695 = vmatpush1.msra.mxu0 0.0
    %1696 = vmatprep.subr.mxu0 0.0
    %1697 = vmatpush1.msra.mxu0 0.0
    %1698 = vmatprep.subr.mxu0 0.0
    %1699 = vmatpush1.msra.mxu0 0.0
    %1700 = vmatprep.subr.mxu0 0.0
    %1701 = vmatpush1.msra.mxu0 0.0
    %1702 = vmatprep.subr.mxu0 0.0
    %1703 = vmatpush1.msra.mxu0 0.0
    %1704 = vmatprep.subr.mxu0 0.0
    %1705 = vmatpush1.msra.mxu0 0.0
    %1706 = vmatprep.subr.mxu0 0.0
    %1707 = vmatpush1.msra.mxu0 0.0
    %1708 = vmatprep.subr.mxu0 0.0
    %1709 = vmatpush1.msra.mxu0 0.0
    %1710 = vmatprep.subr.mxu0 0.0
    %1711 = vmatpush1.msra.mxu0 0.0
    %1712 = vmatprep.mubr.f32.mxu0 0.0
    %1713 = vmatmul.mubr.f32.gmra.mrb[0].mxu0 %v1360
    %v1714 = vpop.f32.mrb[0].mxu0
    %v1715 = vpop.f32.mrb[0].mxu0
    %1716 = vmatprep.mubr.f32.mxu0 0.0
    %1717 = vmatmul.mubr.f32.gmra.mrb[0].mxu0 %v1361
    %v1718 = vpop.f32.mrb[0].mxu0
    %v1719 = vadd.f32 %v1487, %v1718
    %v1720 = vpop.f32.mrb[0].mxu0
    %v1721 = vadd.f32 %v1491, %v1720
    %1722 = vdwg.mxu0
    %v1723 = vadd.f32 %v1364, %v1565
    %v1724 = vadd.f32 %v1367, %v1646
    %v1725 = vxor.u32 %v1723, 2147483648
    %v1726 = vxor.u32 %v1724, 2147483648
    %v1727 = vmul.f32 %v1725, 1.442695
    %v1728 = vpow.pop %v1727
    %v1729 = vmul.f32 %v1726, 1.442695
    %v1730 = vpow.pop %v1729
    %v1731 = vadd.f32 %v1728, 1.0
    %v1732 = vadd.f32 %v1730, 1.0
    %v1733 = vrcp.pop %v1731
    %v1734 = vmul.f32 1.0, %v1733
    %v1735 = vrcp.pop %v1732
    %v1736 = vmul.f32 1.0, %v1735
    %v1737 = vadd.f32 %v1365, %v1567
    %v1738 = vadd.f32 %v1368, %v1719
    %v1739 = vxor.u32 %v1737, 2147483648
    %v1740 = vxor.u32 %v1738, 2147483648
    %v1741 = vmul.f32 %v1739, 1.442695
    %v1742 = vpow.pop %v1741
    %v1743 = vmul.f32 %v1740, 1.442695
    %v1744 = vpow.pop %v1743
    %v1745 = vadd.f32 %v1742, 1.0
    %v1746 = vadd.f32 %v1744, 1.0
    %v1747 = vrcp.pop %v1745
    %v1748 = vmul.f32 1.0, %v1747
    %v1749 = vrcp.pop %v1746
    %v1750 = vmul.f32 1.0, %v1749
    %v1751 = vmul.f32 %v1734, %v1640
    %v1752 = vmul.f32 %v1736, %v1721
    %v1753 = vadd.f32 %v1366, %v1751
    %v1754 = vadd.f32 %v1369, %v1752
    %v1755 = vtanh.pop %v1753
    %v1756 = vtanh.pop %v1754
    %v1757 = vsub.f32 1.0, %v1748
    %v1758 = vsub.f32 1.0, %v1750
    %v1759 = vmul.f32 %v1757, %v1755
    %v1760 = vmul.f32 %v1758, %v1756
    %v1761 = vmul.f32 %v1748, %v1360
    %v1762 = vmul.f32 %v1750, %v1361
    %v1763 = vadd.f32 %v1759, %v1761
    %v1764 = vadd.f32 %v1760, %v1762
    %1765 = vst [vmem:[#allocation3 + $0x10] sm:$0xff] %v1763
    %1766 = vst [vmem:[#allocation3 + $0x68] sm:$0xff] %v1764
    %v1767 = vld [vmem:[#allocation2 + $0x60] sm:$0xff]
    %v1768 = vld [vmem:[#allocation2 + $0x68] sm:$0xff]
    %v1769 = vld [vmem:[#allocation2 + $0x70] sm:$0xff]
    %v1770 = vld [vmem:[#allocation2 + $0x108] sm:$0xff]
    %v1771 = vld [vmem:[#allocation2 + $0x110] sm:$0xff]
    %v1772 = vld [vmem:[#allocation2 + $0x118] sm:$0xff]
    %v1773 = vld [vmem:[#allocation11] sm:$0xff]
    %v1774 = vld [vmem:[#allocation11 + $0x8] sm:$0xff]
    %v1775 = vld [vmem:[#allocation11 + $0x10] sm:$0xff]
    %v1776 = vld [vmem:[#allocation11 + $0x18] sm:$0xff]
    %v1777 = vld [vmem:[#allocation11 + $0x20] sm:$0xff]
    %v1778 = vld [vmem:[#allocation11 + $0x28] sm:$0xff]
    %v1779 = vld [vmem:[#allocation11 + $0x30] sm:$0xff]
    %v1780 = vld [vmem:[#allocation11 + $0x38] sm:$0xff]
    %v1781 = vld [vmem:[#allocation11 + $0x40] sm:$0xff]
    %v1782 = vld [vmem:[#allocation11 + $0x48] sm:$0xff]
    %v1783 = vld [vmem:[#allocation11 + $0x50] sm:$0xff]
    %v1784 = vld [vmem:[#allocation11 + $0x58] sm:$0xff]
    %v1785 = vld [vmem:[#allocation11 + $0x60] sm:$0xff]
    %v1786 = vld [vmem:[#allocation11 + $0x68] sm:$0xff]
    %v1787 = vld [vmem:[#allocation11 + $0x70] sm:$0xff]
    %v1788 = vld [vmem:[#allocation11 + $0x78] sm:$0xff]
    %v1789 = vld [vmem:[#allocation11 + $0x80] sm:$0xff]
    %v1790 = vld [vmem:[#allocation11 + $0x88] sm:$0xff]
    %v1791 = vld [vmem:[#allocation11 + $0x90] sm:$0xff]
    %v1792 = vld [vmem:[#allocation11 + $0x98] sm:$0xff]
    %v1793 = vld [vmem:[#allocation11 + $0xa0] sm:$0xff]
    %v1794 = vld [vmem:[#allocation11 + $0xa8] sm:$0xff]
    %v1795 = vld [vmem:[#allocation11 + $0xb0] sm:$0xff]
    %v1796 = vld [vmem:[#allocation11 + $0xb8] sm:$0xff]
    %v1797 = vld [vmem:[#allocation11 + $0xc0] sm:$0xff]
    %v1798 = vld [vmem:[#allocation11 + $0xc8] sm:$0xff]
    %v1799 = vld [vmem:[#allocation11 + $0xd0] sm:$0xff]
    %v1800 = vld [vmem:[#allocation11 + $0xd8] sm:$0xff]
    %v1801 = vld [vmem:[#allocation11 + $0xe0] sm:$0xff]
    %v1802 = vld [vmem:[#allocation11 + $0xe8] sm:$0xff]
    %v1803 = vld [vmem:[#allocation11 + $0xf0] sm:$0xff]
    %v1804 = vld [vmem:[#allocation11 + $0xf8] sm:$0xff]
    %v1805 = vld [vmem:[#allocation11 + $0x100] sm:$0xff]
    %v1806 = vld [vmem:[#allocation11 + $0x108] sm:$0xff]
    %v1807 = vld [vmem:[#allocation11 + $0x110] sm:$0xff]
    %v1808 = vld [vmem:[#allocation11 + $0x118] sm:$0xff]
    %v1809 = vld [vmem:[#allocation11 + $0x120] sm:$0xff]
    %v1810 = vld [vmem:[#allocation11 + $0x128] sm:$0xff]
    %v1811 = vld [vmem:[#allocation11 + $0x130] sm:$0xff]
    %v1812 = vld [vmem:[#allocation11 + $0x138] sm:$0xff]
    %v1813 = vld [vmem:[#allocation11 + $0x140] sm:$0xff]
    %v1814 = vld [vmem:[#allocation11 + $0x148] sm:$0xff]
    %v1815 = vld [vmem:[#allocation11 + $0x150] sm:$0xff]
    %v1816 = vld [vmem:[#allocation11 + $0x158] sm:$0xff]
    %v1817 = vld [vmem:[#allocation11 + $0x160] sm:$0xff]
    %v1818 = vld [vmem:[#allocation11 + $0x168] sm:$0xff]
    %v1819 = vld [vmem:[#allocation11 + $0x170] sm:$0xff]
    %v1820 = vld [vmem:[#allocation11 + $0x178] sm:$0xff]
    %v1821 = vld [vmem:[#allocation11 + $0x180] sm:$0xff]
    %v1822 = vld [vmem:[#allocation11 + $0x188] sm:$0xff]
    %v1823 = vld [vmem:[#allocation11 + $0x190] sm:$0xff]
    %v1824 = vld [vmem:[#allocation11 + $0x198] sm:$0xff]
    %v1825 = vld [vmem:[#allocation11 + $0x1a0] sm:$0xff]
    %v1826 = vld [vmem:[#allocation11 + $0x1a8] sm:$0xff]
    %v1827 = vld [vmem:[#allocation11 + $0x1b0] sm:$0xff]
    %v1828 = vld [vmem:[#allocation11 + $0x1b8] sm:$0xff]
    %v1829 = vld [vmem:[#allocation11 + $0x1c0] sm:$0xff]
    %v1830 = vld [vmem:[#allocation11 + $0x1c8] sm:$0xff]
    %v1831 = vld [vmem:[#allocation11 + $0x1d0] sm:$0xff]
    %v1832 = vld [vmem:[#allocation11 + $0x1d8] sm:$0xff]
    %v1833 = vld [vmem:[#allocation11 + $0x1e0] sm:$0xff]
    %v1834 = vld [vmem:[#allocation11 + $0x1e8] sm:$0xff]
    %v1835 = vld [vmem:[#allocation11 + $0x1f0] sm:$0xff]
    %v1836 = vld [vmem:[#allocation11 + $0x1f8] sm:$0xff]
    %v1837 = vld [vmem:[#allocation11 + $0x200] sm:$0xff]
    %v1838 = vld [vmem:[#allocation11 + $0x208] sm:$0xff]
    %v1839 = vld [vmem:[#allocation11 + $0x210] sm:$0xff]
    %v1840 = vld [vmem:[#allocation11 + $0x218] sm:$0xff]
    %v1841 = vld [vmem:[#allocation11 + $0x220] sm:$0xff]
    %v1842 = vld [vmem:[#allocation11 + $0x228] sm:$0xff]
    %v1843 = vld [vmem:[#allocation11 + $0x230] sm:$0xff]
    %v1844 = vld [vmem:[#allocation11 + $0x238] sm:$0xff]
    %v1845 = vld [vmem:[#allocation11 + $0x240] sm:$0xff]
    %v1846 = vld [vmem:[#allocation11 + $0x248] sm:$0xff]
    %v1847 = vld [vmem:[#allocation11 + $0x250] sm:$0xff]
    %v1848 = vld [vmem:[#allocation11 + $0x258] sm:$0xff]
    %v1849 = vld [vmem:[#allocation11 + $0x260] sm:$0xff]
    %v1850 = vld [vmem:[#allocation11 + $0x268] sm:$0xff]
    %v1851 = vld [vmem:[#allocation11 + $0x270] sm:$0xff]
    %v1852 = vld [vmem:[#allocation11 + $0x278] sm:$0xff]
    %v1853 = vld [vmem:[#allocation11 + $0x280] sm:$0xff]
    %v1854 = vld [vmem:[#allocation11 + $0x288] sm:$0xff]
    %v1855 = vld [vmem:[#allocation11 + $0x290] sm:$0xff]
    %v1856 = vld [vmem:[#allocation11 + $0x298] sm:$0xff]
    %v1857 = vld [vmem:[#allocation11 + $0x2a0] sm:$0xff]
    %v1858 = vld [vmem:[#allocation11 + $0x2a8] sm:$0xff]
    %v1859 = vld [vmem:[#allocation11 + $0x2b0] sm:$0xff]
    %v1860 = vld [vmem:[#allocation11 + $0x2b8] sm:$0xff]
    %v1861 = vld [vmem:[#allocation11 + $0x2c0] sm:$0xff]
    %v1862 = vld [vmem:[#allocation11 + $0x2c8] sm:$0xff]
    %v1863 = vld [vmem:[#allocation11 + $0x2d0] sm:$0xff]
    %v1864 = vld [vmem:[#allocation11 + $0x2d8] sm:$0xff]
    %v1865 = vld [vmem:[#allocation11 + $0x2e0] sm:$0xff]
    %v1866 = vld [vmem:[#allocation11 + $0x2e8] sm:$0xff]
    %v1867 = vld [vmem:[#allocation11 + $0x2f0] sm:$0xff]
    %v1868 = vld [vmem:[#allocation11 + $0x2f8] sm:$0xff]
    %v1869 = vld [vmem:[#allocation12] sm:$0x3f]
    %v1871 = vlaneseq
    %v1872 = vshrl.u32 %v1871, 7
    %v1873 = vsub.s32 0, %v1872
    %v1874 = vrot.slane %v1869, %v1873
    %v1875 = vlaneseq
    %v1876 = vshrl.u32 %v1875, 7
    %v1877 = vsub.s32 1, %v1876
    %v1878 = vrot.slane %v1869, %v1877
    %v1879 = vlaneseq
    %v1880 = vshrl.u32 %v1879, 7
    %v1881 = vsub.s32 2, %v1880
    %v1882 = vrot.slane %v1869, %v1881
    %v1883 = vlaneseq
    %v1884 = vshrl.u32 %v1883, 7
    %v1885 = vsub.s32 3, %v1884
    %v1886 = vrot.slane %v1869, %v1885
    %v1887 = vlaneseq
    %v1888 = vshrl.u32 %v1887, 7
    %v1889 = vsub.s32 4, %v1888
    %v1890 = vrot.slane %v1869, %v1889
    %v1891 = vlaneseq
    %v1892 = vshrl.u32 %v1891, 7
    %v1893 = vsub.s32 5, %v1892
    %v1894 = vrot.slane %v1869, %v1893
    %1901 = vmatprep.subr.mxu0 %v1774
    %1902 = vmatpush1.msra.mxu0 %v1773
    %1903 = vmatprep.subr.mxu0 %v1780
    %1904 = vmatpush1.msra.mxu0 %v1779
    %1905 = vmatprep.subr.mxu0 %v1786
    %1906 = vmatpush1.msra.mxu0 %v1785
    %1907 = vmatprep.subr.mxu0 %v1792
    %1908 = vmatpush1.msra.mxu0 %v1791
    %1909 = vmatprep.subr.mxu0 %v1798
    %1910 = vmatpush1.msra.mxu0 %v1797
    %1911 = vmatprep.subr.mxu0 %v1804
    %1912 = vmatpush1.msra.mxu0 %v1803
    %1913 = vmatprep.subr.mxu0 %v1810
    %1914 = vmatpush1.msra.mxu0 %v1809
    %1915 = vmatprep.subr.mxu0 %v1816
    %1916 = vmatpush1.msra.mxu0 %v1815
    %1917 = vmatprep.subr.mxu0 %v1822
    %1918 = vmatpush1.msra.mxu0 %v1821
    %1919 = vmatprep.subr.mxu0 %v1828
    %1920 = vmatpush1.msra.mxu0 %v1827
    %1921 = vmatprep.subr.mxu0 %v1834
    %1922 = vmatpush1.msra.mxu0 %v1833
    %1923 = vmatprep.subr.mxu0 %v1840
    %1924 = vmatpush1.msra.mxu0 %v1839
    %1925 = vmatprep.subr.mxu0 %v1846
    %1926 = vmatpush1.msra.mxu0 %v1845
    %1927 = vmatprep.subr.mxu0 %v1852
    %1928 = vmatpush1.msra.mxu0 %v1851
    %1929 = vmatprep.subr.mxu0 %v1858
    %1930 = vmatpush1.msra.mxu0 %v1857
    %1931 = vmatprep.subr.mxu0 %v1864
    %1932 = vmatpush1.msra.mxu0 %v1863
    %1933 = vmatprep.subr.mxu0 0.0
    %1934 = vmatpush1.msra.mxu0 0.0
    %1935 = vmatprep.subr.mxu0 0.0
    %1936 = vmatpush1.msra.mxu0 0.0
    %1937 = vmatprep.subr.mxu0 0.0
    %1938 = vmatpush1.msra.mxu0 0.0
    %1939 = vmatprep.subr.mxu0 0.0
    %1940 = vmatpush1.msra.mxu0 0.0
    %1941 = vmatprep.subr.mxu0 0.0
    %1942 = vmatpush1.msra.mxu0 0.0
    %1943 = vmatprep.subr.mxu0 0.0
    %1944 = vmatpush1.msra.mxu0 0.0
    %1945 = vmatprep.subr.mxu0 0.0
    %1946 = vmatpush1.msra.mxu0 0.0
    %1947 = vmatprep.subr.mxu0 0.0
    %1948 = vmatpush1.msra.mxu0 0.0
    %1949 = vmatprep.subr.mxu0 0.0
    %1950 = vmatpush1.msra.mxu0 0.0
    %1951 = vmatprep.subr.mxu0 0.0
    %1952 = vmatpush1.msra.mxu0 0.0
    %1953 = vmatprep.subr.mxu0 0.0
    %1954 = vmatpush1.msra.mxu0 0.0
    %1955 = vmatprep.subr.mxu0 0.0
    %1956 = vmatpush1.msra.mxu0 0.0
    %1957 = vmatprep.subr.mxu0 0.0
    %1958 = vmatpush1.msra.mxu0 0.0
    %1959 = vmatprep.subr.mxu0 0.0
    %1960 = vmatpush1.msra.mxu0 0.0
    %1961 = vmatprep.subr.mxu0 0.0
    %1962 = vmatpush1.msra.mxu0 0.0
    %1963 = vmatprep.subr.mxu0 0.0
    %1964 = vmatpush1.msra.mxu0 0.0
    %1965 = vmatprep.mubr.f32.mxu0 0.0
    %1966 = vmatmul.mubr.f32.gmra.mrb[0].mxu0 %v1763
    %v1967 = vpop.f32.mrb[0].mxu0
    %v1968 = vadd.f32 %v1874, %v1967
    %v1969 = vpop.f32.mrb[0].mxu0
    %v1970 = vadd.f32 %v1878, %v1969
    %1971 = vmatprep.mubr.f32.mxu0 0.0
    %1972 = vmatmul.mubr.f32.gmra.mrb[0].mxu0 %v1764
    %v1973 = vpop.f32.mrb[0].mxu0
    %v1974 = vpop.f32.mrb[0].mxu0
    %1975 = vdwg.mxu0
    %1976 = vmatprep.subr.mxu0 %v1776
    %1977 = vmatpush1.msra.mxu0 %v1775
    %1978 = vmatprep.subr.mxu0 %v1782
    %1979 = vmatpush1.msra.mxu0 %v1781
    %1980 = vmatprep.subr.mxu0 %v1788
    %1981 = vmatpush1.msra.mxu0 %v1787
    %1982 = vmatprep.subr.mxu0 %v1794
    %1983 = vmatpush1.msra.mxu0 %v1793
    %1984 = vmatprep.subr.mxu0 %v1800
    %1985 = vmatpush1.msra.mxu0 %v1799
    %1986 = vmatprep.subr.mxu0 %v1806
    %1987 = vmatpush1.msra.mxu0 %v1805
    %1988 = vmatprep.subr.mxu0 %v1812
    %1989 = vmatpush1.msra.mxu0 %v1811
    %1990 = vmatprep.subr.mxu0 %v1818
    %1991 = vmatpush1.msra.mxu0 %v1817
    %1992 = vmatprep.subr.mxu0 %v1824
    %1993 = vmatpush1.msra.mxu0 %v1823
    %1994 = vmatprep.subr.mxu0 %v1830
    %1995 = vmatpush1.msra.mxu0 %v1829
    %1996 = vmatprep.subr.mxu0 %v1836
    %1997 = vmatpush1.msra.mxu0 %v1835
    %1998 = vmatprep.subr.mxu0 %v1842
    %1999 = vmatpush1.msra.mxu0 %v1841
    %2000 = vmatprep.subr.mxu0 %v1848
    %2001 = vmatpush1.msra.mxu0 %v1847
    %2002 = vmatprep.subr.mxu0 %v1854
    %2003 = vmatpush1.msra.mxu0 %v1853
    %2004 = vmatprep.subr.mxu0 %v1860
    %2005 = vmatpush1.msra.mxu0 %v1859
    %2006 = vmatprep.subr.mxu0 %v1866
    %2007 = vmatpush1.msra.mxu0 %v1865
    %2008 = vmatprep.subr.mxu0 0.0
    %2009 = vmatpush1.msra.mxu0 0.0
    %2010 = vmatprep.subr.mxu0 0.0
    %2011 = vmatpush1.msra.mxu0 0.0
    %2012 = vmatprep.subr.mxu0 0.0
    %2013 = vmatpush1.msra.mxu0 0.0
    %2014 = vmatprep.subr.mxu0 0.0
    %2015 = vmatpush1.msra.mxu0 0.0
    %2016 = vmatprep.subr.mxu0 0.0
    %2017 = vmatpush1.msra.mxu0 0.0
    %2018 = vmatprep.subr.mxu0 0.0
    %2019 = vmatpush1.msra.mxu0 0.0
    %2020 = vmatprep.subr.mxu0 0.0
    %2021 = vmatpush1.msra.mxu0 0.0
    %2022 = vmatprep.subr.mxu0 0.0
    %2023 = vmatpush1.msra.mxu0 0.0
    %2024 = vmatprep.subr.mxu0 0.0
    %2025 = vmatpush1.msra.mxu0 0.0
    %2026 = vmatprep.subr.mxu0 0.0
    %2027 = vmatpush1.msra.mxu0 0.0
    %2028 = vmatprep.subr.mxu0 0.0
    %2029 = vmatpush1.msra.mxu0 0.0
    %2030 = vmatprep.subr.mxu0 0.0
    %2031 = vmatpush1.msra.mxu0 0.0
    %2032 = vmatprep.subr.mxu0 0.0
    %2033 = vmatpush1.msra.mxu0 0.0
    %2034 = vmatprep.subr.mxu0 0.0
    %2035 = vmatpush1.msra.mxu0 0.0
    %2036 = vmatprep.subr.mxu0 0.0
    %2037 = vmatpush1.msra.mxu0 0.0
    %2038 = vmatprep.subr.mxu0 0.0
    %2039 = vmatpush1.msra.mxu0 0.0
    %2040 = vmatprep.mubr.f32.mxu0 0.0
    %2041 = vmatmul.mubr.f32.gmra.mrb[0].mxu0 %v1763
    %v2042 = vpop.f32.mrb[0].mxu0
    %v2043 = vadd.f32 %v1882, %v2042
    %v2044 = vpop.f32.mrb[0].mxu0
    %2045 = vmatprep.mubr.f32.mxu0 0.0
    %2046 = vmatmul.mubr.f32.gmra.mrb[0].mxu0 %v1764
    %v2047 = vpop.f32.mrb[0].mxu0
    %v2048 = vpop.f32.mrb[0].mxu0
    %v2049 = vadd.f32 %v1886, %v2048
    %2050 = vdwg.mxu0
    %2051 = vmatprep.subr.mxu0 %v1778
    %2052 = vmatpush1.msra.mxu0 %v1777
    %2053 = vmatprep.subr.mxu0 %v1784
    %2054 = vmatpush1.msra.mxu0 %v1783
    %2055 = vmatprep.subr.mxu0 %v1790
    %2056 = vmatpush1.msra.mxu0 %v1789
    %2057 = vmatprep.subr.mxu0 %v1796
    %2058 = vmatpush1.msra.mxu0 %v1795
    %2059 = vmatprep.subr.mxu0 %v1802
    %2060 = vmatpush1.msra.mxu0 %v1801
    %2061 = vmatprep.subr.mxu0 %v1808
    %2062 = vmatpush1.msra.mxu0 %v1807
    %2063 = vmatprep.subr.mxu0 %v1814
    %2064 = vmatpush1.msra.mxu0 %v1813
    %2065 = vmatprep.subr.mxu0 %v1820
    %2066 = vmatpush1.msra.mxu0 %v1819
    %2067 = vmatprep.subr.mxu0 %v1826
    %2068 = vmatpush1.msra.mxu0 %v1825
    %2069 = vmatprep.subr.mxu0 %v1832
    %2070 = vmatpush1.msra.mxu0 %v1831
    %2071 = vmatprep.subr.mxu0 %v1838
    %2072 = vmatpush1.msra.mxu0 %v1837
    %2073 = vmatprep.subr.mxu0 %v1844
    %2074 = vmatpush1.msra.mxu0 %v1843
    %2075 = vmatprep.subr.mxu0 %v1850
    %2076 = vmatpush1.msra.mxu0 %v1849
    %2077 = vmatprep.subr.mxu0 %v1856
    %2078 = vmatpush1.msra.mxu0 %v1855
    %2079 = vmatprep.subr.mxu0 %v1862
    %2080 = vmatpush1.msra.mxu0 %v1861
    %2081 = vmatprep.subr.mxu0 %v1868
    %2082 = vmatpush1.msra.mxu0 %v1867
    %2083 = vmatprep.subr.mxu0 0.0
    %2084 = vmatpush1.msra.mxu0 0.0
    %2085 = vmatprep.subr.mxu0 0.0
    %2086 = vmatpush1.msra.mxu0 0.0
    %2087 = vmatprep.subr.mxu0 0.0
    %2088 = vmatpush1.msra.mxu0 0.0
    %2089 = vmatprep.subr.mxu0 0.0
    %2090 = vmatpush1.msra.mxu0 0.0
    %2091 = vmatprep.subr.mxu0 0.0
    %2092 = vmatpush1.msra.mxu0 0.0
    %2093 = vmatprep.subr.mxu0 0.0
    %2094 = vmatpush1.msra.mxu0 0.0
    %2095 = vmatprep.subr.mxu0 0.0
    %2096 = vmatpush1.msra.mxu0 0.0
    %2097 = vmatprep.subr.mxu0 0.0
    %2098 = vmatpush1.msra.mxu0 0.0
    %2099 = vmatprep.subr.mxu0 0.0
    %2100 = vmatpush1.msra.mxu0 0.0
    %2101 = vmatprep.subr.mxu0 0.0
    %2102 = vmatpush1.msra.mxu0 0.0
    %2103 = vmatprep.subr.mxu0 0.0
    %2104 = vmatpush1.msra.mxu0 0.0
    %2105 = vmatprep.subr.mxu0 0.0
    %2106 = vmatpush1.msra.mxu0 0.0
    %2107 = vmatprep.subr.mxu0 0.0
    %2108 = vmatpush1.msra.mxu0 0.0
    %2109 = vmatprep.subr.mxu0 0.0
    %2110 = vmatpush1.msra.mxu0 0.0
    %2111 = vmatprep.subr.mxu0 0.0
    %2112 = vmatpush1.msra.mxu0 0.0
    %2113 = vmatprep.subr.mxu0 0.0
    %2114 = vmatpush1.msra.mxu0 0.0
    %2115 = vmatprep.mubr.f32.mxu0 0.0
    %2116 = vmatmul.mubr.f32.gmra.mrb[0].mxu0 %v1763
    %v2117 = vpop.f32.mrb[0].mxu0
    %v2118 = vpop.f32.mrb[0].mxu0
    %2119 = vmatprep.mubr.f32.mxu0 0.0
    %2120 = vmatmul.mubr.f32.gmra.mrb[0].mxu0 %v1764
    %v2121 = vpop.f32.mrb[0].mxu0
    %v2122 = vadd.f32 %v1890, %v2121
    %v2123 = vpop.f32.mrb[0].mxu0
    %v2124 = vadd.f32 %v1894, %v2123
    %2125 = vdwg.mxu0
    %v2126 = vadd.f32 %v1767, %v1968
    %v2127 = vadd.f32 %v1770, %v2049
    %v2128 = vxor.u32 %v2126, 2147483648
    %v2129 = vxor.u32 %v2127, 2147483648
    %v2130 = vmul.f32 %v2128, 1.442695
    %v2131 = vpow.pop %v2130
    %v2132 = vmul.f32 %v2129, 1.442695
    %v2133 = vpow.pop %v2132
    %v2134 = vadd.f32 %v2131, 1.0
    %v2135 = vadd.f32 %v2133, 1.0
    %v2136 = vrcp.pop %v2134
    %v2137 = vmul.f32 1.0, %v2136
    %v2138 = vrcp.pop %v2135
    %v2139 = vmul.f32 1.0, %v2138
    %v2140 = vadd.f32 %v1768, %v1970
    %v2141 = vadd.f32 %v1771, %v2122
    %v2142 = vxor.u32 %v2140, 2147483648
    %v2143 = vxor.u32 %v2141, 2147483648
    %v2144 = vmul.f32 %v2142, 1.442695
    %v2145 = vpow.pop %v2144
    %v2146 = vmul.f32 %v2143, 1.442695
    %v2147 = vpow.pop %v2146
    %v2148 = vadd.f32 %v2145, 1.0
    %v2149 = vadd.f32 %v2147, 1.0
    %v2150 = vrcp.pop %v2148
    %v2151 = vmul.f32 1.0, %v2150
    %v2152 = vrcp.pop %v2149
    %v2153 = vmul.f32 1.0, %v2152
    %v2154 = vmul.f32 %v2137, %v2043
    %v2155 = vmul.f32 %v2139, %v2124
    %v2156 = vadd.f32 %v1769, %v2154
    %v2157 = vadd.f32 %v1772, %v2155
    %v2158 = vtanh.pop %v2156
    %v2159 = vtanh.pop %v2157
    %v2160 = vsub.f32 1.0, %v2151
    %v2161 = vsub.f32 1.0, %v2153
    %v2162 = vmul.f32 %v2160, %v2158
    %v2163 = vmul.f32 %v2161, %v2159
    %v2164 = vmul.f32 %v2151, %v1763
    %v2165 = vmul.f32 %v2153, %v1764
    %v2166 = vadd.f32 %v2162, %v2164
    %v2167 = vadd.f32 %v2163, %v2165
    %2168 = vst [vmem:[#allocation3 + $0x20] sm:$0xff] %v2166
    %2169 = vst [vmem:[#allocation3 + $0x58] sm:$0xff] %v2167
    %v2170 = vld [vmem:[#allocation2 + $0x90] sm:$0xff]
    %v2171 = vld [vmem:[#allocation2 + $0x98] sm:$0xff]
    %v2172 = vld [vmem:[#allocation2 + $0xa0] sm:$0xff]
    %v2173 = vld [vmem:[#allocation2 + $0xd8] sm:$0xff]
    %v2174 = vld [vmem:[#allocation2 + $0xe0] sm:$0xff]
    %v2175 = vld [vmem:[#allocation2 + $0xe8] sm:$0xff]
    %v2176 = vld [vmem:[#allocation11] sm:$0xff]
    %v2177 = vld [vmem:[#allocation11 + $0x8] sm:$0xff]
    %v2178 = vld [vmem:[#allocation11 + $0x10] sm:$0xff]
    %v2179 = vld [vmem:[#allocation11 + $0x18] sm:$0xff]
    %v2180 = vld [vmem:[#allocation11 + $0x20] sm:$0xff]
    %v2181 = vld [vmem:[#allocation11 + $0x28] sm:$0xff]
    %v2182 = vld [vmem:[#allocation11 + $0x30] sm:$0xff]
    %v2183 = vld [vmem:[#allocation11 + $0x38] sm:$0xff]
    %v2184 = vld [vmem:[#allocation11 + $0x40] sm:$0xff]
    %v2185 = vld [vmem:[#allocation11 + $0x48] sm:$0xff]
    %v2186 = vld [vmem:[#allocation11 + $0x50] sm:$0xff]
    %v2187 = vld [vmem:[#allocation11 + $0x58] sm:$0xff]
    %v2188 = vld [vmem:[#allocation11 + $0x60] sm:$0xff]
    %v2189 = vld [vmem:[#allocation11 + $0x68] sm:$0xff]
    %v2190 = vld [vmem:[#allocation11 + $0x70] sm:$0xff]
    %v2191 = vld [vmem:[#allocation11 + $0x78] sm:$0xff]
    %v2192 = vld [vmem:[#allocation11 + $0x80] sm:$0xff]
    %v2193 = vld [vmem:[#allocation11 + $0x88] sm:$0xff]
    %v2194 = vld [vmem:[#allocation11 + $0x90] sm:$0xff]
    %v2195 = vld [vmem:[#allocation11 + $0x98] sm:$0xff]
    %v2196 = vld [vmem:[#allocation11 + $0xa0] sm:$0xff]
    %v2197 = vld [vmem:[#allocation11 + $0xa8] sm:$0xff]
    %v2198 = vld [vmem:[#allocation11 + $0xb0] sm:$0xff]
    %v2199 = vld [vmem:[#allocation11 + $0xb8] sm:$0xff]
    %v2200 = vld [vmem:[#allocation11 + $0xc0] sm:$0xff]
    %v2201 = vld [vmem:[#allocation11 + $0xc8] sm:$0xff]
    %v2202 = vld [vmem:[#allocation11 + $0xd0] sm:$0xff]
    %v2203 = vld [vmem:[#allocation11 + $0xd8] sm:$0xff]
    %v2204 = vld [vmem:[#allocation11 + $0xe0] sm:$0xff]
    %v2205 = vld [vmem:[#allocation11 + $0xe8] sm:$0xff]
    %v2206 = vld [vmem:[#allocation11 + $0xf0] sm:$0xff]
    %v2207 = vld [vmem:[#allocation11 + $0xf8] sm:$0xff]
    %v2208 = vld [vmem:[#allocation11 + $0x100] sm:$0xff]
    %v2209 = vld [vmem:[#allocation11 + $0x108] sm:$0xff]
    %v2210 = vld [vmem:[#allocation11 + $0x110] sm:$0xff]
    %v2211 = vld [vmem:[#allocation11 + $0x118] sm:$0xff]
    %v2212 = vld [vmem:[#allocation11 + $0x120] sm:$0xff]
    %v2213 = vld [vmem:[#allocation11 + $0x128] sm:$0xff]
    %v2214 = vld [vmem:[#allocation11 + $0x130] sm:$0xff]
    %v2215 = vld [vmem:[#allocation11 + $0x138] sm:$0xff]
    %v2216 = vld [vmem:[#allocation11 + $0x140] sm:$0xff]
    %v2217 = vld [vmem:[#allocation11 + $0x148] sm:$0xff]
    %v2218 = vld [vmem:[#allocation11 + $0x150] sm:$0xff]
    %v2219 = vld [vmem:[#allocation11 + $0x158] sm:$0xff]
    %v2220 = vld [vmem:[#allocation11 + $0x160] sm:$0xff]
    %v2221 = vld [vmem:[#allocation11 + $0x168] sm:$0xff]
    %v2222 = vld [vmem:[#allocation11 + $0x170] sm:$0xff]
    %v2223 = vld [vmem:[#allocation11 + $0x178] sm:$0xff]
    %v2224 = vld [vmem:[#allocation11 + $0x180] sm:$0xff]
    %v2225 = vld [vmem:[#allocation11 + $0x188] sm:$0xff]
    %v2226 = vld [vmem:[#allocation11 + $0x190] sm:$0xff]
    %v2227 = vld [vmem:[#allocation11 + $0x198] sm:$0xff]
    %v2228 = vld [vmem:[#allocation11 + $0x1a0] sm:$0xff]
    %v2229 = vld [vmem:[#allocation11 + $0x1a8] sm:$0xff]
    %v2230 = vld [vmem:[#allocation11 + $0x1b0] sm:$0xff]
    %v2231 = vld [vmem:[#allocation11 + $0x1b8] sm:$0xff]
    %v2232 = vld [vmem:[#allocation11 + $0x1c0] sm:$0xff]
    %v2233 = vld [vmem:[#allocation11 + $0x1c8] sm:$0xff]
    %v2234 = vld [vmem:[#allocation11 + $0x1d0] sm:$0xff]
    %v2235 = vld [vmem:[#allocation11 + $0x1d8] sm:$0xff]
    %v2236 = vld [vmem:[#allocation11 + $0x1e0] sm:$0xff]
    %v2237 = vld [vmem:[#allocation11 + $0x1e8] sm:$0xff]
    %v2238 = vld [vmem:[#allocation11 + $0x1f0] sm:$0xff]
    %v2239 = vld [vmem:[#allocation11 + $0x1f8] sm:$0xff]
    %v2240 = vld [vmem:[#allocation11 + $0x200] sm:$0xff]
    %v2241 = vld [vmem:[#allocation11 + $0x208] sm:$0xff]
    %v2242 = vld [vmem:[#allocation11 + $0x210] sm:$0xff]
    %v2243 = vld [vmem:[#allocation11 + $0x218] sm:$0xff]
    %v2244 = vld [vmem:[#allocation11 + $0x220] sm:$0xff]
    %v2245 = vld [vmem:[#allocation11 + $0x228] sm:$0xff]
    %v2246 = vld [vmem:[#allocation11 + $0x230] sm:$0xff]
    %v2247 = vld [vmem:[#allocation11 + $0x238] sm:$0xff]
    %v2248 = vld [vmem:[#allocation11 + $0x240] sm:$0xff]
    %v2249 = vld [vmem:[#allocation11 + $0x248] sm:$0xff]
    %v2250 = vld [vmem:[#allocation11 + $0x250] sm:$0xff]
    %v2251 = vld [vmem:[#allocation11 + $0x258] sm:$0xff]
    %v2252 = vld [vmem:[#allocation11 + $0x260] sm:$0xff]
    %v2253 = vld [vmem:[#allocation11 + $0x268] sm:$0xff]
    %v2254 = vld [vmem:[#allocation11 + $0x270] sm:$0xff]
    %v2255 = vld [vmem:[#allocation11 + $0x278] sm:$0xff]
    %v2256 = vld [vmem:[#allocation11 + $0x280] sm:$0xff]
    %v2257 = vld [vmem:[#allocation11 + $0x288] sm:$0xff]
    %v2258 = vld [vmem:[#allocation11 + $0x290] sm:$0xff]
    %v2259 = vld [vmem:[#allocation11 + $0x298] sm:$0xff]
    %v2260 = vld [vmem:[#allocation11 + $0x2a0] sm:$0xff]
    %v2261 = vld [vmem:[#allocation11 + $0x2a8] sm:$0xff]
    %v2262 = vld [vmem:[#allocation11 + $0x2b0] sm:$0xff]
    %v2263 = vld [vmem:[#allocation11 + $0x2b8] sm:$0xff]
    %v2264 = vld [vmem:[#allocation11 + $0x2c0] sm:$0xff]
    %v2265 = vld [vmem:[#allocation11 + $0x2c8] sm:$0xff]
    %v2266 = vld [vmem:[#allocation11 + $0x2d0] sm:$0xff]
    %v2267 = vld [vmem:[#allocation11 + $0x2d8] sm:$0xff]
    %v2268 = vld [vmem:[#allocation11 + $0x2e0] sm:$0xff]
    %v2269 = vld [vmem:[#allocation11 + $0x2e8] sm:$0xff]
    %v2270 = vld [vmem:[#allocation11 + $0x2f0] sm:$0xff]
    %v2271 = vld [vmem:[#allocation11 + $0x2f8] sm:$0xff]
    %v2272 = vld [vmem:[#allocation12] sm:$0x3f]
    %v2274 = vlaneseq
    %v2275 = vshrl.u32 %v2274, 7
    %v2276 = vsub.s32 0, %v2275
    %v2277 = vrot.slane %v2272, %v2276
    %v2278 = vlaneseq
    %v2279 = vshrl.u32 %v2278, 7
    %v2280 = vsub.s32 1, %v2279
    %v2281 = vrot.slane %v2272, %v2280
    %v2282 = vlaneseq
    %v2283 = vshrl.u32 %v2282, 7
    %v2284 = vsub.s32 2, %v2283
    %v2285 = vrot.slane %v2272, %v2284
    %v2286 = vlaneseq
    %v2287 = vshrl.u32 %v2286, 7
    %v2288 = vsub.s32 3, %v2287
    %v2289 = vrot.slane %v2272, %v2288
    %v2290 = vlaneseq
    %v2291 = vshrl.u32 %v2290, 7
    %v2292 = vsub.s32 4, %v2291
    %v2293 = vrot.slane %v2272, %v2292
    %v2294 = vlaneseq
    %v2295 = vshrl.u32 %v2294, 7
    %v2296 = vsub.s32 5, %v2295
    %v2297 = vrot.slane %v2272, %v2296
    %2304 = vmatprep.subr.mxu0 %v2177
    %2305 = vmatpush1.msra.mxu0 %v2176
    %2306 = vmatprep.subr.mxu0 %v2183
    %2307 = vmatpush1.msra.mxu0 %v2182
    %2308 = vmatprep.subr.mxu0 %v2189
    %2309 = vmatpush1.msra.mxu0 %v2188
    %2310 = vmatprep.subr.mxu0 %v2195
    %2311 = vmatpush1.msra.mxu0 %v2194
    %2312 = vmatprep.subr.mxu0 %v2201
    %2313 = vmatpush1.msra.mxu0 %v2200
    %2314 = vmatprep.subr.mxu0 %v2207
    %2315 = vmatpush1.msra.mxu0 %v2206
    %2316 = vmatprep.subr.mxu0 %v2213
    %2317 = vmatpush1.msra.mxu0 %v2212
    %2318 = vmatprep.subr.mxu0 %v2219
    %2319 = vmatpush1.msra.mxu0 %v2218
    %2320 = vmatprep.subr.mxu0 %v2225
    %2321 = vmatpush1.msra.mxu0 %v2224
    %2322 = vmatprep.subr.mxu0 %v2231
    %2323 = vmatpush1.msra.mxu0 %v2230
    %2324 = vmatprep.subr.mxu0 %v2237
    %2325 = vmatpush1.msra.mxu0 %v2236
    %2326 = vmatprep.subr.mxu0 %v2243
    %2327 = vmatpush1.msra.mxu0 %v2242
    %2328 = vmatprep.subr.mxu0 %v2249
    %2329 = vmatpush1.msra.mxu0 %v2248
    %2330 = vmatprep.subr.mxu0 %v2255
    %2331 = vmatpush1.msra.mxu0 %v2254
    %2332 = vmatprep.subr.mxu0 %v2261
    %2333 = vmatpush1.msra.mxu0 %v2260
    %2334 = vmatprep.subr.mxu0 %v2267
    %2335 = vmatpush1.msra.mxu0 %v2266
    %2336 = vmatprep.subr.mxu0 0.0
    %2337 = vmatpush1.msra.mxu0 0.0
    %2338 = vmatprep.subr.mxu0 0.0
    %2339 = vmatpush1.msra.mxu0 0.0
    %2340 = vmatprep.subr.mxu0 0.0
    %2341 = vmatpush1.msra.mxu0 0.0
    %2342 = vmatprep.subr.mxu0 0.0
    %2343 = vmatpush1.msra.mxu0 0.0
    %2344 = vmatprep.subr.mxu0 0.0
    %2345 = vmatpush1.msra.mxu0 0.0
    %2346 = vmatprep.subr.mxu0 0.0
    %2347 = vmatpush1.msra.mxu0 0.0
    %2348 = vmatprep.subr.mxu0 0.0
    %2349 = vmatpush1.msra.mxu0 0.0
    %2350 = vmatprep.subr.mxu0 0.0
    %2351 = vmatpush1.msra.mxu0 0.0
    %2352 = vmatprep.subr.mxu0 0.0
    %2353 = vmatpush1.msra.mxu0 0.0
    %2354 = vmatprep.subr.mxu0 0.0
    %2355 = vmatpush1.msra.mxu0 0.0
    %2356 = vmatprep.subr.mxu0 0.0
    %2357 = vmatpush1.msra.mxu0 0.0
    %2358 = vmatprep.subr.mxu0 0.0
    %2359 = vmatpush1.msra.mxu0 0.0
    %2360 = vmatprep.subr.mxu0 0.0
    %2361 = vmatpush1.msra.mxu0 0.0
    %2362 = vmatprep.subr.mxu0 0.0
    %2363 = vmatpush1.msra.mxu0 0.0
    %2364 = vmatprep.subr.mxu0 0.0
    %2365 = vmatpush1.msra.mxu0 0.0
    %2366 = vmatprep.subr.mxu0 0.0
    %2367 = vmatpush1.msra.mxu0 0.0
    %2368 = vmatprep.mubr.f32.mxu0 0.0
    %2369 = vmatmul.mubr.f32.gmra.mrb[0].mxu0 %v2166
    %v2370 = vpop.f32.mrb[0].mxu0
    %v2371 = vadd.f32 %v2277, %v2370
    %v2372 = vpop.f32.mrb[0].mxu0
    %v2373 = vadd.f32 %v2281, %v2372
    %2374 = vmatprep.mubr.f32.mxu0 0.0
    %2375 = vmatmul.mubr.f32.gmra.mrb[0].mxu0 %v2167
    %v2376 = vpop.f32.mrb[0].mxu0
    %v2377 = vpop.f32.mrb[0].mxu0
    %2378 = vdwg.mxu0
    %2379 = vmatprep.subr.mxu0 %v2179
    %2380 = vmatpush1.msra.mxu0 %v2178
    %2381 = vmatprep.subr.mxu0 %v2185
    %2382 = vmatpush1.msra.mxu0 %v2184
    %2383 = vmatprep.subr.mxu0 %v2191
    %2384 = vmatpush1.msra.mxu0 %v2190
    %2385 = vmatprep.subr.mxu0 %v2197
    %2386 = vmatpush1.msra.mxu0 %v2196
    %2387 = vmatprep.subr.mxu0 %v2203
    %2388 = vmatpush1.msra.mxu0 %v2202
    %2389 = vmatprep.subr.mxu0 %v2209
    %2390 = vmatpush1.msra.mxu0 %v2208
    %2391 = vmatprep.subr.mxu0 %v2215
    %2392 = vmatpush1.msra.mxu0 %v2214
    %2393 = vmatprep.subr.mxu0 %v2221
    %2394 = vmatpush1.msra.mxu0 %v2220
    %2395 = vmatprep.subr.mxu0 %v2227
    %2396 = vmatpush1.msra.mxu0 %v2226
    %2397 = vmatprep.subr.mxu0 %v2233
    %2398 = vmatpush1.msra.mxu0 %v2232
    %2399 = vmatprep.subr.mxu0 %v2239
    %2400 = vmatpush1.msra.mxu0 %v2238
    %2401 = vmatprep.subr.mxu0 %v2245
    %2402 = vmatpush1.msra.mxu0 %v2244
    %2403 = vmatprep.subr.mxu0 %v2251
    %2404 = vmatpush1.msra.mxu0 %v2250
    %2405 = vmatprep.subr.mxu0 %v2257
    %2406 = vmatpush1.msra.mxu0 %v2256
    %2407 = vmatprep.subr.mxu0 %v2263
    %2408 = vmatpush1.msra.mxu0 %v2262
    %2409 = vmatprep.subr.mxu0 %v2269
    %2410 = vmatpush1.msra.mxu0 %v2268
    %2411 = vmatprep.subr.mxu0 0.0
    %2412 = vmatpush1.msra.mxu0 0.0
    %2413 = vmatprep.subr.mxu0 0.0
    %2414 = vmatpush1.msra.mxu0 0.0
    %2415 = vmatprep.subr.mxu0 0.0
    %2416 = vmatpush1.msra.mxu0 0.0
    %2417 = vmatprep.subr.mxu0 0.0
    %2418 = vmatpush1.msra.mxu0 0.0
    %2419 = vmatprep.subr.mxu0 0.0
    %2420 = vmatpush1.msra.mxu0 0.0
    %2421 = vmatprep.subr.mxu0 0.0
    %2422 = vmatpush1.msra.mxu0 0.0
    %2423 = vmatprep.subr.mxu0 0.0
    %2424 = vmatpush1.msra.mxu0 0.0
    %2425 = vmatprep.subr.mxu0 0.0
    %2426 = vmatpush1.msra.mxu0 0.0
    %2427 = vmatprep.subr.mxu0 0.0
    %2428 = vmatpush1.msra.mxu0 0.0
    %2429 = vmatprep.subr.mxu0 0.0
    %2430 = vmatpush1.msra.mxu0 0.0
    %2431 = vmatprep.subr.mxu0 0.0
    %2432 = vmatpush1.msra.mxu0 0.0
    %2433 = vmatprep.subr.mxu0 0.0
    %2434 = vmatpush1.msra.mxu0 0.0
    %2435 = vmatprep.subr.mxu0 0.0
    %2436 = vmatpush1.msra.mxu0 0.0
    %2437 = vmatprep.subr.mxu0 0.0
    %2438 = vmatpush1.msra.mxu0 0.0
    %2439 = vmatprep.subr.mxu0 0.0
    %2440 = vmatpush1.msra.mxu0 0.0
    %2441 = vmatprep.subr.mxu0 0.0
    %2442 = vmatpush1.msra.mxu0 0.0
    %2443 = vmatprep.mubr.f32.mxu0 0.0
    %2444 = vmatmul.mubr.f32.gmra.mrb[0].mxu0 %v2166
    %v2445 = vpop.f32.mrb[0].mxu0
    %v2446 = vadd.f32 %v2285, %v2445
    %v2447 = vpop.f32.mrb[0].mxu0
    %2448 = vmatprep.mubr.f32.mxu0 0.0
    %2449 = vmatmul.mubr.f32.gmra.mrb[0].mxu0 %v2167
    %v2450 = vpop.f32.mrb[0].mxu0
    %v2451 = vpop.f32.mrb[0].mxu0
    %v2452 = vadd.f32 %v2289, %v2451
    %2453 = vdwg.mxu0
    %2454 = vmatprep.subr.mxu0 %v2181
    %2455 = vmatpush1.msra.mxu0 %v2180
    %2456 = vmatprep.subr.mxu0 %v2187
    %2457 = vmatpush1.msra.mxu0 %v2186
    %2458 = vmatprep.subr.mxu0 %v2193
    %2459 = vmatpush1.msra.mxu0 %v2192
    %2460 = vmatprep.subr.mxu0 %v2199
    %2461 = vmatpush1.msra.mxu0 %v2198
    %2462 = vmatprep.subr.mxu0 %v2205
    %2463 = vmatpush1.msra.mxu0 %v2204
    %2464 = vmatprep.subr.mxu0 %v2211
    %2465 = vmatpush1.msra.mxu0 %v2210
    %2466 = vmatprep.subr.mxu0 %v2217
    %2467 = vmatpush1.msra.mxu0 %v2216
    %2468 = vmatprep.subr.mxu0 %v2223
    %2469 = vmatpush1.msra.mxu0 %v2222
    %2470 = vmatprep.subr.mxu0 %v2229
    %2471 = vmatpush1.msra.mxu0 %v2228
    %2472 = vmatprep.subr.mxu0 %v2235
    %2473 = vmatpush1.msra.mxu0 %v2234
    %2474 = vmatprep.subr.mxu0 %v2241
    %2475 = vmatpush1.msra.mxu0 %v2240
    %2476 = vmatprep.subr.mxu0 %v2247
    %2477 = vmatpush1.msra.mxu0 %v2246
    %2478 = vmatprep.subr.mxu0 %v2253
    %2479 = vmatpush1.msra.mxu0 %v2252
    %2480 = vmatprep.subr.mxu0 %v2259
    %2481 = vmatpush1.msra.mxu0 %v2258
    %2482 = vmatprep.subr.mxu0 %v2265
    %2483 = vmatpush1.msra.mxu0 %v2264
    %2484 = vmatprep.subr.mxu0 %v2271
    %2485 = vmatpush1.msra.mxu0 %v2270
    %2486 = vmatprep.subr.mxu0 0.0
    %2487 = vmatpush1.msra.mxu0 0.0
    %2488 = vmatprep.subr.mxu0 0.0
    %2489 = vmatpush1.msra.mxu0 0.0
    %2490 = vmatprep.subr.mxu0 0.0
    %2491 = vmatpush1.msra.mxu0 0.0
    %2492 = vmatprep.subr.mxu0 0.0
    %2493 = vmatpush1.msra.mxu0 0.0
    %2494 = vmatprep.subr.mxu0 0.0
    %2495 = vmatpush1.msra.mxu0 0.0
    %2496 = vmatprep.subr.mxu0 0.0
    %2497 = vmatpush1.msra.mxu0 0.0
    %2498 = vmatprep.subr.mxu0 0.0
    %2499 = vmatpush1.msra.mxu0 0.0
    %2500 = vmatprep.subr.mxu0 0.0
    %2501 = vmatpush1.msra.mxu0 0.0
    %2502 = vmatprep.subr.mxu0 0.0
    %2503 = vmatpush1.msra.mxu0 0.0
    %2504 = vmatprep.subr.mxu0 0.0
    %2505 = vmatpush1.msra.mxu0 0.0
    %2506 = vmatprep.subr.mxu0 0.0
    %2507 = vmatpush1.msra.mxu0 0.0
    %2508 = vmatprep.subr.mxu0 0.0
    %2509 = vmatpush1.msra.mxu0 0.0
    %2510 = vmatprep.subr.mxu0 0.0
    %2511 = vmatpush1.msra.mxu0 0.0
    %2512 = vmatprep.subr.mxu0 0.0
    %2513 = vmatpush1.msra.mxu0 0.0
    %2514 = vmatprep.subr.mxu0 0.0
    %2515 = vmatpush1.msra.mxu0 0.0
    %2516 = vmatprep.subr.mxu0 0.0
    %2517 = vmatpush1.msra.mxu0 0.0
    %2518 = vmatprep.mubr.f32.mxu0 0.0
    %2519 = vmatmul.mubr.f32.gmra.mrb[0].mxu0 %v2166
    %v2520 = vpop.f32.mrb[0].mxu0
    %v2521 = vpop.f32.mrb[0].mxu0
    %2522 = vmatprep.mubr.f32.mxu0 0.0
    %2523 = vmatmul.mubr.f32.gmra.mrb[0].mxu0 %v2167
    %v2524 = vpop.f32.mrb[0].mxu0
    %v2525 = vadd.f32 %v2293, %v2524
    %v2526 = vpop.f32.mrb[0].mxu0
    %v2527 = vadd.f32 %v2297, %v2526
    %2528 = vdwg.mxu0
    %v2529 = vadd.f32 %v2170, %v2371
    %v2530 = vadd.f32 %v2173, %v2452
    %v2531 = vxor.u32 %v2529, 2147483648
    %v2532 = vxor.u32 %v2530, 2147483648
    %v2533 = vmul.f32 %v2531, 1.442695
    %v2534 = vpow.pop %v2533
    %v2535 = vmul.f32 %v2532, 1.442695
    %v2536 = vpow.pop %v2535
    %v2537 = vadd.f32 %v2534, 1.0
    %v2538 = vadd.f32 %v2536, 1.0
    %v2539 = vrcp.pop %v2537
    %v2540 = vmul.f32 1.0, %v2539
    %v2541 = vrcp.pop %v2538
    %v2542 = vmul.f32 1.0, %v2541
    %v2543 = vadd.f32 %v2171, %v2373
    %v2544 = vadd.f32 %v2174, %v2525
    %v2545 = vxor.u32 %v2543, 2147483648
    %v2546 = vxor.u32 %v2544, 2147483648
    %v2547 = vmul.f32 %v2545, 1.442695
    %v2548 = vpow.pop %v2547
    %v2549 = vmul.f32 %v2546, 1.442695
    %v2550 = vpow.pop %v2549
    %v2551 = vadd.f32 %v2548, 1.0
    %v2552 = vadd.f32 %v2550, 1.0
    %v2553 = vrcp.pop %v2551
    %v2554 = vmul.f32 1.0, %v2553
    %v2555 = vrcp.pop %v2552
    %v2556 = vmul.f32 1.0, %v2555
    %v2557 = vmul.f32 %v2540, %v2446
    %v2558 = vmul.f32 %v2542, %v2527
    %v2559 = vadd.f32 %v2172, %v2557
    %v2560 = vadd.f32 %v2175, %v2558
    %v2561 = vtanh.pop %v2559
    %v2562 = vtanh.pop %v2560
    %v2563 = vsub.f32 1.0, %v2554
    %v2564 = vsub.f32 1.0, %v2556
    %v2565 = vmul.f32 %v2563, %v2561
    %v2566 = vmul.f32 %v2564, %v2562
    %v2567 = vmul.f32 %v2554, %v2166
    %v2568 = vmul.f32 %v2556, %v2167
    %v2569 = vadd.f32 %v2565, %v2567
    %v2570 = vadd.f32 %v2566, %v2568
    %2571 = vst [vmem:[#allocation3 + $0x30] sm:$0xff] %v2569
    %2572 = vst [vmem:[#allocation3 + $0x48] sm:$0xff] %v2570
    %v2573 = vld [vmem:[#allocation2 + $0xc0] sm:$0xff]
    %v2574 = vld [vmem:[#allocation2 + $0xc8] sm:$0xff]
    %v2575 = vld [vmem:[#allocation2 + $0xd0] sm:$0xff]
    %v2576 = vld [vmem:[#allocation2 + $0xa8] sm:$0xff]
    %v2577 = vld [vmem:[#allocation2 + $0xb0] sm:$0xff]
    %v2578 = vld [vmem:[#allocation2 + $0xb8] sm:$0xff]
    %v2579 = vld [vmem:[#allocation11] sm:$0xff]
    %v2580 = vld [vmem:[#allocation11 + $0x8] sm:$0xff]
    %v2581 = vld [vmem:[#allocation11 + $0x10] sm:$0xff]
    %v2582 = vld [vmem:[#allocation11 + $0x18] sm:$0xff]
    %v2583 = vld [vmem:[#allocation11 + $0x20] sm:$0xff]
    %v2584 = vld [vmem:[#allocation11 + $0x28] sm:$0xff]
    %v2585 = vld [vmem:[#allocation11 + $0x30] sm:$0xff]
    %v2586 = vld [vmem:[#allocation11 + $0x38] sm:$0xff]
    %v2587 = vld [vmem:[#allocation11 + $0x40] sm:$0xff]
    %v2588 = vld [vmem:[#allocation11 + $0x48] sm:$0xff]
    %v2589 = vld [vmem:[#allocation11 + $0x50] sm:$0xff]
    %v2590 = vld [vmem:[#allocation11 + $0x58] sm:$0xff]
    %v2591 = vld [vmem:[#allocation11 + $0x60] sm:$0xff]
    %v2592 = vld [vmem:[#allocation11 + $0x68] sm:$0xff]
    %v2593 = vld [vmem:[#allocation11 + $0x70] sm:$0xff]
    %v2594 = vld [vmem:[#allocation11 + $0x78] sm:$0xff]
    %v2595 = vld [vmem:[#allocation11 + $0x80] sm:$0xff]
    %v2596 = vld [vmem:[#allocation11 + $0x88] sm:$0xff]
    %v2597 = vld [vmem:[#allocation11 + $0x90] sm:$0xff]
    %v2598 = vld [vmem:[#allocation11 + $0x98] sm:$0xff]
    %v2599 = vld [vmem:[#allocation11 + $0xa0] sm:$0xff]
    %v2600 = vld [vmem:[#allocation11 + $0xa8] sm:$0xff]
    %v2601 = vld [vmem:[#allocation11 + $0xb0] sm:$0xff]
    %v2602 = vld [vmem:[#allocation11 + $0xb8] sm:$0xff]
    %v2603 = vld [vmem:[#allocation11 + $0xc0] sm:$0xff]
    %v2604 = vld [vmem:[#allocation11 + $0xc8] sm:$0xff]
    %v2605 = vld [vmem:[#allocation11 + $0xd0] sm:$0xff]
    %v2606 = vld [vmem:[#allocation11 + $0xd8] sm:$0xff]
    %v2607 = vld [vmem:[#allocation11 + $0xe0] sm:$0xff]
    %v2608 = vld [vmem:[#allocation11 + $0xe8] sm:$0xff]
    %v2609 = vld [vmem:[#allocation11 + $0xf0] sm:$0xff]
    %v2610 = vld [vmem:[#allocation11 + $0xf8] sm:$0xff]
    %v2611 = vld [vmem:[#allocation11 + $0x100] sm:$0xff]
    %v2612 = vld [vmem:[#allocation11 + $0x108] sm:$0xff]
    %v2613 = vld [vmem:[#allocation11 + $0x110] sm:$0xff]
    %v2614 = vld [vmem:[#allocation11 + $0x118] sm:$0xff]
    %v2615 = vld [vmem:[#allocation11 + $0x120] sm:$0xff]
    %v2616 = vld [vmem:[#allocation11 + $0x128] sm:$0xff]
    %v2617 = vld [vmem:[#allocation11 + $0x130] sm:$0xff]
    %v2618 = vld [vmem:[#allocation11 + $0x138] sm:$0xff]
    %v2619 = vld [vmem:[#allocation11 + $0x140] sm:$0xff]
    %v2620 = vld [vmem:[#allocation11 + $0x148] sm:$0xff]
    %v2621 = vld [vmem:[#allocation11 + $0x150] sm:$0xff]
    %v2622 = vld [vmem:[#allocation11 + $0x158] sm:$0xff]
    %v2623 = vld [vmem:[#allocation11 + $0x160] sm:$0xff]
    %v2624 = vld [vmem:[#allocation11 + $0x168] sm:$0xff]
    %v2625 = vld [vmem:[#allocation11 + $0x170] sm:$0xff]
    %v2626 = vld [vmem:[#allocation11 + $0x178] sm:$0xff]
    %v2627 = vld [vmem:[#allocation11 + $0x180] sm:$0xff]
    %v2628 = vld [vmem:[#allocation11 + $0x188] sm:$0xff]
    %v2629 = vld [vmem:[#allocation11 + $0x190] sm:$0xff]
    %v2630 = vld [vmem:[#allocation11 + $0x198] sm:$0xff]
    %v2631 = vld [vmem:[#allocation11 + $0x1a0] sm:$0xff]
    %v2632 = vld [vmem:[#allocation11 + $0x1a8] sm:$0xff]
    %v2633 = vld [vmem:[#allocation11 + $0x1b0] sm:$0xff]
    %v2634 = vld [vmem:[#allocation11 + $0x1b8] sm:$0xff]
    %v2635 = vld [vmem:[#allocation11 + $0x1c0] sm:$0xff]
    %v2636 = vld [vmem:[#allocation11 + $0x1c8] sm:$0xff]
    %v2637 = vld [vmem:[#allocation11 + $0x1d0] sm:$0xff]
    %v2638 = vld [vmem:[#allocation11 + $0x1d8] sm:$0xff]
    %v2639 = vld [vmem:[#allocation11 + $0x1e0] sm:$0xff]
    %v2640 = vld [vmem:[#allocation11 + $0x1e8] sm:$0xff]
    %v2641 = vld [vmem:[#allocation11 + $0x1f0] sm:$0xff]
    %v2642 = vld [vmem:[#allocation11 + $0x1f8] sm:$0xff]
    %v2643 = vld [vmem:[#allocation11 + $0x200] sm:$0xff]
    %v2644 = vld [vmem:[#allocation11 + $0x208] sm:$0xff]
    %v2645 = vld [vmem:[#allocation11 + $0x210] sm:$0xff]
    %v2646 = vld [vmem:[#allocation11 + $0x218] sm:$0xff]
    %v2647 = vld [vmem:[#allocation11 + $0x220] sm:$0xff]
    %v2648 = vld [vmem:[#allocation11 + $0x228] sm:$0xff]
    %v2649 = vld [vmem:[#allocation11 + $0x230] sm:$0xff]
    %v2650 = vld [vmem:[#allocation11 + $0x238] sm:$0xff]
    %v2651 = vld [vmem:[#allocation11 + $0x240] sm:$0xff]
    %v2652 = vld [vmem:[#allocation11 + $0x248] sm:$0xff]
    %v2653 = vld [vmem:[#allocation11 + $0x250] sm:$0xff]
    %v2654 = vld [vmem:[#allocation11 + $0x258] sm:$0xff]
    %v2655 = vld [vmem:[#allocation11 + $0x260] sm:$0xff]
    %v2656 = vld [vmem:[#allocation11 + $0x268] sm:$0xff]
    %v2657 = vld [vmem:[#allocation11 + $0x270] sm:$0xff]
    %v2658 = vld [vmem:[#allocation11 + $0x278] sm:$0xff]
    %v2659 = vld [vmem:[#allocation11 + $0x280] sm:$0xff]
    %v2660 = vld [vmem:[#allocation11 + $0x288] sm:$0xff]
    %v2661 = vld [vmem:[#allocation11 + $0x290] sm:$0xff]
    %v2662 = vld [vmem:[#allocation11 + $0x298] sm:$0xff]
    %v2663 = vld [vmem:[#allocation11 + $0x2a0] sm:$0xff]
    %v2664 = vld [vmem:[#allocation11 + $0x2a8] sm:$0xff]
    %v2665 = vld [vmem:[#allocation11 + $0x2b0] sm:$0xff]
    %v2666 = vld [vmem:[#allocation11 + $0x2b8] sm:$0xff]
    %v2667 = vld [vmem:[#allocation11 + $0x2c0] sm:$0xff]
    %v2668 = vld [vmem:[#allocation11 + $0x2c8] sm:$0xff]
    %v2669 = vld [vmem:[#allocation11 + $0x2d0] sm:$0xff]
    %v2670 = vld [vmem:[#allocation11 + $0x2d8] sm:$0xff]
    %v2671 = vld [vmem:[#allocation11 + $0x2e0] sm:$0xff]
    %v2672 = vld [vmem:[#allocation11 + $0x2e8] sm:$0xff]
    %v2673 = vld [vmem:[#allocation11 + $0x2f0] sm:$0xff]
    %v2674 = vld [vmem:[#allocation11 + $0x2f8] sm:$0xff]
    %v2675 = vld [vmem:[#allocation12] sm:$0x3f]
    %v2677 = vlaneseq
    %v2678 = vshrl.u32 %v2677, 7
    %v2679 = vsub.s32 0, %v2678
    %v2680 = vrot.slane %v2675, %v2679
    %v2681 = vlaneseq
    %v2682 = vshrl.u32 %v2681, 7
    %v2683 = vsub.s32 1, %v2682
    %v2684 = vrot.slane %v2675, %v2683
    %v2685 = vlaneseq
    %v2686 = vshrl.u32 %v2685, 7
    %v2687 = vsub.s32 2, %v2686
    %v2688 = vrot.slane %v2675, %v2687
    %v2689 = vlaneseq
    %v2690 = vshrl.u32 %v2689, 7
    %v2691 = vsub.s32 3, %v2690
    %v2692 = vrot.slane %v2675, %v2691
    %v2693 = vlaneseq
    %v2694 = vshrl.u32 %v2693, 7
    %v2695 = vsub.s32 4, %v2694
    %v2696 = vrot.slane %v2675, %v2695
    %v2697 = vlaneseq
    %v2698 = vshrl.u32 %v2697, 7
    %v2699 = vsub.s32 5, %v2698
    %v2700 = vrot.slane %v2675, %v2699
    %2707 = vmatprep.subr.mxu0 %v2580
    %2708 = vmatpush1.msra.mxu0 %v2579
    %2709 = vmatprep.subr.mxu0 %v2586
    %2710 = vmatpush1.msra.mxu0 %v2585
    %2711 = vmatprep.subr.mxu0 %v2592
    %2712 = vmatpush1.msra.mxu0 %v2591
    %2713 = vmatprep.subr.mxu0 %v2598
    %2714 = vmatpush1.msra.mxu0 %v2597
    %2715 = vmatprep.subr.mxu0 %v2604
    %2716 = vmatpush1.msra.mxu0 %v2603
    %2717 = vmatprep.subr.mxu0 %v2610
    %2718 = vmatpush1.msra.mxu0 %v2609
    %2719 = vmatprep.subr.mxu0 %v2616
    %2720 = vmatpush1.msra.mxu0 %v2615
    %2721 = vmatprep.subr.mxu0 %v2622
    %2722 = vmatpush1.msra.mxu0 %v2621
    %2723 = vmatprep.subr.mxu0 %v2628
    %2724 = vmatpush1.msra.mxu0 %v2627
    %2725 = vmatprep.subr.mxu0 %v2634
    %2726 = vmatpush1.msra.mxu0 %v2633
    %2727 = vmatprep.subr.mxu0 %v2640
    %2728 = vmatpush1.msra.mxu0 %v2639
    %2729 = vmatprep.subr.mxu0 %v2646
    %2730 = vmatpush1.msra.mxu0 %v2645
    %2731 = vmatprep.subr.mxu0 %v2652
    %2732 = vmatpush1.msra.mxu0 %v2651
    %2733 = vmatprep.subr.mxu0 %v2658
    %2734 = vmatpush1.msra.mxu0 %v2657
    %2735 = vmatprep.subr.mxu0 %v2664
    %2736 = vmatpush1.msra.mxu0 %v2663
    %2737 = vmatprep.subr.mxu0 %v2670
    %2738 = vmatpush1.msra.mxu0 %v2669
    %2739 = vmatprep.subr.mxu0 0.0
    %2740 = vmatpush1.msra.mxu0 0.0
    %2741 = vmatprep.subr.mxu0 0.0
    %2742 = vmatpush1.msra.mxu0 0.0
    %2743 = vmatprep.subr.mxu0 0.0
    %2744 = vmatpush1.msra.mxu0 0.0
    %2745 = vmatprep.subr.mxu0 0.0
    %2746 = vmatpush1.msra.mxu0 0.0
    %2747 = vmatprep.subr.mxu0 0.0
    %2748 = vmatpush1.msra.mxu0 0.0
    %2749 = vmatprep.subr.mxu0 0.0
    %2750 = vmatpush1.msra.mxu0 0.0
    %2751 = vmatprep.subr.mxu0 0.0
    %2752 = vmatpush1.msra.mxu0 0.0
    %2753 = vmatprep.subr.mxu0 0.0
    %2754 = vmatpush1.msra.mxu0 0.0
    %2755 = vmatprep.subr.mxu0 0.0
    %2756 = vmatpush1.msra.mxu0 0.0
    %2757 = vmatprep.subr.mxu0 0.0
    %2758 = vmatpush1.msra.mxu0 0.0
    %2759 = vmatprep.subr.mxu0 0.0
    %2760 = vmatpush1.msra.mxu0 0.0
    %2761 = vmatprep.subr.mxu0 0.0
    %2762 = vmatpush1.msra.mxu0 0.0
    %2763 = vmatprep.subr.mxu0 0.0
    %2764 = vmatpush1.msra.mxu0 0.0
    %2765 = vmatprep.subr.mxu0 0.0
    %2766 = vmatpush1.msra.mxu0 0.0
    %2767 = vmatprep.subr.mxu0 0.0
    %2768 = vmatpush1.msra.mxu0 0.0
    %2769 = vmatprep.subr.mxu0 0.0
    %2770 = vmatpush1.msra.mxu0 0.0
    %2771 = vmatprep.mubr.f32.mxu0 0.0
    %2772 = vmatmul.mubr.f32.gmra.mrb[0].mxu0 %v2569
    %v2773 = vpop.f32.mrb[0].mxu0
    %v2774 = vadd.f32 %v2680, %v2773
    %v2775 = vpop.f32.mrb[0].mxu0
    %v2776 = vadd.f32 %v2684, %v2775
    %2777 = vmatprep.mubr.f32.mxu0 0.0
    %2778 = vmatmul.mubr.f32.gmra.mrb[0].mxu0 %v2570
    %v2779 = vpop.f32.mrb[0].mxu0
    %v2780 = vpop.f32.mrb[0].mxu0
    %2781 = vdwg.mxu0
    %2782 = vmatprep.subr.mxu0 %v2582
    %2783 = vmatpush1.msra.mxu0 %v2581
    %2784 = vmatprep.subr.mxu0 %v2588
    %2785 = vmatpush1.msra.mxu0 %v2587
    %2786 = vmatprep.subr.mxu0 %v2594
    %2787 = vmatpush1.msra.mxu0 %v2593
    %2788 = vmatprep.subr.mxu0 %v2600
    %2789 = vmatpush1.msra.mxu0 %v2599
    %2790 = vmatprep.subr.mxu0 %v2606
    %2791 = vmatpush1.msra.mxu0 %v2605
    %2792 = vmatprep.subr.mxu0 %v2612
    %2793 = vmatpush1.msra.mxu0 %v2611
    %2794 = vmatprep.subr.mxu0 %v2618
    %2795 = vmatpush1.msra.mxu0 %v2617
    %2796 = vmatprep.subr.mxu0 %v2624
    %2797 = vmatpush1.msra.mxu0 %v2623
    %2798 = vmatprep.subr.mxu0 %v2630
    %2799 = vmatpush1.msra.mxu0 %v2629
    %2800 = vmatprep.subr.mxu0 %v2636
    %2801 = vmatpush1.msra.mxu0 %v2635
    %2802 = vmatprep.subr.mxu0 %v2642
    %2803 = vmatpush1.msra.mxu0 %v2641
    %2804 = vmatprep.subr.mxu0 %v2648
    %2805 = vmatpush1.msra.mxu0 %v2647
    %2806 = vmatprep.subr.mxu0 %v2654
    %2807 = vmatpush1.msra.mxu0 %v2653
    %2808 = vmatprep.subr.mxu0 %v2660
    %2809 = vmatpush1.msra.mxu0 %v2659
    %2810 = vmatprep.subr.mxu0 %v2666
    %2811 = vmatpush1.msra.mxu0 %v2665
    %2812 = vmatprep.subr.mxu0 %v2672
    %2813 = vmatpush1.msra.mxu0 %v2671
    %2814 = vmatprep.subr.mxu0 0.0
    %2815 = vmatpush1.msra.mxu0 0.0
    %2816 = vmatprep.subr.mxu0 0.0
    %2817 = vmatpush1.msra.mxu0 0.0
    %2818 = vmatprep.subr.mxu0 0.0
    %2819 = vmatpush1.msra.mxu0 0.0
    %2820 = vmatprep.subr.mxu0 0.0
    %2821 = vmatpush1.msra.mxu0 0.0
    %2822 = vmatprep.subr.mxu0 0.0
    %2823 = vmatpush1.msra.mxu0 0.0
    %2824 = vmatprep.subr.mxu0 0.0
    %2825 = vmatpush1.msra.mxu0 0.0
    %2826 = vmatprep.subr.mxu0 0.0
    %2827 = vmatpush1.msra.mxu0 0.0
    %2828 = vmatprep.subr.mxu0 0.0
    %2829 = vmatpush1.msra.mxu0 0.0
    %2830 = vmatprep.subr.mxu0 0.0
    %2831 = vmatpush1.msra.mxu0 0.0
    %2832 = vmatprep.subr.mxu0 0.0
    %2833 = vmatpush1.msra.mxu0 0.0
    %2834 = vmatprep.subr.mxu0 0.0
    %2835 = vmatpush1.msra.mxu0 0.0
    %2836 = vmatprep.subr.mxu0 0.0
    %2837 = vmatpush1.msra.mxu0 0.0
    %2838 = vmatprep.subr.mxu0 0.0
    %2839 = vmatpush1.msra.mxu0 0.0
    %2840 = vmatprep.subr.mxu0 0.0
    %2841 = vmatpush1.msra.mxu0 0.0
    %2842 = vmatprep.subr.mxu0 0.0
    %2843 = vmatpush1.msra.mxu0 0.0
    %2844 = vmatprep.subr.mxu0 0.0
    %2845 = vmatpush1.msra.mxu0 0.0
    %2846 = vmatprep.mubr.f32.mxu0 0.0
    %2847 = vmatmul.mubr.f32.gmra.mrb[0].mxu0 %v2569
    %v2848 = vpop.f32.mrb[0].mxu0
    %v2849 = vadd.f32 %v2688, %v2848
    %v2850 = vpop.f32.mrb[0].mxu0
    %2851 = vmatprep.mubr.f32.mxu0 0.0
    %2852 = vmatmul.mubr.f32.gmra.mrb[0].mxu0 %v2570
    %v2853 = vpop.f32.mrb[0].mxu0
    %v2854 = vpop.f32.mrb[0].mxu0
    %v2855 = vadd.f32 %v2692, %v2854
    %2856 = vdwg.mxu0
    %2857 = vmatprep.subr.mxu0 %v2584
    %2858 = vmatpush1.msra.mxu0 %v2583
    %2859 = vmatprep.subr.mxu0 %v2590
    %2860 = vmatpush1.msra.mxu0 %v2589
    %2861 = vmatprep.subr.mxu0 %v2596
    %2862 = vmatpush1.msra.mxu0 %v2595
    %2863 = vmatprep.subr.mxu0 %v2602
    %2864 = vmatpush1.msra.mxu0 %v2601
    %2865 = vmatprep.subr.mxu0 %v2608
    %2866 = vmatpush1.msra.mxu0 %v2607
    %2867 = vmatprep.subr.mxu0 %v2614
    %2868 = vmatpush1.msra.mxu0 %v2613
    %2869 = vmatprep.subr.mxu0 %v2620
    %2870 = vmatpush1.msra.mxu0 %v2619
    %2871 = vmatprep.subr.mxu0 %v2626
    %2872 = vmatpush1.msra.mxu0 %v2625
    %2873 = vmatprep.subr.mxu0 %v2632
    %2874 = vmatpush1.msra.mxu0 %v2631
    %2875 = vmatprep.subr.mxu0 %v2638
    %2876 = vmatpush1.msra.mxu0 %v2637
    %2877 = vmatprep.subr.mxu0 %v2644
    %2878 = vmatpush1.msra.mxu0 %v2643
    %2879 = vmatprep.subr.mxu0 %v2650
    %2880 = vmatpush1.msra.mxu0 %v2649
    %2881 = vmatprep.subr.mxu0 %v2656
    %2882 = vmatpush1.msra.mxu0 %v2655
    %2883 = vmatprep.subr.mxu0 %v2662
    %2884 = vmatpush1.msra.mxu0 %v2661
    %2885 = vmatprep.subr.mxu0 %v2668
    %2886 = vmatpush1.msra.mxu0 %v2667
    %2887 = vmatprep.subr.mxu0 %v2674
    %2888 = vmatpush1.msra.mxu0 %v2673
    %2889 = vmatprep.subr.mxu0 0.0
    %2890 = vmatpush1.msra.mxu0 0.0
    %2891 = vmatprep.subr.mxu0 0.0
    %2892 = vmatpush1.msra.mxu0 0.0
    %2893 = vmatprep.subr.mxu0 0.0
    %2894 = vmatpush1.msra.mxu0 0.0
    %2895 = vmatprep.subr.mxu0 0.0
    %2896 = vmatpush1.msra.mxu0 0.0
    %2897 = vmatprep.subr.mxu0 0.0
    %2898 = vmatpush1.msra.mxu0 0.0
    %2899 = vmatprep.subr.mxu0 0.0
    %2900 = vmatpush1.msra.mxu0 0.0
    %2901 = vmatprep.subr.mxu0 0.0
    %2902 = vmatpush1.msra.mxu0 0.0
    %2903 = vmatprep.subr.mxu0 0.0
    %2904 = vmatpush1.msra.mxu0 0.0
    %2905 = vmatprep.subr.mxu0 0.0
    %2906 = vmatpush1.msra.mxu0 0.0
    %2907 = vmatprep.subr.mxu0 0.0
    %2908 = vmatpush1.msra.mxu0 0.0
    %2909 = vmatprep.subr.mxu0 0.0
    %2910 = vmatpush1.msra.mxu0 0.0
    %2911 = vmatprep.subr.mxu0 0.0
    %2912 = vmatpush1.msra.mxu0 0.0
    %2913 = vmatprep.subr.mxu0 0.0
    %2914 = vmatpush1.msra.mxu0 0.0
    %2915 = vmatprep.subr.mxu0 0.0
    %2916 = vmatpush1.msra.mxu0 0.0
    %2917 = vmatprep.subr.mxu0 0.0
    %2918 = vmatpush1.msra.mxu0 0.0
    %2919 = vmatprep.subr.mxu0 0.0
    %2920 = vmatpush1.msra.mxu0 0.0
    %2921 = vmatprep.mubr.f32.mxu0 0.0
    %2922 = vmatmul.mubr.f32.gmra.mrb[0].mxu0 %v2569
    %v2923 = vpop.f32.mrb[0].mxu0
    %v2924 = vpop.f32.mrb[0].mxu0
    %2925 = vmatprep.mubr.f32.mxu0 0.0
    %2926 = vmatmul.mubr.f32.gmra.mrb[0].mxu0 %v2570
    %v2927 = vpop.f32.mrb[0].mxu0
    %v2928 = vadd.f32 %v2696, %v2927
    %v2929 = vpop.f32.mrb[0].mxu0
    %v2930 = vadd.f32 %v2700, %v2929
    %2931 = vdwg.mxu0
    %v2932 = vadd.f32 %v2573, %v2774
    %v2933 = vadd.f32 %v2576, %v2855
    %v2934 = vxor.u32 %v2932, 2147483648
    %v2935 = vxor.u32 %v2933, 2147483648
    %v2936 = vmul.f32 %v2934, 1.442695
    %v2937 = vpow.pop %v2936
    %v2938 = vmul.f32 %v2935, 1.442695
    %v2939 = vpow.pop %v2938
    %v2940 = vadd.f32 %v2937, 1.0
    %v2941 = vadd.f32 %v2939, 1.0
    %v2942 = vrcp.pop %v2940
    %v2943 = vmul.f32 1.0, %v2942
    %v2944 = vrcp.pop %v2941
    %v2945 = vmul.f32 1.0, %v2944
    %v2946 = vadd.f32 %v2574, %v2776
    %v2947 = vadd.f32 %v2577, %v2928
    %v2948 = vxor.u32 %v2946, 2147483648
    %v2949 = vxor.u32 %v2947, 2147483648
    %v2950 = vmul.f32 %v2948, 1.442695
    %v2951 = vpow.pop %v2950
    %v2952 = vmul.f32 %v2949, 1.442695
    %v2953 = vpow.pop %v2952
    %v2954 = vadd.f32 %v2951, 1.0
    %v2955 = vadd.f32 %v2953, 1.0
    %v2956 = vrcp.pop %v2954
    %v2957 = vmul.f32 1.0, %v2956
    %v2958 = vrcp.pop %v2955
    %v2959 = vmul.f32 1.0, %v2958
    %v2960 = vmul.f32 %v2943, %v2849
    %v2961 = vmul.f32 %v2945, %v2930
    %v2962 = vadd.f32 %v2575, %v2960
    %v2963 = vadd.f32 %v2578, %v2961
    %v2964 = vtanh.pop %v2962
    %v2965 = vtanh.pop %v2963
    %v2966 = vsub.f32 1.0, %v2957
    %v2967 = vsub.f32 1.0, %v2959
    %v2968 = vmul.f32 %v2966, %v2964
    %v2969 = vmul.f32 %v2967, %v2965
    %v2970 = vmul.f32 %v2957, %v2569
    %v2971 = vmul.f32 %v2959, %v2570
    %v2972 = vadd.f32 %v2968, %v2970
    %v2973 = vadd.f32 %v2969, %v2971
    %2974 = vst [vmem:[#allocation3 + $0x40] sm:$0xff] %v2972
    %2975 = vst [vmem:[#allocation3 + $0x38] sm:$0xff] %v2973
    %v2976 = vld [vmem:[#allocation2 + $0xf0] sm:$0xff]
    %v2977 = vld [vmem:[#allocation2 + $0xf8] sm:$0xff]
    %v2978 = vld [vmem:[#allocation2 + $0x100] sm:$0xff]
    %v2979 = vld [vmem:[#allocation2 + $0x78] sm:$0xff]
    %v2980 = vld [vmem:[#allocation2 + $0x80] sm:$0xff]
    %v2981 = vld [vmem:[#allocation2 + $0x88] sm:$0xff]
    %v2982 = vld [vmem:[#allocation11] sm:$0xff]
    %v2983 = vld [vmem:[#allocation11 + $0x8] sm:$0xff]
    %v2984 = vld [vmem:[#allocation11 + $0x10] sm:$0xff]
    %v2985 = vld [vmem:[#allocation11 + $0x18] sm:$0xff]
    %v2986 = vld [vmem:[#allocation11 + $0x20] sm:$0xff]
    %v2987 = vld [vmem:[#allocation11 + $0x28] sm:$0xff]
    %v2988 = vld [vmem:[#allocation11 + $0x30] sm:$0xff]
    %v2989 = vld [vmem:[#allocation11 + $0x38] sm:$0xff]
    %v2990 = vld [vmem:[#allocation11 + $0x40] sm:$0xff]
    %v2991 = vld [vmem:[#allocation11 + $0x48] sm:$0xff]
    %v2992 = vld [vmem:[#allocation11 + $0x50] sm:$0xff]
    %v2993 = vld [vmem:[#allocation11 + $0x58] sm:$0xff]
    %v2994 = vld [vmem:[#allocation11 + $0x60] sm:$0xff]
    %v2995 = vld [vmem:[#allocation11 + $0x68] sm:$0xff]
    %v2996 = vld [vmem:[#allocation11 + $0x70] sm:$0xff]
    %v2997 = vld [vmem:[#allocation11 + $0x78] sm:$0xff]
    %v2998 = vld [vmem:[#allocation11 + $0x80] sm:$0xff]
    %v2999 = vld [vmem:[#allocation11 + $0x88] sm:$0xff]
    %v3000 = vld [vmem:[#allocation11 + $0x90] sm:$0xff]
    %v3001 = vld [vmem:[#allocation11 + $0x98] sm:$0xff]
    %v3002 = vld [vmem:[#allocation11 + $0xa0] sm:$0xff]
    %v3003 = vld [vmem:[#allocation11 + $0xa8] sm:$0xff]
    %v3004 = vld [vmem:[#allocation11 + $0xb0] sm:$0xff]
    %v3005 = vld [vmem:[#allocation11 + $0xb8] sm:$0xff]
    %v3006 = vld [vmem:[#allocation11 + $0xc0] sm:$0xff]
    %v3007 = vld [vmem:[#allocation11 + $0xc8] sm:$0xff]
    %v3008 = vld [vmem:[#allocation11 + $0xd0] sm:$0xff]
    %v3009 = vld [vmem:[#allocation11 + $0xd8] sm:$0xff]
    %v3010 = vld [vmem:[#allocation11 + $0xe0] sm:$0xff]
    %v3011 = vld [vmem:[#allocation11 + $0xe8] sm:$0xff]
    %v3012 = vld [vmem:[#allocation11 + $0xf0] sm:$0xff]
    %v3013 = vld [vmem:[#allocation11 + $0xf8] sm:$0xff]
    %v3014 = vld [vmem:[#allocation11 + $0x100] sm:$0xff]
    %v3015 = vld [vmem:[#allocation11 + $0x108] sm:$0xff]
    %v3016 = vld [vmem:[#allocation11 + $0x110] sm:$0xff]
    %v3017 = vld [vmem:[#allocation11 + $0x118] sm:$0xff]
    %v3018 = vld [vmem:[#allocation11 + $0x120] sm:$0xff]
    %v3019 = vld [vmem:[#allocation11 + $0x128] sm:$0xff]
    %v3020 = vld [vmem:[#allocation11 + $0x130] sm:$0xff]
    %v3021 = vld [vmem:[#allocation11 + $0x138] sm:$0xff]
    %v3022 = vld [vmem:[#allocation11 + $0x140] sm:$0xff]
    %v3023 = vld [vmem:[#allocation11 + $0x148] sm:$0xff]
    %v3024 = vld [vmem:[#allocation11 + $0x150] sm:$0xff]
    %v3025 = vld [vmem:[#allocation11 + $0x158] sm:$0xff]
    %v3026 = vld [vmem:[#allocation11 + $0x160] sm:$0xff]
    %v3027 = vld [vmem:[#allocation11 + $0x168] sm:$0xff]
    %v3028 = vld [vmem:[#allocation11 + $0x170] sm:$0xff]
    %v3029 = vld [vmem:[#allocation11 + $0x178] sm:$0xff]
    %v3030 = vld [vmem:[#allocation11 + $0x180] sm:$0xff]
    %v3031 = vld [vmem:[#allocation11 + $0x188] sm:$0xff]
    %v3032 = vld [vmem:[#allocation11 + $0x190] sm:$0xff]
    %v3033 = vld [vmem:[#allocation11 + $0x198] sm:$0xff]
    %v3034 = vld [vmem:[#allocation11 + $0x1a0] sm:$0xff]
    %v3035 = vld [vmem:[#allocation11 + $0x1a8] sm:$0xff]
    %v3036 = vld [vmem:[#allocation11 + $0x1b0] sm:$0xff]
    %v3037 = vld [vmem:[#allocation11 + $0x1b8] sm:$0xff]
    %v3038 = vld [vmem:[#allocation11 + $0x1c0] sm:$0xff]
    %v3039 = vld [vmem:[#allocation11 + $0x1c8] sm:$0xff]
    %v3040 = vld [vmem:[#allocation11 + $0x1d0] sm:$0xff]
    %v3041 = vld [vmem:[#allocation11 + $0x1d8] sm:$0xff]
    %v3042 = vld [vmem:[#allocation11 + $0x1e0] sm:$0xff]
    %v3043 = vld [vmem:[#allocation11 + $0x1e8] sm:$0xff]
    %v3044 = vld [vmem:[#allocation11 + $0x1f0] sm:$0xff]
    %v3045 = vld [vmem:[#allocation11 + $0x1f8] sm:$0xff]
    %v3046 = vld [vmem:[#allocation11 + $0x200] sm:$0xff]
    %v3047 = vld [vmem:[#allocation11 + $0x208] sm:$0xff]
    %v3048 = vld [vmem:[#allocation11 + $0x210] sm:$0xff]
    %v3049 = vld [vmem:[#allocation11 + $0x218] sm:$0xff]
    %v3050 = vld [vmem:[#allocation11 + $0x220] sm:$0xff]
    %v3051 = vld [vmem:[#allocation11 + $0x228] sm:$0xff]
    %v3052 = vld [vmem:[#allocation11 + $0x230] sm:$0xff]
    %v3053 = vld [vmem:[#allocation11 + $0x238] sm:$0xff]
    %v3054 = vld [vmem:[#allocation11 + $0x240] sm:$0xff]
    %v3055 = vld [vmem:[#allocation11 + $0x248] sm:$0xff]
    %v3056 = vld [vmem:[#allocation11 + $0x250] sm:$0xff]
    %v3057 = vld [vmem:[#allocation11 + $0x258] sm:$0xff]
    %v3058 = vld [vmem:[#allocation11 + $0x260] sm:$0xff]
    %v3059 = vld [vmem:[#allocation11 + $0x268] sm:$0xff]
    %v3060 = vld [vmem:[#allocation11 + $0x270] sm:$0xff]
    %v3061 = vld [vmem:[#allocation11 + $0x278] sm:$0xff]
    %v3062 = vld [vmem:[#allocation11 + $0x280] sm:$0xff]
    %v3063 = vld [vmem:[#allocation11 + $0x288] sm:$0xff]
    %v3064 = vld [vmem:[#allocation11 + $0x290] sm:$0xff]
    %v3065 = vld [vmem:[#allocation11 + $0x298] sm:$0xff]
    %v3066 = vld [vmem:[#allocation11 + $0x2a0] sm:$0xff]
    %v3067 = vld [vmem:[#allocation11 + $0x2a8] sm:$0xff]
    %v3068 = vld [vmem:[#allocation11 + $0x2b0] sm:$0xff]
    %v3069 = vld [vmem:[#allocation11 + $0x2b8] sm:$0xff]
    %v3070 = vld [vmem:[#allocation11 + $0x2c0] sm:$0xff]
    %v3071 = vld [vmem:[#allocation11 + $0x2c8] sm:$0xff]
    %v3072 = vld [vmem:[#allocation11 + $0x2d0] sm:$0xff]
    %v3073 = vld [vmem:[#allocation11 + $0x2d8] sm:$0xff]
    %v3074 = vld [vmem:[#allocation11 + $0x2e0] sm:$0xff]
    %v3075 = vld [vmem:[#allocation11 + $0x2e8] sm:$0xff]
    %v3076 = vld [vmem:[#allocation11 + $0x2f0] sm:$0xff]
    %v3077 = vld [vmem:[#allocation11 + $0x2f8] sm:$0xff]
    %v3078 = vld [vmem:[#allocation12] sm:$0x3f]
    %v3080 = vlaneseq
    %v3081 = vshrl.u32 %v3080, 7
    %v3082 = vsub.s32 0, %v3081
    %v3083 = vrot.slane %v3078, %v3082
    %v3084 = vlaneseq
    %v3085 = vshrl.u32 %v3084, 7
    %v3086 = vsub.s32 1, %v3085
    %v3087 = vrot.slane %v3078, %v3086
    %v3088 = vlaneseq
    %v3089 = vshrl.u32 %v3088, 7
    %v3090 = vsub.s32 2, %v3089
    %v3091 = vrot.slane %v3078, %v3090
    %v3092 = vlaneseq
    %v3093 = vshrl.u32 %v3092, 7
    %v3094 = vsub.s32 3, %v3093
    %v3095 = vrot.slane %v3078, %v3094
    %v3096 = vlaneseq
    %v3097 = vshrl.u32 %v3096, 7
    %v3098 = vsub.s32 4, %v3097
    %v3099 = vrot.slane %v3078, %v3098
    %v3100 = vlaneseq
    %v3101 = vshrl.u32 %v3100, 7
    %v3102 = vsub.s32 5, %v3101
    %v3103 = vrot.slane %v3078, %v3102
    %3110 = vmatprep.subr.mxu0 %v2983
    %3111 = vmatpush1.msra.mxu0 %v2982
    %3112 = vmatprep.subr.mxu0 %v2989
    %3113 = vmatpush1.msra.mxu0 %v2988
    %3114 = vmatprep.subr.mxu0 %v2995
    %3115 = vmatpush1.msra.mxu0 %v2994
    %3116 = vmatprep.subr.mxu0 %v3001
    %3117 = vmatpush1.msra.mxu0 %v3000
    %3118 = vmatprep.subr.mxu0 %v3007
    %3119 = vmatpush1.msra.mxu0 %v3006
    %3120 = vmatprep.subr.mxu0 %v3013
    %3121 = vmatpush1.msra.mxu0 %v3012
    %3122 = vmatprep.subr.mxu0 %v3019
    %3123 = vmatpush1.msra.mxu0 %v3018
    %3124 = vmatprep.subr.mxu0 %v3025
    %3125 = vmatpush1.msra.mxu0 %v3024
    %3126 = vmatprep.subr.mxu0 %v3031
    %3127 = vmatpush1.msra.mxu0 %v3030
    %3128 = vmatprep.subr.mxu0 %v3037
    %3129 = vmatpush1.msra.mxu0 %v3036
    %3130 = vmatprep.subr.mxu0 %v3043
    %3131 = vmatpush1.msra.mxu0 %v3042
    %3132 = vmatprep.subr.mxu0 %v3049
    %3133 = vmatpush1.msra.mxu0 %v3048
    %3134 = vmatprep.subr.mxu0 %v3055
    %3135 = vmatpush1.msra.mxu0 %v3054
    %3136 = vmatprep.subr.mxu0 %v3061
    %3137 = vmatpush1.msra.mxu0 %v3060
    %3138 = vmatprep.subr.mxu0 %v3067
    %3139 = vmatpush1.msra.mxu0 %v3066
    %3140 = vmatprep.subr.mxu0 %v3073
    %3141 = vmatpush1.msra.mxu0 %v3072
    %3142 = vmatprep.subr.mxu0 0.0
    %3143 = vmatpush1.msra.mxu0 0.0
    %3144 = vmatprep.subr.mxu0 0.0
    %3145 = vmatpush1.msra.mxu0 0.0
    %3146 = vmatprep.subr.mxu0 0.0
    %3147 = vmatpush1.msra.mxu0 0.0
    %3148 = vmatprep.subr.mxu0 0.0
    %3149 = vmatpush1.msra.mxu0 0.0
    %3150 = vmatprep.subr.mxu0 0.0
    %3151 = vmatpush1.msra.mxu0 0.0
    %3152 = vmatprep.subr.mxu0 0.0
    %3153 = vmatpush1.msra.mxu0 0.0
    %3154 = vmatprep.subr.mxu0 0.0
    %3155 = vmatpush1.msra.mxu0 0.0
    %3156 = vmatprep.subr.mxu0 0.0
    %3157 = vmatpush1.msra.mxu0 0.0
    %3158 = vmatprep.subr.mxu0 0.0
    %3159 = vmatpush1.msra.mxu0 0.0
    %3160 = vmatprep.subr.mxu0 0.0
    %3161 = vmatpush1.msra.mxu0 0.0
    %3162 = vmatprep.subr.mxu0 0.0
    %3163 = vmatpush1.msra.mxu0 0.0
    %3164 = vmatprep.subr.mxu0 0.0
    %3165 = vmatpush1.msra.mxu0 0.0
    %3166 = vmatprep.subr.mxu0 0.0
    %3167 = vmatpush1.msra.mxu0 0.0
    %3168 = vmatprep.subr.mxu0 0.0
    %3169 = vmatpush1.msra.mxu0 0.0
    %3170 = vmatprep.subr.mxu0 0.0
    %3171 = vmatpush1.msra.mxu0 0.0
    %3172 = vmatprep.subr.mxu0 0.0
    %3173 = vmatpush1.msra.mxu0 0.0
    %3174 = vmatprep.mubr.f32.mxu0 0.0
    %3175 = vmatmul.mubr.f32.gmra.mrb[0].mxu0 %v2972
    %v3176 = vpop.f32.mrb[0].mxu0
    %v3177 = vadd.f32 %v3083, %v3176
    %v3178 = vpop.f32.mrb[0].mxu0
    %v3179 = vadd.f32 %v3087, %v3178
    %3180 = vmatprep.mubr.f32.mxu0 0.0
    %3181 = vmatmul.mubr.f32.gmra.mrb[0].mxu0 %v2973
    %v3182 = vpop.f32.mrb[0].mxu0
    %v3183 = vpop.f32.mrb[0].mxu0
    %3184 = vdwg.mxu0
    %3185 = vmatprep.subr.mxu0 %v2985
    %3186 = vmatpush1.msra.mxu0 %v2984
    %3187 = vmatprep.subr.mxu0 %v2991
    %3188 = vmatpush1.msra.mxu0 %v2990
    %3189 = vmatprep.subr.mxu0 %v2997
    %3190 = vmatpush1.msra.mxu0 %v2996
    %3191 = vmatprep.subr.mxu0 %v3003
    %3192 = vmatpush1.msra.mxu0 %v3002
    %3193 = vmatprep.subr.mxu0 %v3009
    %3194 = vmatpush1.msra.mxu0 %v3008
    %3195 = vmatprep.subr.mxu0 %v3015
    %3196 = vmatpush1.msra.mxu0 %v3014
    %3197 = vmatprep.subr.mxu0 %v3021
    %3198 = vmatpush1.msra.mxu0 %v3020
    %3199 = vmatprep.subr.mxu0 %v3027
    %3200 = vmatpush1.msra.mxu0 %v3026
    %3201 = vmatprep.subr.mxu0 %v3033
    %3202 = vmatpush1.msra.mxu0 %v3032
    %3203 = vmatprep.subr.mxu0 %v3039
    %3204 = vmatpush1.msra.mxu0 %v3038
    %3205 = vmatprep.subr.mxu0 %v3045
    %3206 = vmatpush1.msra.mxu0 %v3044
    %3207 = vmatprep.subr.mxu0 %v3051
    %3208 = vmatpush1.msra.mxu0 %v3050
    %3209 = vmatprep.subr.mxu0 %v3057
    %3210 = vmatpush1.msra.mxu0 %v3056
    %3211 = vmatprep.subr.mxu0 %v3063
    %3212 = vmatpush1.msra.mxu0 %v3062
    %3213 = vmatprep.subr.mxu0 %v3069
    %3214 = vmatpush1.msra.mxu0 %v3068
    %3215 = vmatprep.subr.mxu0 %v3075
    %3216 = vmatpush1.msra.mxu0 %v3074
    %3217 = vmatprep.subr.mxu0 0.0
    %3218 = vmatpush1.msra.mxu0 0.0
    %3219 = vmatprep.subr.mxu0 0.0
    %3220 = vmatpush1.msra.mxu0 0.0
    %3221 = vmatprep.subr.mxu0 0.0
    %3222 = vmatpush1.msra.mxu0 0.0
    %3223 = vmatprep.subr.mxu0 0.0
    %3224 = vmatpush1.msra.mxu0 0.0
    %3225 = vmatprep.subr.mxu0 0.0
    %3226 = vmatpush1.msra.mxu0 0.0
    %3227 = vmatprep.subr.mxu0 0.0
    %3228 = vmatpush1.msra.mxu0 0.0
    %3229 = vmatprep.subr.mxu0 0.0
    %3230 = vmatpush1.msra.mxu0 0.0
    %3231 = vmatprep.subr.mxu0 0.0
    %3232 = vmatpush1.msra.mxu0 0.0
    %3233 = vmatprep.subr.mxu0 0.0
    %3234 = vmatpush1.msra.mxu0 0.0
    %3235 = vmatprep.subr.mxu0 0.0
    %3236 = vmatpush1.msra.mxu0 0.0
    %3237 = vmatprep.subr.mxu0 0.0
    %3238 = vmatpush1.msra.mxu0 0.0
    %3239 = vmatprep.subr.mxu0 0.0
    %3240 = vmatpush1.msra.mxu0 0.0
    %3241 = vmatprep.subr.mxu0 0.0
    %3242 = vmatpush1.msra.mxu0 0.0
    %3243 = vmatprep.subr.mxu0 0.0
    %3244 = vmatpush1.msra.mxu0 0.0
    %3245 = vmatprep.subr.mxu0 0.0
    %3246 = vmatpush1.msra.mxu0 0.0
    %3247 = vmatprep.subr.mxu0 0.0
    %3248 = vmatpush1.msra.mxu0 0.0
    %3249 = vmatprep.mubr.f32.mxu0 0.0
    %3250 = vmatmul.mubr.f32.gmra.mrb[0].mxu0 %v2972
    %v3251 = vpop.f32.mrb[0].mxu0
    %v3252 = vadd.f32 %v3091, %v3251
    %v3253 = vpop.f32.mrb[0].mxu0
    %3254 = vmatprep.mubr.f32.mxu0 0.0
    %3255 = vmatmul.mubr.f32.gmra.mrb[0].mxu0 %v2973
    %v3256 = vpop.f32.mrb[0].mxu0
    %v3257 = vpop.f32.mrb[0].mxu0
    %v3258 = vadd.f32 %v3095, %v3257
    %3259 = vdwg.mxu0
    %3260 = vmatprep.subr.mxu0 %v2987
    %3261 = vmatpush1.msra.mxu0 %v2986
    %3262 = vmatprep.subr.mxu0 %v2993
    %3263 = vmatpush1.msra.mxu0 %v2992
    %3264 = vmatprep.subr.mxu0 %v2999
    %3265 = vmatpush1.msra.mxu0 %v2998
    %3266 = vmatprep.subr.mxu0 %v3005
    %3267 = vmatpush1.msra.mxu0 %v3004
    %3268 = vmatprep.subr.mxu0 %v3011
    %3269 = vmatpush1.msra.mxu0 %v3010
    %3270 = vmatprep.subr.mxu0 %v3017
    %3271 = vmatpush1.msra.mxu0 %v3016
    %3272 = vmatprep.subr.mxu0 %v3023
    %3273 = vmatpush1.msra.mxu0 %v3022
    %3274 = vmatprep.subr.mxu0 %v3029
    %3275 = vmatpush1.msra.mxu0 %v3028
    %3276 = vmatprep.subr.mxu0 %v3035
    %3277 = vmatpush1.msra.mxu0 %v3034
    %3278 = vmatprep.subr.mxu0 %v3041
    %3279 = vmatpush1.msra.mxu0 %v3040
    %3280 = vmatprep.subr.mxu0 %v3047
    %3281 = vmatpush1.msra.mxu0 %v3046
    %3282 = vmatprep.subr.mxu0 %v3053
    %3283 = vmatpush1.msra.mxu0 %v3052
    %3284 = vmatprep.subr.mxu0 %v3059
    %3285 = vmatpush1.msra.mxu0 %v3058
    %3286 = vmatprep.subr.mxu0 %v3065
    %3287 = vmatpush1.msra.mxu0 %v3064
    %3288 = vmatprep.subr.mxu0 %v3071
    %3289 = vmatpush1.msra.mxu0 %v3070
    %3290 = vmatprep.subr.mxu0 %v3077
    %3291 = vmatpush1.msra.mxu0 %v3076
    %3292 = vmatprep.subr.mxu0 0.0
    %3293 = vmatpush1.msra.mxu0 0.0
    %3294 = vmatprep.subr.mxu0 0.0
    %3295 = vmatpush1.msra.mxu0 0.0
    %3296 = vmatprep.subr.mxu0 0.0
    %3297 = vmatpush1.msra.mxu0 0.0
    %3298 = vmatprep.subr.mxu0 0.0
    %3299 = vmatpush1.msra.mxu0 0.0
    %3300 = vmatprep.subr.mxu0 0.0
    %3301 = vmatpush1.msra.mxu0 0.0
    %3302 = vmatprep.subr.mxu0 0.0
    %3303 = vmatpush1.msra.mxu0 0.0
    %3304 = vmatprep.subr.mxu0 0.0
    %3305 = vmatpush1.msra.mxu0 0.0
    %3306 = vmatprep.subr.mxu0 0.0
    %3307 = vmatpush1.msra.mxu0 0.0
    %3308 = vmatprep.subr.mxu0 0.0
    %3309 = vmatpush1.msra.mxu0 0.0
    %3310 = vmatprep.subr.mxu0 0.0
    %3311 = vmatpush1.msra.mxu0 0.0
    %3312 = vmatprep.subr.mxu0 0.0
    %3313 = vmatpush1.msra.mxu0 0.0
    %3314 = vmatprep.subr.mxu0 0.0
    %3315 = vmatpush1.msra.mxu0 0.0
    %3316 = vmatprep.subr.mxu0 0.0
    %3317 = vmatpush1.msra.mxu0 0.0
    %3318 = vmatprep.subr.mxu0 0.0
    %3319 = vmatpush1.msra.mxu0 0.0
    %3320 = vmatprep.subr.mxu0 0.0
    %3321 = vmatpush1.msra.mxu0 0.0
    %3322 = vmatprep.subr.mxu0 0.0
    %3323 = vmatpush1.msra.mxu0 0.0
    %3324 = vmatprep.mubr.f32.mxu0 0.0
    %3325 = vmatmul.mubr.f32.gmra.mrb[0].mxu0 %v2972
    %v3326 = vpop.f32.mrb[0].mxu0
    %v3327 = vpop.f32.mrb[0].mxu0
    %3328 = vmatprep.mubr.f32.mxu0 0.0
    %3329 = vmatmul.mubr.f32.gmra.mrb[0].mxu0 %v2973
    %v3330 = vpop.f32.mrb[0].mxu0
    %v3331 = vadd.f32 %v3099, %v3330
    %v3332 = vpop.f32.mrb[0].mxu0
    %v3333 = vadd.f32 %v3103, %v3332
    %3334 = vdwg.mxu0
    %v3335 = vadd.f32 %v2976, %v3177
    %v3336 = vadd.f32 %v2979, %v3258
    %v3337 = vxor.u32 %v3335, 2147483648
    %v3338 = vxor.u32 %v3336, 2147483648
    %v3339 = vmul.f32 %v3337, 1.442695
    %v3340 = vpow.pop %v3339
    %v3341 = vmul.f32 %v3338, 1.442695
    %v3342 = vpow.pop %v3341
    %v3343 = vadd.f32 %v3340, 1.0
    %v3344 = vadd.f32 %v3342, 1.0
    %v3345 = vrcp.pop %v3343
    %v3346 = vmul.f32 1.0, %v3345
    %v3347 = vrcp.pop %v3344
    %v3348 = vmul.f32 1.0, %v3347
    %v3349 = vadd.f32 %v2977, %v3179
    %v3350 = vadd.f32 %v2980, %v3331
    %v3351 = vxor.u32 %v3349, 2147483648
    %v3352 = vxor.u32 %v3350, 2147483648
    %v3353 = vmul.f32 %v3351, 1.442695
    %v3354 = vpow.pop %v3353
    %v3355 = vmul.f32 %v3352, 1.442695
    %v3356 = vpow.pop %v3355
    %v3357 = vadd.f32 %v3354, 1.0
    %v3358 = vadd.f32 %v3356, 1.0
    %v3359 = vrcp.pop %v3357
    %v3360 = vmul.f32 1.0, %v3359
    %v3361 = vrcp.pop %v3358
    %v3362 = vmul.f32 1.0, %v3361
    %v3363 = vmul.f32 %v3346, %v3252
    %v3364 = vmul.f32 %v3348, %v3333
    %v3365 = vadd.f32 %v2978, %v3363
    %v3366 = vadd.f32 %v2981, %v3364
    %v3367 = vtanh.pop %v3365
    %v3368 = vtanh.pop %v3366
    %v3369 = vsub.f32 1.0, %v3360
    %v3370 = vsub.f32 1.0, %v3362
    %v3371 = vmul.f32 %v3369, %v3367
    %v3372 = vmul.f32 %v3370, %v3368
    %v3373 = vmul.f32 %v3360, %v2972
    %v3374 = vmul.f32 %v3362, %v2973
    %v3375 = vadd.f32 %v3371, %v3373
    %v3376 = vadd.f32 %v3372, %v3374
    %3377 = vst [vmem:[#allocation3 + $0x50] sm:$0xff] %v3375
    %3378 = vst [vmem:[#allocation3 + $0x28] sm:$0xff] %v3376
    %v3379 = vld [vmem:[#allocation2 + $0x120] sm:$0xff]
    %v3380 = vld [vmem:[#allocation2 + $0x128] sm:$0xff]
    %v3381 = vld [vmem:[#allocation2 + $0x130] sm:$0xff]
    %v3382 = vld [vmem:[#allocation2 + $0x48] sm:$0xff]
    %v3383 = vld [vmem:[#allocation2 + $0x50] sm:$0xff]
    %v3384 = vld [vmem:[#allocation2 + $0x58] sm:$0xff]
    %v3385 = vld [vmem:[#allocation11] sm:$0xff]
    %v3386 = vld [vmem:[#allocation11 + $0x8] sm:$0xff]
    %v3387 = vld [vmem:[#allocation11 + $0x10] sm:$0xff]
    %v3388 = vld [vmem:[#allocation11 + $0x18] sm:$0xff]
    %v3389 = vld [vmem:[#allocation11 + $0x20] sm:$0xff]
    %v3390 = vld [vmem:[#allocation11 + $0x28] sm:$0xff]
    %v3391 = vld [vmem:[#allocation11 + $0x30] sm:$0xff]
    %v3392 = vld [vmem:[#allocation11 + $0x38] sm:$0xff]
    %v3393 = vld [vmem:[#allocation11 + $0x40] sm:$0xff]
    %v3394 = vld [vmem:[#allocation11 + $0x48] sm:$0xff]
    %v3395 = vld [vmem:[#allocation11 + $0x50] sm:$0xff]
    %v3396 = vld [vmem:[#allocation11 + $0x58] sm:$0xff]
    %v3397 = vld [vmem:[#allocation11 + $0x60] sm:$0xff]
    %v3398 = vld [vmem:[#allocation11 + $0x68] sm:$0xff]
    %v3399 = vld [vmem:[#allocation11 + $0x70] sm:$0xff]
    %v3400 = vld [vmem:[#allocation11 + $0x78] sm:$0xff]
    %v3401 = vld [vmem:[#allocation11 + $0x80] sm:$0xff]
    %v3402 = vld [vmem:[#allocation11 + $0x88] sm:$0xff]
    %v3403 = vld [vmem:[#allocation11 + $0x90] sm:$0xff]
    %v3404 = vld [vmem:[#allocation11 + $0x98] sm:$0xff]
    %v3405 = vld [vmem:[#allocation11 + $0xa0] sm:$0xff]
    %v3406 = vld [vmem:[#allocation11 + $0xa8] sm:$0xff]
    %v3407 = vld [vmem:[#allocation11 + $0xb0] sm:$0xff]
    %v3408 = vld [vmem:[#allocation11 + $0xb8] sm:$0xff]
    %v3409 = vld [vmem:[#allocation11 + $0xc0] sm:$0xff]
    %v3410 = vld [vmem:[#allocation11 + $0xc8] sm:$0xff]
    %v3411 = vld [vmem:[#allocation11 + $0xd0] sm:$0xff]
    %v3412 = vld [vmem:[#allocation11 + $0xd8] sm:$0xff]
    %v3413 = vld [vmem:[#allocation11 + $0xe0] sm:$0xff]
    %v3414 = vld [vmem:[#allocation11 + $0xe8] sm:$0xff]
    %v3415 = vld [vmem:[#allocation11 + $0xf0] sm:$0xff]
    %v3416 = vld [vmem:[#allocation11 + $0xf8] sm:$0xff]
    %v3417 = vld [vmem:[#allocation11 + $0x100] sm:$0xff]
    %v3418 = vld [vmem:[#allocation11 + $0x108] sm:$0xff]
    %v3419 = vld [vmem:[#allocation11 + $0x110] sm:$0xff]
    %v3420 = vld [vmem:[#allocation11 + $0x118] sm:$0xff]
    %v3421 = vld [vmem:[#allocation11 + $0x120] sm:$0xff]
    %v3422 = vld [vmem:[#allocation11 + $0x128] sm:$0xff]
    %v3423 = vld [vmem:[#allocation11 + $0x130] sm:$0xff]
    %v3424 = vld [vmem:[#allocation11 + $0x138] sm:$0xff]
    %v3425 = vld [vmem:[#allocation11 + $0x140] sm:$0xff]
    %v3426 = vld [vmem:[#allocation11 + $0x148] sm:$0xff]
    %v3427 = vld [vmem:[#allocation11 + $0x150] sm:$0xff]
    %v3428 = vld [vmem:[#allocation11 + $0x158] sm:$0xff]
    %v3429 = vld [vmem:[#allocation11 + $0x160] sm:$0xff]
    %v3430 = vld [vmem:[#allocation11 + $0x168] sm:$0xff]
    %v3431 = vld [vmem:[#allocation11 + $0x170] sm:$0xff]
    %v3432 = vld [vmem:[#allocation11 + $0x178] sm:$0xff]
    %v3433 = vld [vmem:[#allocation11 + $0x180] sm:$0xff]
    %v3434 = vld [vmem:[#allocation11 + $0x188] sm:$0xff]
    %v3435 = vld [vmem:[#allocation11 + $0x190] sm:$0xff]
    %v3436 = vld [vmem:[#allocation11 + $0x198] sm:$0xff]
    %v3437 = vld [vmem:[#allocation11 + $0x1a0] sm:$0xff]
    %v3438 = vld [vmem:[#allocation11 + $0x1a8] sm:$0xff]
    %v3439 = vld [vmem:[#allocation11 + $0x1b0] sm:$0xff]
    %v3440 = vld [vmem:[#allocation11 + $0x1b8] sm:$0xff]
    %v3441 = vld [vmem:[#allocation11 + $0x1c0] sm:$0xff]
    %v3442 = vld [vmem:[#allocation11 + $0x1c8] sm:$0xff]
    %v3443 = vld [vmem:[#allocation11 + $0x1d0] sm:$0xff]
    %v3444 = vld [vmem:[#allocation11 + $0x1d8] sm:$0xff]
    %v3445 = vld [vmem:[#allocation11 + $0x1e0] sm:$0xff]
    %v3446 = vld [vmem:[#allocation11 + $0x1e8] sm:$0xff]
    %v3447 = vld [vmem:[#allocation11 + $0x1f0] sm:$0xff]
    %v3448 = vld [vmem:[#allocation11 + $0x1f8] sm:$0xff]
    %v3449 = vld [vmem:[#allocation11 + $0x200] sm:$0xff]
    %v3450 = vld [vmem:[#allocation11 + $0x208] sm:$0xff]
    %v3451 = vld [vmem:[#allocation11 + $0x210] sm:$0xff]
    %v3452 = vld [vmem:[#allocation11 + $0x218] sm:$0xff]
    %v3453 = vld [vmem:[#allocation11 + $0x220] sm:$0xff]
    %v3454 = vld [vmem:[#allocation11 + $0x228] sm:$0xff]
    %v3455 = vld [vmem:[#allocation11 + $0x230] sm:$0xff]
    %v3456 = vld [vmem:[#allocation11 + $0x238] sm:$0xff]
    %v3457 = vld [vmem:[#allocation11 + $0x240] sm:$0xff]
    %v3458 = vld [vmem:[#allocation11 + $0x248] sm:$0xff]
    %v3459 = vld [vmem:[#allocation11 + $0x250] sm:$0xff]
    %v3460 = vld [vmem:[#allocation11 + $0x258] sm:$0xff]
    %v3461 = vld [vmem:[#allocation11 + $0x260] sm:$0xff]
    %v3462 = vld [vmem:[#allocation11 + $0x268] sm:$0xff]
    %v3463 = vld [vmem:[#allocation11 + $0x270] sm:$0xff]
    %v3464 = vld [vmem:[#allocation11 + $0x278] sm:$0xff]
    %v3465 = vld [vmem:[#allocation11 + $0x280] sm:$0xff]
    %v3466 = vld [vmem:[#allocation11 + $0x288] sm:$0xff]
    %v3467 = vld [vmem:[#allocation11 + $0x290] sm:$0xff]
    %v3468 = vld [vmem:[#allocation11 + $0x298] sm:$0xff]
    %v3469 = vld [vmem:[#allocation11 + $0x2a0] sm:$0xff]
    %v3470 = vld [vmem:[#allocation11 + $0x2a8] sm:$0xff]
    %v3471 = vld [vmem:[#allocation11 + $0x2b0] sm:$0xff]
    %v3472 = vld [vmem:[#allocation11 + $0x2b8] sm:$0xff]
    %v3473 = vld [vmem:[#allocation11 + $0x2c0] sm:$0xff]
    %v3474 = vld [vmem:[#allocation11 + $0x2c8] sm:$0xff]
    %v3475 = vld [vmem:[#allocation11 + $0x2d0] sm:$0xff]
    %v3476 = vld [vmem:[#allocation11 + $0x2d8] sm:$0xff]
    %v3477 = vld [vmem:[#allocation11 + $0x2e0] sm:$0xff]
    %v3478 = vld [vmem:[#allocation11 + $0x2e8] sm:$0xff]
    %v3479 = vld [vmem:[#allocation11 + $0x2f0] sm:$0xff]
    %v3480 = vld [vmem:[#allocation11 + $0x2f8] sm:$0xff]
    %v3481 = vld [vmem:[#allocation12] sm:$0x3f]
    %v3483 = vlaneseq
    %v3484 = vshrl.u32 %v3483, 7
    %v3485 = vsub.s32 0, %v3484
    %v3486 = vrot.slane %v3481, %v3485
    %v3487 = vlaneseq
    %v3488 = vshrl.u32 %v3487, 7
    %v3489 = vsub.s32 1, %v3488
    %v3490 = vrot.slane %v3481, %v3489
    %v3491 = vlaneseq
    %v3492 = vshrl.u32 %v3491, 7
    %v3493 = vsub.s32 2, %v3492
    %v3494 = vrot.slane %v3481, %v3493
    %v3495 = vlaneseq
    %v3496 = vshrl.u32 %v3495, 7
    %v3497 = vsub.s32 3, %v3496
    %v3498 = vrot.slane %v3481, %v3497
    %v3499 = vlaneseq
    %v3500 = vshrl.u32 %v3499, 7
    %v3501 = vsub.s32 4, %v3500
    %v3502 = vrot.slane %v3481, %v3501
    %v3503 = vlaneseq
    %v3504 = vshrl.u32 %v3503, 7
    %v3505 = vsub.s32 5, %v3504
    %v3506 = vrot.slane %v3481, %v3505
    %3513 = vmatprep.subr.mxu0 %v3386
    %3514 = vmatpush1.msra.mxu0 %v3385
    %3515 = vmatprep.subr.mxu0 %v3392
    %3516 = vmatpush1.msra.mxu0 %v3391
    %3517 = vmatprep.subr.mxu0 %v3398
    %3518 = vmatpush1.msra.mxu0 %v3397
    %3519 = vmatprep.subr.mxu0 %v3404
    %3520 = vmatpush1.msra.mxu0 %v3403
    %3521 = vmatprep.subr.mxu0 %v3410
    %3522 = vmatpush1.msra.mxu0 %v3409
    %3523 = vmatprep.subr.mxu0 %v3416
    %3524 = vmatpush1.msra.mxu0 %v3415
    %3525 = vmatprep.subr.mxu0 %v3422
    %3526 = vmatpush1.msra.mxu0 %v3421
    %3527 = vmatprep.subr.mxu0 %v3428
    %3528 = vmatpush1.msra.mxu0 %v3427
    %3529 = vmatprep.subr.mxu0 %v3434
    %3530 = vmatpush1.msra.mxu0 %v3433
    %3531 = vmatprep.subr.mxu0 %v3440
    %3532 = vmatpush1.msra.mxu0 %v3439
    %3533 = vmatprep.subr.mxu0 %v3446
    %3534 = vmatpush1.msra.mxu0 %v3445
    %3535 = vmatprep.subr.mxu0 %v3452
    %3536 = vmatpush1.msra.mxu0 %v3451
    %3537 = vmatprep.subr.mxu0 %v3458
    %3538 = vmatpush1.msra.mxu0 %v3457
    %3539 = vmatprep.subr.mxu0 %v3464
    %3540 = vmatpush1.msra.mxu0 %v3463
    %3541 = vmatprep.subr.mxu0 %v3470
    %3542 = vmatpush1.msra.mxu0 %v3469
    %3543 = vmatprep.subr.mxu0 %v3476
    %3544 = vmatpush1.msra.mxu0 %v3475
    %3545 = vmatprep.subr.mxu0 0.0
    %3546 = vmatpush1.msra.mxu0 0.0
    %3547 = vmatprep.subr.mxu0 0.0
    %3548 = vmatpush1.msra.mxu0 0.0
    %3549 = vmatprep.subr.mxu0 0.0
    %3550 = vmatpush1.msra.mxu0 0.0
    %3551 = vmatprep.subr.mxu0 0.0
    %3552 = vmatpush1.msra.mxu0 0.0
    %3553 = vmatprep.subr.mxu0 0.0
    %3554 = vmatpush1.msra.mxu0 0.0
    %3555 = vmatprep.subr.mxu0 0.0
    %3556 = vmatpush1.msra.mxu0 0.0
    %3557 = vmatprep.subr.mxu0 0.0
    %3558 = vmatpush1.msra.mxu0 0.0
    %3559 = vmatprep.subr.mxu0 0.0
    %3560 = vmatpush1.msra.mxu0 0.0
    %3561 = vmatprep.subr.mxu0 0.0
    %3562 = vmatpush1.msra.mxu0 0.0
    %3563 = vmatprep.subr.mxu0 0.0
    %3564 = vmatpush1.msra.mxu0 0.0
    %3565 = vmatprep.subr.mxu0 0.0
    %3566 = vmatpush1.msra.mxu0 0.0
    %3567 = vmatprep.subr.mxu0 0.0
    %3568 = vmatpush1.msra.mxu0 0.0
    %3569 = vmatprep.subr.mxu0 0.0
    %3570 = vmatpush1.msra.mxu0 0.0
    %3571 = vmatprep.subr.mxu0 0.0
    %3572 = vmatpush1.msra.mxu0 0.0
    %3573 = vmatprep.subr.mxu0 0.0
    %3574 = vmatpush1.msra.mxu0 0.0
    %3575 = vmatprep.subr.mxu0 0.0
    %3576 = vmatpush1.msra.mxu0 0.0
    %3577 = vmatprep.mubr.f32.mxu0 0.0
    %3578 = vmatmul.mubr.f32.gmra.mrb[0].mxu0 %v3375
    %v3579 = vpop.f32.mrb[0].mxu0
    %v3580 = vadd.f32 %v3486, %v3579
    %v3581 = vpop.f32.mrb[0].mxu0
    %v3582 = vadd.f32 %v3490, %v3581
    %3583 = vmatprep.mubr.f32.mxu0 0.0
    %3584 = vmatmul.mubr.f32.gmra.mrb[0].mxu0 %v3376
    %v3585 = vpop.f32.mrb[0].mxu0
    %v3586 = vpop.f32.mrb[0].mxu0
    %3587 = vdwg.mxu0
    %3588 = vmatprep.subr.mxu0 %v3388
    %3589 = vmatpush1.msra.mxu0 %v3387
    %3590 = vmatprep.subr.mxu0 %v3394
    %3591 = vmatpush1.msra.mxu0 %v3393
    %3592 = vmatprep.subr.mxu0 %v3400
    %3593 = vmatpush1.msra.mxu0 %v3399
    %3594 = vmatprep.subr.mxu0 %v3406
    %3595 = vmatpush1.msra.mxu0 %v3405
    %3596 = vmatprep.subr.mxu0 %v3412
    %3597 = vmatpush1.msra.mxu0 %v3411
    %3598 = vmatprep.subr.mxu0 %v3418
    %3599 = vmatpush1.msra.mxu0 %v3417
    %3600 = vmatprep.subr.mxu0 %v3424
    %3601 = vmatpush1.msra.mxu0 %v3423
    %3602 = vmatprep.subr.mxu0 %v3430
    %3603 = vmatpush1.msra.mxu0 %v3429
    %3604 = vmatprep.subr.mxu0 %v3436
    %3605 = vmatpush1.msra.mxu0 %v3435
    %3606 = vmatprep.subr.mxu0 %v3442
    %3607 = vmatpush1.msra.mxu0 %v3441
    %3608 = vmatprep.subr.mxu0 %v3448
    %3609 = vmatpush1.msra.mxu0 %v3447
    %3610 = vmatprep.subr.mxu0 %v3454
    %3611 = vmatpush1.msra.mxu0 %v3453
    %3612 = vmatprep.subr.mxu0 %v3460
    %3613 = vmatpush1.msra.mxu0 %v3459
    %3614 = vmatprep.subr.mxu0 %v3466
    %3615 = vmatpush1.msra.mxu0 %v3465
    %3616 = vmatprep.subr.mxu0 %v3472
    %3617 = vmatpush1.msra.mxu0 %v3471
    %3618 = vmatprep.subr.mxu0 %v3478
    %3619 = vmatpush1.msra.mxu0 %v3477
    %3620 = vmatprep.subr.mxu0 0.0
    %3621 = vmatpush1.msra.mxu0 0.0
    %3622 = vmatprep.subr.mxu0 0.0
    %3623 = vmatpush1.msra.mxu0 0.0
    %3624 = vmatprep.subr.mxu0 0.0
    %3625 = vmatpush1.msra.mxu0 0.0
    %3626 = vmatprep.subr.mxu0 0.0
    %3627 = vmatpush1.msra.mxu0 0.0
    %3628 = vmatprep.subr.mxu0 0.0
    %3629 = vmatpush1.msra.mxu0 0.0
    %3630 = vmatprep.subr.mxu0 0.0
    %3631 = vmatpush1.msra.mxu0 0.0
    %3632 = vmatprep.subr.mxu0 0.0
    %3633 = vmatpush1.msra.mxu0 0.0
    %3634 = vmatprep.subr.mxu0 0.0
    %3635 = vmatpush1.msra.mxu0 0.0
    %3636 = vmatprep.subr.mxu0 0.0
    %3637 = vmatpush1.msra.mxu0 0.0
    %3638 = vmatprep.subr.mxu0 0.0
    %3639 = vmatpush1.msra.mxu0 0.0
    %3640 = vmatprep.subr.mxu0 0.0
    %3641 = vmatpush1.msra.mxu0 0.0
    %3642 = vmatprep.subr.mxu0 0.0
    %3643 = vmatpush1.msra.mxu0 0.0
    %3644 = vmatprep.subr.mxu0 0.0
    %3645 = vmatpush1.msra.mxu0 0.0
    %3646 = vmatprep.subr.mxu0 0.0
    %3647 = vmatpush1.msra.mxu0 0.0
    %3648 = vmatprep.subr.mxu0 0.0
    %3649 = vmatpush1.msra.mxu0 0.0
    %3650 = vmatprep.subr.mxu0 0.0
    %3651 = vmatpush1.msra.mxu0 0.0
    %3652 = vmatprep.mubr.f32.mxu0 0.0
    %3653 = vmatmul.mubr.f32.gmra.mrb[0].mxu0 %v3375
    %v3654 = vpop.f32.mrb[0].mxu0
    %v3655 = vadd.f32 %v3494, %v3654
    %v3656 = vpop.f32.mrb[0].mxu0
    %3657 = vmatprep.mubr.f32.mxu0 0.0
    %3658 = vmatmul.mubr.f32.gmra.mrb[0].mxu0 %v3376
    %v3659 = vpop.f32.mrb[0].mxu0
    %v3660 = vpop.f32.mrb[0].mxu0
    %v3661 = vadd.f32 %v3498, %v3660
    %3662 = vdwg.mxu0
    %3663 = vmatprep.subr.mxu0 %v3390
    %3664 = vmatpush1.msra.mxu0 %v3389
    %3665 = vmatprep.subr.mxu0 %v3396
    %3666 = vmatpush1.msra.mxu0 %v3395
    %3667 = vmatprep.subr.mxu0 %v3402
    %3668 = vmatpush1.msra.mxu0 %v3401
    %3669 = vmatprep.subr.mxu0 %v3408
    %3670 = vmatpush1.msra.mxu0 %v3407
    %3671 = vmatprep.subr.mxu0 %v3414
    %3672 = vmatpush1.msra.mxu0 %v3413
    %3673 = vmatprep.subr.mxu0 %v3420
    %3674 = vmatpush1.msra.mxu0 %v3419
    %3675 = vmatprep.subr.mxu0 %v3426
    %3676 = vmatpush1.msra.mxu0 %v3425
    %3677 = vmatprep.subr.mxu0 %v3432
    %3678 = vmatpush1.msra.mxu0 %v3431
    %3679 = vmatprep.subr.mxu0 %v3438
    %3680 = vmatpush1.msra.mxu0 %v3437
    %3681 = vmatprep.subr.mxu0 %v3444
    %3682 = vmatpush1.msra.mxu0 %v3443
    %3683 = vmatprep.subr.mxu0 %v3450
    %3684 = vmatpush1.msra.mxu0 %v3449
    %3685 = vmatprep.subr.mxu0 %v3456
    %3686 = vmatpush1.msra.mxu0 %v3455
    %3687 = vmatprep.subr.mxu0 %v3462
    %3688 = vmatpush1.msra.mxu0 %v3461
    %3689 = vmatprep.subr.mxu0 %v3468
    %3690 = vmatpush1.msra.mxu0 %v3467
    %3691 = vmatprep.subr.mxu0 %v3474
    %3692 = vmatpush1.msra.mxu0 %v3473
    %3693 = vmatprep.subr.mxu0 %v3480
    %3694 = vmatpush1.msra.mxu0 %v3479
    %3695 = vmatprep.subr.mxu0 0.0
    %3696 = vmatpush1.msra.mxu0 0.0
    %3697 = vmatprep.subr.mxu0 0.0
    %3698 = vmatpush1.msra.mxu0 0.0
    %3699 = vmatprep.subr.mxu0 0.0
    %3700 = vmatpush1.msra.mxu0 0.0
    %3701 = vmatprep.subr.mxu0 0.0
    %3702 = vmatpush1.msra.mxu0 0.0
    %3703 = vmatprep.subr.mxu0 0.0
    %3704 = vmatpush1.msra.mxu0 0.0
    %3705 = vmatprep.subr.mxu0 0.0
    %3706 = vmatpush1.msra.mxu0 0.0
    %3707 = vmatprep.subr.mxu0 0.0
    %3708 = vmatpush1.msra.mxu0 0.0
    %3709 = vmatprep.subr.mxu0 0.0
    %3710 = vmatpush1.msra.mxu0 0.0
    %3711 = vmatprep.subr.mxu0 0.0
    %3712 = vmatpush1.msra.mxu0 0.0
    %3713 = vmatprep.subr.mxu0 0.0
    %3714 = vmatpush1.msra.mxu0 0.0
    %3715 = vmatprep.subr.mxu0 0.0
    %3716 = vmatpush1.msra.mxu0 0.0
    %3717 = vmatprep.subr.mxu0 0.0
    %3718 = vmatpush1.msra.mxu0 0.0
    %3719 = vmatprep.subr.mxu0 0.0
    %3720 = vmatpush1.msra.mxu0 0.0
    %3721 = vmatprep.subr.mxu0 0.0
    %3722 = vmatpush1.msra.mxu0 0.0
    %3723 = vmatprep.subr.mxu0 0.0
    %3724 = vmatpush1.msra.mxu0 0.0
    %3725 = vmatprep.subr.mxu0 0.0
    %3726 = vmatpush1.msra.mxu0 0.0
    %3727 = vmatprep.mubr.f32.mxu0 0.0
    %3728 = vmatmul.mubr.f32.gmra.mrb[0].mxu0 %v3375
    %v3729 = vpop.f32.mrb[0].mxu0
    %v3730 = vpop.f32.mrb[0].mxu0
    %3731 = vmatprep.mubr.f32.mxu0 0.0
    %3732 = vmatmul.mubr.f32.gmra.mrb[0].mxu0 %v3376
    %v3733 = vpop.f32.mrb[0].mxu0
    %v3734 = vadd.f32 %v3502, %v3733
    %v3735 = vpop.f32.mrb[0].mxu0
    %v3736 = vadd.f32 %v3506, %v3735
    %3737 = vdwg.mxu0
    %v3738 = vadd.f32 %v3379, %v3580
    %v3739 = vadd.f32 %v3382, %v3661
    %v3740 = vxor.u32 %v3738, 2147483648
    %v3741 = vxor.u32 %v3739, 2147483648
    %v3742 = vmul.f32 %v3740, 1.442695
    %v3743 = vpow.pop %v3742
    %v3744 = vmul.f32 %v3741, 1.442695
    %v3745 = vpow.pop %v3744
    %v3746 = vadd.f32 %v3743, 1.0
    %v3747 = vadd.f32 %v3745, 1.0
    %v3748 = vrcp.pop %v3746
    %v3749 = vmul.f32 1.0, %v3748
    %v3750 = vrcp.pop %v3747
    %v3751 = vmul.f32 1.0, %v3750
    %v3752 = vadd.f32 %v3380, %v3582
    %v3753 = vadd.f32 %v3383, %v3734
    %v3754 = vxor.u32 %v3752, 2147483648
    %v3755 = vxor.u32 %v3753, 2147483648
    %v3756 = vmul.f32 %v3754, 1.442695
    %v3757 = vpow.pop %v3756
    %v3758 = vmul.f32 %v3755, 1.442695
    %v3759 = vpow.pop %v3758
    %v3760 = vadd.f32 %v3757, 1.0
    %v3761 = vadd.f32 %v3759, 1.0
    %v3762 = vrcp.pop %v3760
    %v3763 = vmul.f32 1.0, %v3762
    %v3764 = vrcp.pop %v3761
    %v3765 = vmul.f32 1.0, %v3764
    %v3766 = vmul.f32 %v3749, %v3655
    %v3767 = vmul.f32 %v3751, %v3736
    %v3768 = vadd.f32 %v3381, %v3766
    %v3769 = vadd.f32 %v3384, %v3767
    %v3770 = vtanh.pop %v3768
    %v3771 = vtanh.pop %v3769
    %v3772 = vsub.f32 1.0, %v3763
    %v3773 = vsub.f32 1.0, %v3765
    %v3774 = vmul.f32 %v3772, %v3770
    %v3775 = vmul.f32 %v3773, %v3771
    %v3776 = vmul.f32 %v3763, %v3375
    %v3777 = vmul.f32 %v3765, %v3376
    %v3778 = vadd.f32 %v3774, %v3776
    %v3779 = vadd.f32 %v3775, %v3777
    %3780 = vst [vmem:[#allocation3 + $0x60] sm:$0xff] %v3778
    %3781 = vst [vmem:[#allocation3 + $0x18] sm:$0xff] %v3779
    %v3782 = vld [vmem:[#allocation2 + $0x150] sm:$0xff]
    %v3783 = vld [vmem:[#allocation2 + $0x158] sm:$0xff]
    %v3784 = vld [vmem:[#allocation2 + $0x160] sm:$0xff]
    %v3785 = vld [vmem:[#allocation2 + $0x18] sm:$0xff]
    %v3786 = vld [vmem:[#allocation2 + $0x20] sm:$0xff]
    %v3787 = vld [vmem:[#allocation2 + $0x28] sm:$0xff]
    %v3788 = vld [vmem:[#allocation11] sm:$0xff]
    %v3789 = vld [vmem:[#allocation11 + $0x8] sm:$0xff]
    %v3790 = vld [vmem:[#allocation11 + $0x10] sm:$0xff]
    %v3791 = vld [vmem:[#allocation11 + $0x18] sm:$0xff]
    %v3792 = vld [vmem:[#allocation11 + $0x20] sm:$0xff]
    %v3793 = vld [vmem:[#allocation11 + $0x28] sm:$0xff]
    %v3794 = vld [vmem:[#allocation11 + $0x30] sm:$0xff]
    %v3795 = vld [vmem:[#allocation11 + $0x38] sm:$0xff]
    %v3796 = vld [vmem:[#allocation11 + $0x40] sm:$0xff]
    %v3797 = vld [vmem:[#allocation11 + $0x48] sm:$0xff]
    %v3798 = vld [vmem:[#allocation11 + $0x50] sm:$0xff]
    %v3799 = vld [vmem:[#allocation11 + $0x58] sm:$0xff]
    %v3800 = vld [vmem:[#allocation11 + $0x60] sm:$0xff]
    %v3801 = vld [vmem:[#allocation11 + $0x68] sm:$0xff]
    %v3802 = vld [vmem:[#allocation11 + $0x70] sm:$0xff]
    %v3803 = vld [vmem:[#allocation11 + $0x78] sm:$0xff]
    %v3804 = vld [vmem:[#allocation11 + $0x80] sm:$0xff]
    %v3805 = vld [vmem:[#allocation11 + $0x88] sm:$0xff]
    %v3806 = vld [vmem:[#allocation11 + $0x90] sm:$0xff]
    %v3807 = vld [vmem:[#allocation11 + $0x98] sm:$0xff]
    %v3808 = vld [vmem:[#allocation11 + $0xa0] sm:$0xff]
    %v3809 = vld [vmem:[#allocation11 + $0xa8] sm:$0xff]
    %v3810 = vld [vmem:[#allocation11 + $0xb0] sm:$0xff]
    %v3811 = vld [vmem:[#allocation11 + $0xb8] sm:$0xff]
    %v3812 = vld [vmem:[#allocation11 + $0xc0] sm:$0xff]
    %v3813 = vld [vmem:[#allocation11 + $0xc8] sm:$0xff]
    %v3814 = vld [vmem:[#allocation11 + $0xd0] sm:$0xff]
    %v3815 = vld [vmem:[#allocation11 + $0xd8] sm:$0xff]
    %v3816 = vld [vmem:[#allocation11 + $0xe0] sm:$0xff]
    %v3817 = vld [vmem:[#allocation11 + $0xe8] sm:$0xff]
    %v3818 = vld [vmem:[#allocation11 + $0xf0] sm:$0xff]
    %v3819 = vld [vmem:[#allocation11 + $0xf8] sm:$0xff]
    %v3820 = vld [vmem:[#allocation11 + $0x100] sm:$0xff]
    %v3821 = vld [vmem:[#allocation11 + $0x108] sm:$0xff]
    %v3822 = vld [vmem:[#allocation11 + $0x110] sm:$0xff]
    %v3823 = vld [vmem:[#allocation11 + $0x118] sm:$0xff]
    %v3824 = vld [vmem:[#allocation11 + $0x120] sm:$0xff]
    %v3825 = vld [vmem:[#allocation11 + $0x128] sm:$0xff]
    %v3826 = vld [vmem:[#allocation11 + $0x130] sm:$0xff]
    %v3827 = vld [vmem:[#allocation11 + $0x138] sm:$0xff]
    %v3828 = vld [vmem:[#allocation11 + $0x140] sm:$0xff]
    %v3829 = vld [vmem:[#allocation11 + $0x148] sm:$0xff]
    %v3830 = vld [vmem:[#allocation11 + $0x150] sm:$0xff]
    %v3831 = vld [vmem:[#allocation11 + $0x158] sm:$0xff]
    %v3832 = vld [vmem:[#allocation11 + $0x160] sm:$0xff]
    %v3833 = vld [vmem:[#allocation11 + $0x168] sm:$0xff]
    %v3834 = vld [vmem:[#allocation11 + $0x170] sm:$0xff]
    %v3835 = vld [vmem:[#allocation11 + $0x178] sm:$0xff]
    %v3836 = vld [vmem:[#allocation11 + $0x180] sm:$0xff]
    %v3837 = vld [vmem:[#allocation11 + $0x188] sm:$0xff]
    %v3838 = vld [vmem:[#allocation11 + $0x190] sm:$0xff]
    %v3839 = vld [vmem:[#allocation11 + $0x198] sm:$0xff]
    %v3840 = vld [vmem:[#allocation11 + $0x1a0] sm:$0xff]
    %v3841 = vld [vmem:[#allocation11 + $0x1a8] sm:$0xff]
    %v3842 = vld [vmem:[#allocation11 + $0x1b0] sm:$0xff]
    %v3843 = vld [vmem:[#allocation11 + $0x1b8] sm:$0xff]
    %v3844 = vld [vmem:[#allocation11 + $0x1c0] sm:$0xff]
    %v3845 = vld [vmem:[#allocation11 + $0x1c8] sm:$0xff]
    %v3846 = vld [vmem:[#allocation11 + $0x1d0] sm:$0xff]
    %v3847 = vld [vmem:[#allocation11 + $0x1d8] sm:$0xff]
    %v3848 = vld [vmem:[#allocation11 + $0x1e0] sm:$0xff]
    %v3849 = vld [vmem:[#allocation11 + $0x1e8] sm:$0xff]
    %v3850 = vld [vmem:[#allocation11 + $0x1f0] sm:$0xff]
    %v3851 = vld [vmem:[#allocation11 + $0x1f8] sm:$0xff]
    %v3852 = vld [vmem:[#allocation11 + $0x200] sm:$0xff]
    %v3853 = vld [vmem:[#allocation11 + $0x208] sm:$0xff]
    %v3854 = vld [vmem:[#allocation11 + $0x210] sm:$0xff]
    %v3855 = vld [vmem:[#allocation11 + $0x218] sm:$0xff]
    %v3856 = vld [vmem:[#allocation11 + $0x220] sm:$0xff]
    %v3857 = vld [vmem:[#allocation11 + $0x228] sm:$0xff]
    %v3858 = vld [vmem:[#allocation11 + $0x230] sm:$0xff]
    %v3859 = vld [vmem:[#allocation11 + $0x238] sm:$0xff]
    %v3860 = vld [vmem:[#allocation11 + $0x240] sm:$0xff]
    %v3861 = vld [vmem:[#allocation11 + $0x248] sm:$0xff]
    %v3862 = vld [vmem:[#allocation11 + $0x250] sm:$0xff]
    %v3863 = vld [vmem:[#allocation11 + $0x258] sm:$0xff]
    %v3864 = vld [vmem:[#allocation11 + $0x260] sm:$0xff]
    %v3865 = vld [vmem:[#allocation11 + $0x268] sm:$0xff]
    %v3866 = vld [vmem:[#allocation11 + $0x270] sm:$0xff]
    %v3867 = vld [vmem:[#allocation11 + $0x278] sm:$0xff]
    %v3868 = vld [vmem:[#allocation11 + $0x280] sm:$0xff]
    %v3869 = vld [vmem:[#allocation11 + $0x288] sm:$0xff]
    %v3870 = vld [vmem:[#allocation11 + $0x290] sm:$0xff]
    %v3871 = vld [vmem:[#allocation11 + $0x298] sm:$0xff]
    %v3872 = vld [vmem:[#allocation11 + $0x2a0] sm:$0xff]
    %v3873 = vld [vmem:[#allocation11 + $0x2a8] sm:$0xff]
    %v3874 = vld [vmem:[#allocation11 + $0x2b0] sm:$0xff]
    %v3875 = vld [vmem:[#allocation11 + $0x2b8] sm:$0xff]
    %v3876 = vld [vmem:[#allocation11 + $0x2c0] sm:$0xff]
    %v3877 = vld [vmem:[#allocation11 + $0x2c8] sm:$0xff]
    %v3878 = vld [vmem:[#allocation11 + $0x2d0] sm:$0xff]
    %v3879 = vld [vmem:[#allocation11 + $0x2d8] sm:$0xff]
    %v3880 = vld [vmem:[#allocation11 + $0x2e0] sm:$0xff]
    %v3881 = vld [vmem:[#allocation11 + $0x2e8] sm:$0xff]
    %v3882 = vld [vmem:[#allocation11 + $0x2f0] sm:$0xff]
    %v3883 = vld [vmem:[#allocation11 + $0x2f8] sm:$0xff]
    %v3884 = vld [vmem:[#allocation12] sm:$0x3f]
    %v3886 = vlaneseq
    %v3887 = vshrl.u32 %v3886, 7
    %v3888 = vsub.s32 0, %v3887
    %v3889 = vrot.slane %v3884, %v3888
    %v3890 = vlaneseq
    %v3891 = vshrl.u32 %v3890, 7
    %v3892 = vsub.s32 1, %v3891
    %v3893 = vrot.slane %v3884, %v3892
    %v3894 = vlaneseq
    %v3895 = vshrl.u32 %v3894, 7
    %v3896 = vsub.s32 2, %v3895
    %v3897 = vrot.slane %v3884, %v3896
    %v3898 = vlaneseq
    %v3899 = vshrl.u32 %v3898, 7
    %v3900 = vsub.s32 3, %v3899
    %v3901 = vrot.slane %v3884, %v3900
    %v3902 = vlaneseq
    %v3903 = vshrl.u32 %v3902, 7
    %v3904 = vsub.s32 4, %v3903
    %v3905 = vrot.slane %v3884, %v3904
    %v3906 = vlaneseq
    %v3907 = vshrl.u32 %v3906, 7
    %v3908 = vsub.s32 5, %v3907
    %v3909 = vrot.slane %v3884, %v3908
    %3916 = vmatprep.subr.mxu0 %v3789
    %3917 = vmatpush1.msra.mxu0 %v3788
    %3918 = vmatprep.subr.mxu0 %v3795
    %3919 = vmatpush1.msra.mxu0 %v3794
    %3920 = vmatprep.subr.mxu0 %v3801
    %3921 = vmatpush1.msra.mxu0 %v3800
    %3922 = vmatprep.subr.mxu0 %v3807
    %3923 = vmatpush1.msra.mxu0 %v3806
    %3924 = vmatprep.subr.mxu0 %v3813
    %3925 = vmatpush1.msra.mxu0 %v3812
    %3926 = vmatprep.subr.mxu0 %v3819
    %3927 = vmatpush1.msra.mxu0 %v3818
    %3928 = vmatprep.subr.mxu0 %v3825
    %3929 = vmatpush1.msra.mxu0 %v3824
    %3930 = vmatprep.subr.mxu0 %v3831
    %3931 = vmatpush1.msra.mxu0 %v3830
    %3932 = vmatprep.subr.mxu0 %v3837
    %3933 = vmatpush1.msra.mxu0 %v3836
    %3934 = vmatprep.subr.mxu0 %v3843
    %3935 = vmatpush1.msra.mxu0 %v3842
    %3936 = vmatprep.subr.mxu0 %v3849
    %3937 = vmatpush1.msra.mxu0 %v3848
    %3938 = vmatprep.subr.mxu0 %v3855
    %3939 = vmatpush1.msra.mxu0 %v3854
    %3940 = vmatprep.subr.mxu0 %v3861
    %3941 = vmatpush1.msra.mxu0 %v3860
    %3942 = vmatprep.subr.mxu0 %v3867
    %3943 = vmatpush1.msra.mxu0 %v3866
    %3944 = vmatprep.subr.mxu0 %v3873
    %3945 = vmatpush1.msra.mxu0 %v3872
    %3946 = vmatprep.subr.mxu0 %v3879
    %3947 = vmatpush1.msra.mxu0 %v3878
    %3948 = vmatprep.subr.mxu0 0.0
    %3949 = vmatpush1.msra.mxu0 0.0
    %3950 = vmatprep.subr.mxu0 0.0
    %3951 = vmatpush1.msra.mxu0 0.0
    %3952 = vmatprep.subr.mxu0 0.0
    %3953 = vmatpush1.msra.mxu0 0.0
    %3954 = vmatprep.subr.mxu0 0.0
    %3955 = vmatpush1.msra.mxu0 0.0
    %3956 = vmatprep.subr.mxu0 0.0
    %3957 = vmatpush1.msra.mxu0 0.0
    %3958 = vmatprep.subr.mxu0 0.0
    %3959 = vmatpush1.msra.mxu0 0.0
    %3960 = vmatprep.subr.mxu0 0.0
    %3961 = vmatpush1.msra.mxu0 0.0
    %3962 = vmatprep.subr.mxu0 0.0
    %3963 = vmatpush1.msra.mxu0 0.0
    %3964 = vmatprep.subr.mxu0 0.0
    %3965 = vmatpush1.msra.mxu0 0.0
    %3966 = vmatprep.subr.mxu0 0.0
    %3967 = vmatpush1.msra.mxu0 0.0
    %3968 = vmatprep.subr.mxu0 0.0
    %3969 = vmatpush1.msra.mxu0 0.0
    %3970 = vmatprep.subr.mxu0 0.0
    %3971 = vmatpush1.msra.mxu0 0.0
    %3972 = vmatprep.subr.mxu0 0.0
    %3973 = vmatpush1.msra.mxu0 0.0
    %3974 = vmatprep.subr.mxu0 0.0
    %3975 = vmatpush1.msra.mxu0 0.0
    %3976 = vmatprep.subr.mxu0 0.0
    %3977 = vmatpush1.msra.mxu0 0.0
    %3978 = vmatprep.subr.mxu0 0.0
    %3979 = vmatpush1.msra.mxu0 0.0
    %3980 = vmatprep.mubr.f32.mxu0 0.0
    %3981 = vmatmul.mubr.f32.gmra.mrb[0].mxu0 %v3778
    %v3982 = vpop.f32.mrb[0].mxu0
    %v3983 = vadd.f32 %v3889, %v3982
    %v3984 = vpop.f32.mrb[0].mxu0
    %v3985 = vadd.f32 %v3893, %v3984
    %3986 = vmatprep.mubr.f32.mxu0 0.0
    %3987 = vmatmul.mubr.f32.gmra.mrb[0].mxu0 %v3779
    %v3988 = vpop.f32.mrb[0].mxu0
    %v3989 = vpop.f32.mrb[0].mxu0
    %3990 = vdwg.mxu0
    %3991 = vmatprep.subr.mxu0 %v3791
    %3992 = vmatpush1.msra.mxu0 %v3790
    %3993 = vmatprep.subr.mxu0 %v3797
    %3994 = vmatpush1.msra.mxu0 %v3796
    %3995 = vmatprep.subr.mxu0 %v3803
    %3996 = vmatpush1.msra.mxu0 %v3802
    %3997 = vmatprep.subr.mxu0 %v3809
    %3998 = vmatpush1.msra.mxu0 %v3808
    %3999 = vmatprep.subr.mxu0 %v3815
    %4000 = vmatpush1.msra.mxu0 %v3814
    %4001 = vmatprep.subr.mxu0 %v3821
    %4002 = vmatpush1.msra.mxu0 %v3820
    %4003 = vmatprep.subr.mxu0 %v3827
    %4004 = vmatpush1.msra.mxu0 %v3826
    %4005 = vmatprep.subr.mxu0 %v3833
    %4006 = vmatpush1.msra.mxu0 %v3832
    %4007 = vmatprep.subr.mxu0 %v3839
    %4008 = vmatpush1.msra.mxu0 %v3838
    %4009 = vmatprep.subr.mxu0 %v3845
    %4010 = vmatpush1.msra.mxu0 %v3844
    %4011 = vmatprep.subr.mxu0 %v3851
    %4012 = vmatpush1.msra.mxu0 %v3850
    %4013 = vmatprep.subr.mxu0 %v3857
    %4014 = vmatpush1.msra.mxu0 %v3856
    %4015 = vmatprep.subr.mxu0 %v3863
    %4016 = vmatpush1.msra.mxu0 %v3862
    %4017 = vmatprep.subr.mxu0 %v3869
    %4018 = vmatpush1.msra.mxu0 %v3868
    %4019 = vmatprep.subr.mxu0 %v3875
    %4020 = vmatpush1.msra.mxu0 %v3874
    %4021 = vmatprep.subr.mxu0 %v3881
    %4022 = vmatpush1.msra.mxu0 %v3880
    %4023 = vmatprep.subr.mxu0 0.0
    %4024 = vmatpush1.msra.mxu0 0.0
    %4025 = vmatprep.subr.mxu0 0.0
    %4026 = vmatpush1.msra.mxu0 0.0
    %4027 = vmatprep.subr.mxu0 0.0
    %4028 = vmatpush1.msra.mxu0 0.0
    %4029 = vmatprep.subr.mxu0 0.0
    %4030 = vmatpush1.msra.mxu0 0.0
    %4031 = vmatprep.subr.mxu0 0.0
    %4032 = vmatpush1.msra.mxu0 0.0
    %4033 = vmatprep.subr.mxu0 0.0
    %4034 = vmatpush1.msra.mxu0 0.0
    %4035 = vmatprep.subr.mxu0 0.0
    %4036 = vmatpush1.msra.mxu0 0.0
    %4037 = vmatprep.subr.mxu0 0.0
    %4038 = vmatpush1.msra.mxu0 0.0
    %4039 = vmatprep.subr.mxu0 0.0
    %4040 = vmatpush1.msra.mxu0 0.0
    %4041 = vmatprep.subr.mxu0 0.0
    %4042 = vmatpush1.msra.mxu0 0.0
    %4043 = vmatprep.subr.mxu0 0.0
    %4044 = vmatpush1.msra.mxu0 0.0
    %4045 = vmatprep.subr.mxu0 0.0
    %4046 = vmatpush1.msra.mxu0 0.0
    %4047 = vmatprep.subr.mxu0 0.0
    %4048 = vmatpush1.msra.mxu0 0.0
    %4049 = vmatprep.subr.mxu0 0.0
    %4050 = vmatpush1.msra.mxu0 0.0
    %4051 = vmatprep.subr.mxu0 0.0
    %4052 = vmatpush1.msra.mxu0 0.0
    %4053 = vmatprep.subr.mxu0 0.0
    %4054 = vmatpush1.msra.mxu0 0.0
    %4055 = vmatprep.mubr.f32.mxu0 0.0
    %4056 = vmatmul.mubr.f32.gmra.mrb[0].mxu0 %v3778
    %v4057 = vpop.f32.mrb[0].mxu0
    %v4058 = vadd.f32 %v3897, %v4057
    %v4059 = vpop.f32.mrb[0].mxu0
    %4060 = vmatprep.mubr.f32.mxu0 0.0
    %4061 = vmatmul.mubr.f32.gmra.mrb[0].mxu0 %v3779
    %v4062 = vpop.f32.mrb[0].mxu0
    %v4063 = vpop.f32.mrb[0].mxu0
    %v4064 = vadd.f32 %v3901, %v4063
    %4065 = vdwg.mxu0
    %4066 = vmatprep.subr.mxu0 %v3793
    %4067 = vmatpush1.msra.mxu0 %v3792
    %4068 = vmatprep.subr.mxu0 %v3799
    %4069 = vmatpush1.msra.mxu0 %v3798
    %4070 = vmatprep.subr.mxu0 %v3805
    %4071 = vmatpush1.msra.mxu0 %v3804
    %4072 = vmatprep.subr.mxu0 %v3811
    %4073 = vmatpush1.msra.mxu0 %v3810
    %4074 = vmatprep.subr.mxu0 %v3817
    %4075 = vmatpush1.msra.mxu0 %v3816
    %4076 = vmatprep.subr.mxu0 %v3823
    %4077 = vmatpush1.msra.mxu0 %v3822
    %4078 = vmatprep.subr.mxu0 %v3829
    %4079 = vmatpush1.msra.mxu0 %v3828
    %4080 = vmatprep.subr.mxu0 %v3835
    %4081 = vmatpush1.msra.mxu0 %v3834
    %4082 = vmatprep.subr.mxu0 %v3841
    %4083 = vmatpush1.msra.mxu0 %v3840
    %4084 = vmatprep.subr.mxu0 %v3847
    %4085 = vmatpush1.msra.mxu0 %v3846
    %4086 = vmatprep.subr.mxu0 %v3853
    %4087 = vmatpush1.msra.mxu0 %v3852
    %4088 = vmatprep.subr.mxu0 %v3859
    %4089 = vmatpush1.msra.mxu0 %v3858
    %4090 = vmatprep.subr.mxu0 %v3865
    %4091 = vmatpush1.msra.mxu0 %v3864
    %4092 = vmatprep.subr.mxu0 %v3871
    %4093 = vmatpush1.msra.mxu0 %v3870
    %4094 = vmatprep.subr.mxu0 %v3877
    %4095 = vmatpush1.msra.mxu0 %v3876
    %4096 = vmatprep.subr.mxu0 %v3883
    %4097 = vmatpush1.msra.mxu0 %v3882
    %4098 = vmatprep.subr.mxu0 0.0
    %4099 = vmatpush1.msra.mxu0 0.0
    %4100 = vmatprep.subr.mxu0 0.0
    %4101 = vmatpush1.msra.mxu0 0.0
    %4102 = vmatprep.subr.mxu0 0.0
    %4103 = vmatpush1.msra.mxu0 0.0
    %4104 = vmatprep.subr.mxu0 0.0
    %4105 = vmatpush1.msra.mxu0 0.0
    %4106 = vmatprep.subr.mxu0 0.0
    %4107 = vmatpush1.msra.mxu0 0.0
    %4108 = vmatprep.subr.mxu0 0.0
    %4109 = vmatpush1.msra.mxu0 0.0
    %4110 = vmatprep.subr.mxu0 0.0
    %4111 = vmatpush1.msra.mxu0 0.0
    %4112 = vmatprep.subr.mxu0 0.0
    %4113 = vmatpush1.msra.mxu0 0.0
    %4114 = vmatprep.subr.mxu0 0.0
    %4115 = vmatpush1.msra.mxu0 0.0
    %4116 = vmatprep.subr.mxu0 0.0
    %4117 = vmatpush1.msra.mxu0 0.0
    %4118 = vmatprep.subr.mxu0 0.0
    %4119 = vmatpush1.msra.mxu0 0.0
    %4120 = vmatprep.subr.mxu0 0.0
    %4121 = vmatpush1.msra.mxu0 0.0
    %4122 = vmatprep.subr.mxu0 0.0
    %4123 = vmatpush1.msra.mxu0 0.0
    %4124 = vmatprep.subr.mxu0 0.0
    %4125 = vmatpush1.msra.mxu0 0.0
    %4126 = vmatprep.subr.mxu0 0.0
    %4127 = vmatpush1.msra.mxu0 0.0
    %4128 = vmatprep.subr.mxu0 0.0
    %4129 = vmatpush1.msra.mxu0 0.0
    %4130 = vmatprep.mubr.f32.mxu0 0.0
    %4131 = vmatmul.mubr.f32.gmra.mrb[0].mxu0 %v3778
    %v4132 = vpop.f32.mrb[0].mxu0
    %v4133 = vpop.f32.mrb[0].mxu0
    %4134 = vmatprep.mubr.f32.mxu0 0.0
    %4135 = vmatmul.mubr.f32.gmra.mrb[0].mxu0 %v3779
    %v4136 = vpop.f32.mrb[0].mxu0
    %v4137 = vadd.f32 %v3905, %v4136
    %v4138 = vpop.f32.mrb[0].mxu0
    %v4139 = vadd.f32 %v3909, %v4138
    %4140 = vdwg.mxu0
    %v4141 = vadd.f32 %v3782, %v3983
    %v4142 = vadd.f32 %v3785, %v4064
    %v4143 = vxor.u32 %v4141, 2147483648
    %v4144 = vxor.u32 %v4142, 2147483648
    %v4145 = vmul.f32 %v4143, 1.442695
    %v4146 = vpow.pop %v4145
    %v4147 = vmul.f32 %v4144, 1.442695
    %v4148 = vpow.pop %v4147
    %v4149 = vadd.f32 %v4146, 1.0
    %v4150 = vadd.f32 %v4148, 1.0
    %v4151 = vrcp.pop %v4149
    %v4152 = vmul.f32 1.0, %v4151
    %v4153 = vrcp.pop %v4150
    %v4154 = vmul.f32 1.0, %v4153
    %v4155 = vadd.f32 %v3783, %v3985
    %v4156 = vadd.f32 %v3786, %v4137
    %v4157 = vxor.u32 %v4155, 2147483648
    %v4158 = vxor.u32 %v4156, 2147483648
    %v4159 = vmul.f32 %v4157, 1.442695
    %v4160 = vpow.pop %v4159
    %v4161 = vmul.f32 %v4158, 1.442695
    %v4162 = vpow.pop %v4161
    %v4163 = vadd.f32 %v4160, 1.0
    %v4164 = vadd.f32 %v4162, 1.0
    %v4165 = vrcp.pop %v4163
    %v4166 = vmul.f32 1.0, %v4165
    %v4167 = vrcp.pop %v4164
    %v4168 = vmul.f32 1.0, %v4167
    %v4169 = vmul.f32 %v4152, %v4058
    %v4170 = vmul.f32 %v4154, %v4139
    %v4171 = vadd.f32 %v3784, %v4169
    %v4172 = vadd.f32 %v3787, %v4170
    %v4173 = vtanh.pop %v4171
    %v4174 = vtanh.pop %v4172
    %v4175 = vsub.f32 1.0, %v4166
    %v4176 = vsub.f32 1.0, %v4168
    %v4177 = vmul.f32 %v4175, %v4173
    %v4178 = vmul.f32 %v4176, %v4174
    %v4179 = vmul.f32 %v4166, %v3778
    %v4180 = vmul.f32 %v4168, %v3779
    %v4181 = vadd.f32 %v4177, %v4179
    %v4182 = vadd.f32 %v4178, %v4180
    %4183 = vst [vmem:[#allocation3 + $0x70] sm:$0xff] %v4181
    %4184 = vst [vmem:[#allocation3 + $0x8] sm:$0xff] %v4182
    %v4185 = vld [vmem:[#allocation3] sm:$0xff]
    %v4186 = vld [vmem:[#allocation3 + $0x8] sm:$0xff]
    %v4187 = vld [vmem:[#allocation3 + $0x10] sm:$0xff]
    %v4188 = vld [vmem:[#allocation3 + $0x18] sm:$0xff]
    %v4189 = vld [vmem:[#allocation3 + $0x20] sm:$0xff]
    %v4190 = vld [vmem:[#allocation3 + $0x28] sm:$0xff]
    %v4191 = vld [vmem:[#allocation3 + $0x30] sm:$0xff]
    %v4192 = vld [vmem:[#allocation3 + $0x38] sm:$0xff]
    %v4193 = vld [vmem:[#allocation3 + $0x40] sm:$0xff]
    %v4194 = vld [vmem:[#allocation3 + $0x48] sm:$0xff]
    %v4195 = vld [vmem:[#allocation3 + $0x50] sm:$0xff]
    %v4196 = vld [vmem:[#allocation3 + $0x58] sm:$0xff]
    %v4197 = vld [vmem:[#allocation3 + $0x60] sm:$0xff]
    %v4198 = vld [vmem:[#allocation3 + $0x68] sm:$0xff]
    %v4199 = vld [vmem:[#allocation3 + $0x70] sm:$0xff]
    %v4200 = vld [vmem:[#allocation3 + $0x78] sm:$0xff]
    %v4201 = vld [vmem:[#allocation14] sm:$0xff]
    %v4202 = vld [vmem:[#allocation14 + $0x8] sm:$0xff]
    %v4203 = vld [vmem:[#allocation14 + $0x10] sm:$0xff]
    %v4204 = vld [vmem:[#allocation14 + $0x18] sm:$0xff]
    %v4205 = vld [vmem:[#allocation14 + $0x20] sm:$0xff]
    %v4206 = vld [vmem:[#allocation14 + $0x28] sm:$0xff]
    %v4207 = vld [vmem:[#allocation14 + $0x30] sm:$0xff]
    %v4208 = vld [vmem:[#allocation14 + $0x38] sm:$0xff]
    %v4209 = vld [vmem:[#allocation14 + $0x40] sm:$0xff]
    %v4210 = vld [vmem:[#allocation14 + $0x48] sm:$0xff]
    %v4211 = vld [vmem:[#allocation14 + $0x50] sm:$0xff]
    %v4212 = vld [vmem:[#allocation14 + $0x58] sm:$0xff]
    %v4213 = vld [vmem:[#allocation14 + $0x60] sm:$0xff]
    %v4214 = vld [vmem:[#allocation14 + $0x68] sm:$0xff]
    %v4215 = vld [vmem:[#allocation14 + $0x70] sm:$0xff]
    %v4216 = vld [vmem:[#allocation14 + $0x78] sm:$0xff]
    %v4217 = vld [vmem:[#allocation14 + $0x80] sm:$0xff]
    %v4218 = vld [vmem:[#allocation14 + $0x88] sm:$0xff]
    %v4219 = vld [vmem:[#allocation14 + $0x90] sm:$0xff]
    %v4220 = vld [vmem:[#allocation14 + $0x98] sm:$0xff]
    %v4221 = vld [vmem:[#allocation14 + $0xa0] sm:$0xff]
    %v4222 = vld [vmem:[#allocation14 + $0xa8] sm:$0xff]
    %v4223 = vld [vmem:[#allocation14 + $0xb0] sm:$0xff]
    %v4224 = vld [vmem:[#allocation14 + $0xb8] sm:$0xff]
    %v4225 = vld [vmem:[#allocation14 + $0xc0] sm:$0xff]
    %v4226 = vld [vmem:[#allocation14 + $0xc8] sm:$0xff]
    %v4227 = vld [vmem:[#allocation14 + $0xd0] sm:$0xff]
    %v4228 = vld [vmem:[#allocation14 + $0xd8] sm:$0xff]
    %v4229 = vld [vmem:[#allocation14 + $0xe0] sm:$0xff]
    %v4230 = vld [vmem:[#allocation14 + $0xe8] sm:$0xff]
    %v4231 = vld [vmem:[#allocation14 + $0xf0] sm:$0xff]
    %v4232 = vld [vmem:[#allocation14 + $0xf8] sm:$0xff]
    %v4233 = vld [vmem:[#allocation15] sm:$0x1]
    %v4235 = vlaneseq
    %v4236 = vshrl.u32 %v4235, 7
    %v4237 = vsub.s32 0, %v4236
    %v4238 = vrot.slane %v4233, %v4237
    %4240 = vmatprep.subr.mxu0 0.0
    %4241 = vmatpush1.msra.mxu0 %v4201
    %4242 = vmatprep.subr.mxu0 0.0
    %4243 = vmatpush1.msra.mxu0 %v4202
    %4244 = vmatprep.subr.mxu0 0.0
    %4245 = vmatpush1.msra.mxu0 %v4203
    %4246 = vmatprep.subr.mxu0 0.0
    %4247 = vmatpush1.msra.mxu0 %v4204
    %4248 = vmatprep.subr.mxu0 0.0
    %4249 = vmatpush1.msra.mxu0 %v4205
    %4250 = vmatprep.subr.mxu0 0.0
    %4251 = vmatpush1.msra.mxu0 %v4206
    %4252 = vmatprep.subr.mxu0 0.0
    %4253 = vmatpush1.msra.mxu0 %v4207
    %4254 = vmatprep.subr.mxu0 0.0
    %4255 = vmatpush1.msra.mxu0 %v4208
    %4256 = vmatprep.subr.mxu0 0.0
    %4257 = vmatpush1.msra.mxu0 %v4209
    %4258 = vmatprep.subr.mxu0 0.0
    %4259 = vmatpush1.msra.mxu0 %v4210
    %4260 = vmatprep.subr.mxu0 0.0
    %4261 = vmatpush1.msra.mxu0 %v4211
    %4262 = vmatprep.subr.mxu0 0.0
    %4263 = vmatpush1.msra.mxu0 %v4212
    %4264 = vmatprep.subr.mxu0 0.0
    %4265 = vmatpush1.msra.mxu0 %v4213
    %4266 = vmatprep.subr.mxu0 0.0
    %4267 = vmatpush1.msra.mxu0 %v4214
    %4268 = vmatprep.subr.mxu0 0.0
    %4269 = vmatpush1.msra.mxu0 %v4215
    %4270 = vmatprep.subr.mxu0 0.0
    %4271 = vmatpush1.msra.mxu0 %v4216
    %4272 = vmatprep.subr.mxu0 0.0
    %4273 = vmatpush1.msra.mxu0 %v4217
    %4274 = vmatprep.subr.mxu0 0.0
    %4275 = vmatpush1.msra.mxu0 %v4218
    %4276 = vmatprep.subr.mxu0 0.0
    %4277 = vmatpush1.msra.mxu0 %v4219
    %4278 = vmatprep.subr.mxu0 0.0
    %4279 = vmatpush1.msra.mxu0 %v4220
    %4280 = vmatprep.subr.mxu0 0.0
    %4281 = vmatpush1.msra.mxu0 %v4221
    %4282 = vmatprep.subr.mxu0 0.0
    %4283 = vmatpush1.msra.mxu0 %v4222
    %4284 = vmatprep.subr.mxu0 0.0
    %4285 = vmatpush1.msra.mxu0 %v4223
    %4286 = vmatprep.subr.mxu0 0.0
    %4287 = vmatpush1.msra.mxu0 %v4224
    %4288 = vmatprep.subr.mxu0 0.0
    %4289 = vmatpush1.msra.mxu0 %v4225
    %4290 = vmatprep.subr.mxu0 0.0
    %4291 = vmatpush1.msra.mxu0 %v4226
    %4292 = vmatprep.subr.mxu0 0.0
    %4293 = vmatpush1.msra.mxu0 %v4227
    %4294 = vmatprep.subr.mxu0 0.0
    %4295 = vmatpush1.msra.mxu0 %v4228
    %4296 = vmatprep.subr.mxu0 0.0
    %4297 = vmatpush1.msra.mxu0 %v4229
    %4298 = vmatprep.subr.mxu0 0.0
    %4299 = vmatpush1.msra.mxu0 %v4230
    %4300 = vmatprep.subr.mxu0 0.0
    %4301 = vmatpush1.msra.mxu0 %v4231
    %4302 = vmatprep.subr.mxu0 0.0
    %4303 = vmatpush1.msra.mxu0 %v4232
    %4304 = vmatprep.mubr.f32.mxu0 %v4186
    %4305 = vmatmul.mubr.f32.gmra.mrb[0].mxu0 %v4185
    %v4306 = vpop.f32.mrb[0].mxu0
    %v4307 = vadd.f32 %v4238, %v4306
    %v4308 = vpop.f32.mrb[0].mxu0
    %4309 = vmatprep.mubr.f32.mxu0 %v4188
    %4310 = vmatmul.mubr.f32.gmra.mrb[0].mxu0 %v4187
    %v4311 = vpop.f32.mrb[0].mxu0
    %v4312 = vadd.f32 %v4238, %v4311
    %v4313 = vpop.f32.mrb[0].mxu0
    %4314 = vmatprep.mubr.f32.mxu0 %v4190
    %4315 = vmatmul.mubr.f32.gmra.mrb[0].mxu0 %v4189
    %v4316 = vpop.f32.mrb[0].mxu0
    %v4317 = vadd.f32 %v4238, %v4316
    %v4318 = vpop.f32.mrb[0].mxu0
    %4319 = vmatprep.mubr.f32.mxu0 %v4192
    %4320 = vmatmul.mubr.f32.gmra.mrb[0].mxu0 %v4191
    %v4321 = vpop.f32.mrb[0].mxu0
    %v4322 = vadd.f32 %v4238, %v4321
    %v4323 = vpop.f32.mrb[0].mxu0
    %4324 = vmatprep.mubr.f32.mxu0 %v4194
    %4325 = vmatmul.mubr.f32.gmra.mrb[0].mxu0 %v4193
    %v4326 = vpop.f32.mrb[0].mxu0
    %v4327 = vadd.f32 %v4238, %v4326
    %v4328 = vpop.f32.mrb[0].mxu0
    %4329 = vmatprep.mubr.f32.mxu0 %v4196
    %4330 = vmatmul.mubr.f32.gmra.mrb[0].mxu0 %v4195
    %v4331 = vpop.f32.mrb[0].mxu0
    %v4332 = vadd.f32 %v4238, %v4331
    %v4333 = vpop.f32.mrb[0].mxu0
    %4334 = vmatprep.mubr.f32.mxu0 %v4198
    %4335 = vmatmul.mubr.f32.gmra.mrb[0].mxu0 %v4197
    %v4336 = vpop.f32.mrb[0].mxu0
    %v4337 = vadd.f32 %v4238, %v4336
    %v4338 = vpop.f32.mrb[0].mxu0
    %4339 = vmatprep.mubr.f32.mxu0 %v4200
    %4340 = vmatmul.mubr.f32.gmra.mrb[0].mxu0 %v4199
    %v4341 = vpop.f32.mrb[0].mxu0
    %v4342 = vadd.f32 %v4238, %v4341
    %v4343 = vpop.f32.mrb[0].mxu0
    %4344 = vdwg.mxu0
    %v4345 = vld [vmem:[#allocation17] sm:$0x1]
    %v4346 = vld [vmem:[#allocation18] sm:$0x1]
    %4347 = vadd.xlane.f32.xlu0 %v4307
    %v4348 = vpop.xlane.xlu0 %4347
    %4349 = vadd.xlane.f32.xlu0 %v4312
    %v4350 = vpop.xlane.xlu0 %4349
    %4351 = vadd.xlane.f32.xlu0 %v4317
    %v4352 = vpop.xlane.xlu0 %4351
    %4353 = vadd.xlane.f32.xlu0 %v4322
    %v4354 = vpop.xlane.xlu0 %4353
    %4355 = vadd.xlane.f32.xlu0 %v4327
    %v4356 = vpop.xlane.xlu0 %4355
    %4357 = vadd.xlane.f32.xlu0 %v4332
    %v4358 = vpop.xlane.xlu0 %4357
    %4359 = vadd.xlane.f32.xlu0 %v4337
    %v4360 = vpop.xlane.xlu0 %4359
    %4361 = vadd.xlane.f32.xlu0 %v4342
    %v4362 = vpop.xlane.xlu0 %4361
    %v4363 = vrcp.pop 128.0
    %v4364 = vmul.f32 %v4348, %v4363
    %v4365 = vmul.f32 %v4350, %v4363
    %v4366 = vmul.f32 %v4352, %v4363
    %v4367 = vmul.f32 %v4354, %v4363
    %v4368 = vmul.f32 %v4356, %v4363
    %v4369 = vmul.f32 %v4358, %v4363
    %v4370 = vmul.f32 %v4360, %v4363
    %v4371 = vmul.f32 %v4362, %v4363
    %v4372 = vsub.f32 %v4307, %v4364
    %v4373 = vsub.f32 %v4312, %v4365
    %v4374 = vsub.f32 %v4317, %v4366
    %v4375 = vsub.f32 %v4322, %v4367
    %v4376 = vsub.f32 %v4327, %v4368
    %v4377 = vsub.f32 %v4332, %v4369
    %v4378 = vsub.f32 %v4337, %v4370
    %v4379 = vsub.f32 %v4342, %v4371
    %v4380 = vmul.f32 %v4372, %v4372
    %v4381 = vmul.f32 %v4373, %v4373
    %v4382 = vmul.f32 %v4374, %v4374
    %v4383 = vmul.f32 %v4375, %v4375
    %v4384 = vmul.f32 %v4376, %v4376
    %v4385 = vmul.f32 %v4377, %v4377
    %v4386 = vmul.f32 %v4378, %v4378
    %v4387 = vmul.f32 %v4379, %v4379
    %4388 = vadd.xlane.f32.xlu0 %v4380
    %v4389 = vpop.xlane.xlu0 %4388
    %4390 = vadd.xlane.f32.xlu0 %v4381
    %v4391 = vpop.xlane.xlu0 %4390
    %4392 = vadd.xlane.f32.xlu0 %v4382
    %v4393 = vpop.xlane.xlu0 %4392
    %4394 = vadd.xlane.f32.xlu0 %v4383
    %v4395 = vpop.xlane.xlu0 %4394
    %4396 = vadd.xlane.f32.xlu0 %v4384
    %v4397 = vpop.xlane.xlu0 %4396
    %4398 = vadd.xlane.f32.xlu0 %v4385
    %v4399 = vpop.xlane.xlu0 %4398
    %4400 = vadd.xlane.f32.xlu0 %v4386
    %v4401 = vpop.xlane.xlu0 %4400
    %4402 = vadd.xlane.f32.xlu0 %v4387
    %v4403 = vpop.xlane.xlu0 %4402
    %v4404 = vmul.f32 %v4389, %v4363
    %v4405 = vmul.f32 %v4391, %v4363
    %v4406 = vmul.f32 %v4393, %v4363
    %v4407 = vmul.f32 %v4395, %v4363
    %v4408 = vmul.f32 %v4397, %v4363
    %v4409 = vmul.f32 %v4399, %v4363
    %v4410 = vmul.f32 %v4401, %v4363
    %v4411 = vmul.f32 %v4403, %v4363
    %v4412 = vadd.f32 %v4404, 1e-05
    %v4413 = vadd.f32 %v4405, 1e-05
    %v4414 = vadd.f32 %v4406, 1e-05
    %v4415 = vadd.f32 %v4407, 1e-05
    %v4416 = vadd.f32 %v4408, 1e-05
    %v4417 = vadd.f32 %v4409, 1e-05
    %v4418 = vadd.f32 %v4410, 1e-05
    %v4419 = vadd.f32 %v4411, 1e-05
    %v4420 = vrsqrt.pop %v4412
    %v4421 = vrsqrt.pop %v4413
    %v4422 = vrsqrt.pop %v4414
    %v4423 = vrsqrt.pop %v4415
    %v4424 = vrsqrt.pop %v4416
    %v4425 = vrsqrt.pop %v4417
    %v4426 = vrsqrt.pop %v4418
    %v4427 = vrsqrt.pop %v4419
    %v4428 = vmul.f32 %v4372, %v4420
    %v4429 = vmul.f32 %v4373, %v4421
    %v4430 = vmul.f32 %v4374, %v4422
    %v4431 = vmul.f32 %v4375, %v4423
    %v4432 = vmul.f32 %v4376, %v4424
    %v4433 = vmul.f32 %v4377, %v4425
    %v4434 = vmul.f32 %v4378, %v4426
    %v4435 = vmul.f32 %v4379, %v4427
    %v4437 = vlaneseq
    %v4438 = vshrl.u32 %v4437, 7
    %v4439 = vsub.s32 0, %v4438
    %v4440 = vrot.slane %v4345, %v4439
    %v4442 = vmul.f32 %v4428, %v4440
    %v4443 = vmul.f32 %v4429, %v4440
    %v4444 = vmul.f32 %v4430, %v4440
    %v4445 = vmul.f32 %v4431, %v4440
    %v4446 = vmul.f32 %v4432, %v4440
    %v4447 = vmul.f32 %v4433, %v4440
    %v4448 = vmul.f32 %v4434, %v4440
    %v4449 = vmul.f32 %v4435, %v4440
    %v4451 = vlaneseq
    %v4452 = vshrl.u32 %v4451, 7
    %v4453 = vsub.s32 0, %v4452
    %v4454 = vrot.slane %v4346, %v4453
    %v4456 = vadd.f32 %v4442, %v4454
    %v4457 = vadd.f32 %v4443, %v4454
    %v4458 = vadd.f32 %v4444, %v4454
    %v4459 = vadd.f32 %v4445, %v4454
    %v4460 = vadd.f32 %v4446, %v4454
    %v4461 = vadd.f32 %v4447, %v4454
    %v4462 = vadd.f32 %v4448, %v4454
    %v4463 = vadd.f32 %v4449, %v4454
    %v4464 = vmax.f32 %v4456, 0.0
    %v4465 = vmax.f32 %v4457, 0.0
    %v4466 = vmax.f32 %v4458, 0.0
    %v4467 = vmax.f32 %v4459, 0.0
    %v4468 = vmax.f32 %v4460, 0.0
    %v4469 = vmax.f32 %v4461, 0.0
    %v4470 = vmax.f32 %v4462, 0.0
    %v4471 = vmax.f32 %v4463, 0.0
    %v4472 = vld [vmem:[%s13] sm:$0xff]
    %v4473 = vld [vmem:[%s13 + $0x8] sm:$0xff]
    %v4474 = vld [vmem:[%s13 + $0x10] sm:$0xff]
    %v4475 = vld [vmem:[%s13 + $0x18] sm:$0xff]
    %v4476 = vld [vmem:[%s13 + $0x20] sm:$0xff]
    %v4477 = vld [vmem:[%s13 + $0x28] sm:$0xff]
    %v4478 = vld [vmem:[%s13 + $0x30] sm:$0xff]
    %v4479 = vld [vmem:[%s13 + $0x38] sm:$0xff]
    %v4480 = vld [vmem:[%s13 + $0x40] sm:$0xff]
    %v4481 = vld [vmem:[%s13 + $0x48] sm:$0xff]
    %v4482 = vld [vmem:[%s13 + $0x50] sm:$0xff]
    %v4483 = vld [vmem:[%s13 + $0x58] sm:$0xff]
    %v4484 = vld [vmem:[%s13 + $0x60] sm:$0xff]
    %v4485 = vld [vmem:[%s13 + $0x68] sm:$0xff]
    %v4486 = vld [vmem:[%s13 + $0x70] sm:$0xff]
    %v4487 = vld [vmem:[%s13 + $0x78] sm:$0xff]
    %v4488 = vld [vmem:[#allocation20] sm:$0x1]
    %v4490 = vlaneseq
    %v4491 = vshrl.u32 %v4490, 7
    %v4492 = vsub.s32 0, %v4491
    %v4493 = vrot.slane %v4488, %v4492
    %4495 = vmatprep.subr.mxu0 0.0
    %4496 = vmatpush1.msra.mxu0 %v4472
    %4497 = vmatprep.subr.mxu0 0.0
    %4498 = vmatpush1.msra.mxu0 %v4473
    %4499 = vmatprep.subr.mxu0 0.0
    %4500 = vmatpush1.msra.mxu0 %v4474
    %4501 = vmatprep.subr.mxu0 0.0
    %4502 = vmatpush1.msra.mxu0 %v4475
    %4503 = vmatprep.subr.mxu0 0.0
    %4504 = vmatpush1.msra.mxu0 %v4476
    %4505 = vmatprep.subr.mxu0 0.0
    %4506 = vmatpush1.msra.mxu0 %v4477
    %4507 = vmatprep.subr.mxu0 0.0
    %4508 = vmatpush1.msra.mxu0 %v4478
    %4509 = vmatprep.subr.mxu0 0.0
    %4510 = vmatpush1.msra.mxu0 %v4479
    %4511 = vmatprep.subr.mxu0 0.0
    %4512 = vmatpush1.msra.mxu0 %v4480
    %4513 = vmatprep.subr.mxu0 0.0
    %4514 = vmatpush1.msra.mxu0 %v4481
    %4515 = vmatprep.subr.mxu0 0.0
    %4516 = vmatpush1.msra.mxu0 %v4482
    %4517 = vmatprep.subr.mxu0 0.0
    %4518 = vmatpush1.msra.mxu0 %v4483
    %4519 = vmatprep.subr.mxu0 0.0
    %4520 = vmatpush1.msra.mxu0 %v4484
    %4521 = vmatprep.subr.mxu0 0.0
    %4522 = vmatpush1.msra.mxu0 %v4485
    %4523 = vmatprep.subr.mxu0 0.0
    %4524 = vmatpush1.msra.mxu0 %v4486
    %4525 = vmatprep.subr.mxu0 0.0
    %4526 = vmatpush1.msra.mxu0 %v4487
    %4527 = vmatprep.subr.mxu0 0.0
    %4528 = vmatpush1.msra.mxu0 0.0
    %4529 = vmatprep.subr.mxu0 0.0
    %4530 = vmatpush1.msra.mxu0 0.0
    %4531 = vmatprep.subr.mxu0 0.0
    %4532 = vmatpush1.msra.mxu0 0.0
    %4533 = vmatprep.subr.mxu0 0.0
    %4534 = vmatpush1.msra.mxu0 0.0
    %4535 = vmatprep.subr.mxu0 0.0
    %4536 = vmatpush1.msra.mxu0 0.0
    %4537 = vmatprep.subr.mxu0 0.0
    %4538 = vmatpush1.msra.mxu0 0.0
    %4539 = vmatprep.subr.mxu0 0.0
    %4540 = vmatpush1.msra.mxu0 0.0
    %4541 = vmatprep.subr.mxu0 0.0
    %4542 = vmatpush1.msra.mxu0 0.0
    %4543 = vmatprep.subr.mxu0 0.0
    %4544 = vmatpush1.msra.mxu0 0.0
    %4545 = vmatprep.subr.mxu0 0.0
    %4546 = vmatpush1.msra.mxu0 0.0
    %4547 = vmatprep.subr.mxu0 0.0
    %4548 = vmatpush1.msra.mxu0 0.0
    %4549 = vmatprep.subr.mxu0 0.0
    %4550 = vmatpush1.msra.mxu0 0.0
    %4551 = vmatprep.subr.mxu0 0.0
    %4552 = vmatpush1.msra.mxu0 0.0
    %4553 = vmatprep.subr.mxu0 0.0
    %4554 = vmatpush1.msra.mxu0 0.0
    %4555 = vmatprep.subr.mxu0 0.0
    %4556 = vmatpush1.msra.mxu0 0.0
    %4557 = vmatprep.subr.mxu0 0.0
    %4558 = vmatpush1.msra.mxu0 0.0
    %4559 = vmatprep.mubr.f32.mxu0 0.0
    %4560 = vmatmul.mubr.f32.gmra.mrb[0].mxu0 %v4464
    %v4561 = vpop.f32.mrb[0].mxu0
    %v4562 = vadd.f32 %v4493, %v4561
    %v4563 = vpop.f32.mrb[0].mxu0
    %4564 = vmatprep.mubr.f32.mxu0 0.0
    %4565 = vmatmul.mubr.f32.gmra.mrb[0].mxu0 %v4465
    %v4566 = vpop.f32.mrb[0].mxu0
    %v4567 = vadd.f32 %v4493, %v4566
    %v4568 = vpop.f32.mrb[0].mxu0
    %4569 = vmatprep.mubr.f32.mxu0 0.0
    %4570 = vmatmul.mubr.f32.gmra.mrb[0].mxu0 %v4466
    %v4571 = vpop.f32.mrb[0].mxu0
    %v4572 = vadd.f32 %v4493, %v4571
    %v4573 = vpop.f32.mrb[0].mxu0
    %4574 = vmatprep.mubr.f32.mxu0 0.0
    %4575 = vmatmul.mubr.f32.gmra.mrb[0].mxu0 %v4467
    %v4576 = vpop.f32.mrb[0].mxu0
    %v4577 = vadd.f32 %v4493, %v4576
    %v4578 = vpop.f32.mrb[0].mxu0
    %4579 = vmatprep.mubr.f32.mxu0 0.0
    %4580 = vmatmul.mubr.f32.gmra.mrb[0].mxu0 %v4468
    %v4581 = vpop.f32.mrb[0].mxu0
    %v4582 = vadd.f32 %v4493, %v4581
    %v4583 = vpop.f32.mrb[0].mxu0
    %4584 = vmatprep.mubr.f32.mxu0 0.0
    %4585 = vmatmul.mubr.f32.gmra.mrb[0].mxu0 %v4469
    %v4586 = vpop.f32.mrb[0].mxu0
    %v4587 = vadd.f32 %v4493, %v4586
    %v4588 = vpop.f32.mrb[0].mxu0
    %4589 = vmatprep.mubr.f32.mxu0 0.0
    %4590 = vmatmul.mubr.f32.gmra.mrb[0].mxu0 %v4470
    %v4591 = vpop.f32.mrb[0].mxu0
    %v4592 = vadd.f32 %v4493, %v4591
    %v4593 = vpop.f32.mrb[0].mxu0
    %4594 = vmatprep.mubr.f32.mxu0 0.0
    %4595 = vmatmul.mubr.f32.gmra.mrb[0].mxu0 %v4471
    %v4596 = vpop.f32.mrb[0].mxu0
    %v4597 = vadd.f32 %v4493, %v4596
    %v4598 = vpop.f32.mrb[0].mxu0
    %4599 = vdwg.mxu0
    %4600 = vst [vmem:[%s15] sm:$0xff] %v4562
    %4601 = vst [vmem:[%s15 + $0x8] sm:$0xff] %v4567
    %4602 = vst [vmem:[%s15 + $0x10] sm:$0xff] %v4572
    %4603 = vst [vmem:[%s15 + $0x18] sm:$0xff] %v4577
    %4604 = vst [vmem:[%s15 + $0x20] sm:$0xff] %v4582
    %4605 = vst [vmem:[%s15 + $0x28] sm:$0xff] %v4587
    %4606 = vst [vmem:[%s15 + $0x30] sm:$0xff] %v4592
    %4607 = vst [vmem:[%s15 + $0x38] sm:$0xff] %v4597
    // Predicated region
    $region106: #{sleep_rnn_forward.1} parent=1 // pred_check
      _
    $region107: #{sleep_rnn_forward.1} parent=1 // pred_check_branch
      %4609 = sbr.rel (0) target = $region109
    $region108: #{sleep_rnn_forward.1} parent=1 // pred_region
      _
    $region109: #{sleep_rnn_forward.1} parent=1 // pred_fallthru
      _
    // Predicated region
    $region110: #{sleep_rnn_forward.1} parent=1 // pred_check
      _
    $region111: #{sleep_rnn_forward.1} parent=1 // pred_check_branch
      %4611 = sbr.rel (0) target = $region113
    $region112: #{sleep_rnn_forward.1} parent=1 // pred_region
      _
    $region113: #{sleep_rnn_forward.1} parent=1 // pred_fallthru
      _
    %4612 = vsyncpa [#allocation5], 1
    %4613 = vsyncpa [#allocation7], 1
    %4614 = vsyncpa [#allocation10], 1
    %4615 = vsyncpa [#allocation13], 1
    %4616 = vsyncpa [#allocation16], 1
    %4617 = vsyncpa [#allocation19], 1

</llo_original>
